<compile_context>
chip_gen: v6e
topology: v6e:2x2x1
jax: 0.10.0
libtpu: 0.0.40
codegen_flags: <defaults>
</compile_context>

<pallas_src>
import functools

import jax
import jax.numpy as jnp
from jax.experimental import pallas as pl
from jax.experimental.pallas import tpu as pltpu


# ------------------------------ fused Pallas kernel ---------------------------

def _decoder_layer_kernel(
    x_ref, mem_ref, smask_ref, cmask_ref,
    sa_wq, sa_bq, sa_wk, sa_bk, sa_wv, sa_bv, sa_wo, sa_bo,
    ca_wq, ca_bq, ca_wk, ca_bk, ca_wv, ca_bv, ca_wo, ca_bo,
    n1_g, n1_b, n2_g, n2_b, n3_g, n3_b,
    w1, b1, w2, b2,
    o_ref, *, num_heads, eps):
  """Whole decoder layer for one batch element (grid over batch)."""
  x = x_ref[...].astype(jnp.float32)      # (Sq, H)
  mem = mem_ref[...].astype(jnp.float32)  # (Sk, H)

  # mask -> additive logit bias, computed in-kernel (1 = attend, 0 = masked).
  self_bias = jnp.where(smask_ref[...] > 0, 0.0, -1e9).astype(jnp.float32)
  cross_bias = jnp.where(cmask_ref[...] > 0, 0.0, -1e9).astype(jnp.float32)

  def attend(q_in, kv_in, wq, bq, wk, bk, wv, bv, wo, bo, bias):
    Sq, H = q_in.shape
    Sk = kv_in.shape[0]
    hd = H // num_heads
    scale = 1.0 / (hd ** 0.5)
    q = (jnp.dot(q_in, wq[...], preferred_element_type=jnp.float32)
         + bq[...]).reshape(Sq, num_heads, hd)
    k = (jnp.dot(kv_in, wk[...], preferred_element_type=jnp.float32)
         + bk[...]).reshape(Sk, num_heads, hd)
    v = (jnp.dot(kv_in, wv[...], preferred_element_type=jnp.float32)
         + bv[...]).reshape(Sk, num_heads, hd)
    # head-batched contractions (no per-head slicing / concatenate)
    s = jnp.einsum('qnd,knd->nqk', q, k,
                   preferred_element_type=jnp.float32) * scale + bias[None]
    s = s - jnp.max(s, axis=-1, keepdims=True)
    p = jnp.exp(s)
    p = p * pl.reciprocal(jnp.sum(p, axis=-1, keepdims=True), approx=True)
    ctx = jnp.einsum('nqk,knd->qnd', p, v,
                     preferred_element_type=jnp.float32).reshape(Sq, H)
    return jnp.dot(ctx, wo[...], preferred_element_type=jnp.float32) + bo[...]

  def add_ln(a, r, g, b):
    y = a + r
    mean = jnp.mean(y, axis=-1, keepdims=True)
    var = jnp.mean(jnp.square(y - mean), axis=-1, keepdims=True)
    return (y - mean) * jax.lax.rsqrt(var + eps) * g[...] + b[...]

  # self-attention + residual + LN
  h = add_ln(x,
             attend(x, x, sa_wq, sa_bq, sa_wk, sa_bk, sa_wv, sa_bv,
                    sa_wo, sa_bo, self_bias),
             n1_g, n1_b)
  # cross-attention + residual + LN
  h = add_ln(h,
             attend(h, mem, ca_wq, ca_bq, ca_wk, ca_bk, ca_wv, ca_bv,
                    ca_wo, ca_bo, cross_bias),
             n2_g, n2_b)
  # feed-forward + residual + LN
  ff = jnp.maximum(
      jnp.dot(h, w1[...], preferred_element_type=jnp.float32) + b1[...], 0.0)
  ff = jnp.dot(ff, w2[...], preferred_element_type=jnp.float32) + b2[...]
  h = add_ln(h, ff, n3_g, n3_b)

  o_ref[...] = h.astype(o_ref.dtype)


# ------------------------------ wrapper ---------------------------------------

def decoder_layer(params, x, memory, tgt_mask=None, memory_mask=None,
                  script_mask=None, num_heads=4, eps=1e-5):
  """Pallas implementation of DecoderLayer.forward (eval mode: dropout = id)."""
  B, Sq, H = x.shape
  Sk = memory.shape[1]
  F = params["ff_w1"].shape[1]

  def to_keep(mask, shape):
    if mask is None:
      return jnp.ones(shape, jnp.float32)
    return (mask > 0).astype(jnp.float32)

  self_keep = to_keep(tgt_mask, (Sq, Sq))
  # memory_mask and script_mask combined (logical AND over "keep" positions).
  cross_keep = to_keep(memory_mask, (Sq, Sk)) * to_keep(script_mask, (Sq, Sk))

  sa, ca = params["self_attn"], params["cross_attn"]

  def seq_spec(S):
    return pl.BlockSpec((pl.Squeezed(), S, H), lambda b: (b, 0, 0))

  def full(shape):
    return pl.BlockSpec(shape, lambda b, _s=shape: (0,) * len(_s))

  in_specs = [
      seq_spec(Sq),                 # x
      seq_spec(Sk),                 # memory
      full((Sq, Sq)),               # self mask
      full((Sq, Sk)),               # cross mask
      # self-attention weights
      full((H, H)), full((1, H)), full((H, H)), full((1, H)),
      full((H, H)), full((1, H)), full((H, H)), full((1, H)),
      # cross-attention weights
      full((H, H)), full((1, H)), full((H, H)), full((1, H)),
      full((H, H)), full((1, H)), full((H, H)), full((1, H)),
      # layer norms
      full((1, H)), full((1, H)), full((1, H)), full((1, H)),
      full((1, H)), full((1, H)),
      # FFN
      full((H, F)), full((1, F)), full((F, H)), full((1, H)),
  ]

  kern = functools.partial(_decoder_layer_kernel, num_heads=num_heads, eps=eps)

  return pl.pallas_call(
      kern,
      out_shape=jax.ShapeDtypeStruct((B, Sq, H), x.dtype),
      grid=(B,),
      in_specs=in_specs,
      out_specs=pl.BlockSpec((pl.Squeezed(), Sq, H), lambda b: (b, 0, 0)),
      compiler_params=pltpu.CompilerParams(
          dimension_semantics=("parallel",),   # shards batch over v7x's 2 TCs
          vmem_limit_bytes=64 * 1024 * 1024),
  )(x, memory, self_keep, cross_keep,
    sa["wq"], sa["bq"], sa["wk"], sa["bk"],
    sa["wv"], sa["bv"], sa["wo"], sa["bo"],
    ca["wq"], ca["bq"], ca["wk"], ca["bk"],
    ca["wv"], ca["bv"], ca["wo"], ca["bo"],
    params["norm1_g"], params["norm1_b"],
    params["norm2_g"], params["norm2_b"],
    params["norm3_g"], params["norm3_b"],
    params["ff_w1"], params["ff_b1"], params["ff_w2"], params["ff_b2"])


# ------------------------------ pure-JAX reference ----------------------------

def _ref_mha(q, kv, p, bias, nh):
  B, Sq, H = q.shape
  Sk = kv.shape[1]
  hd = H // nh
  qp = (q.astype(jnp.float32) @ p["wq"] + p["bq"][0]).reshape(B, Sq, nh, hd)
  kp = (kv.astype(jnp.float32) @ p["wk"] + p["bk"][0]).reshape(B, Sk, nh, hd)
  vp = (kv.astype(jnp.float32) @ p["wv"] + p["bv"][0]).reshape(B, Sk, nh, hd)
  s = jnp.einsum("bqnd,bknd->bnqk", qp, kp) / (hd ** 0.5) + bias[None, None]
  a = jax.nn.softmax(s, axis=-1)
  ctx = jnp.einsum("bnqk,bknd->bqnd", a, vp).reshape(B, Sq, H)
  return ctx @ p["wo"] + p["bo"][0]


def _ref_ln(y, g, b, eps=1e-5):
  m = jnp.mean(y, axis=-1, keepdims=True)
  v = jnp.mean(jnp.square(y - m), axis=-1, keepdims=True)
  return (y - m) * jax.lax.rsqrt(v + eps) * g[0] + b[0]


def _ref_decoder(params, x, memory, self_bias, cross_bias, nh):
  x = x.astype(jnp.float32)
  memory = memory.astype(jnp.float32)
  x = _ref_ln(x + _ref_mha(x, x, params["self_attn"], self_bias, nh),
              params["norm1_g"], params["norm1_b"])
  x = _ref_ln(x + _ref_mha(x, memory, params["cross_attn"], cross_bias, nh),
              params["norm2_g"], params["norm2_b"])
  h = jnp.maximum(x @ params["ff_w1"] + params["ff_b1"][0], 0.0)
  ff = h @ params["ff_w2"] + params["ff_b2"][0]
  x = _ref_ln(x + ff, params["norm3_g"], params["norm3_b"])
  return x


# ------------------------------ parameter init --------------------------------

def init_params(key, hidden, ff_dim):
  keys = jax.random.split(key, 16)
  it = iter(keys)

  def attn_params():
    return {
        "wq": 0.05 * jax.random.normal(next(it), (hidden, hidden), jnp.float32),
        "bq": 0.01 * jax.random.normal(next(it), (1, hidden), jnp.float32),
        "wk": 0.05 * jax.random.normal(next(it), (hidden, hidden), jnp.float32),
        "bk": 0.01 * jax.random.normal(next(it), (1, hidden), jnp.float32),
        "wv": 0.05 * jax.random.normal(next(it), (hidden, hidden), jnp.float32),
        "bv": 0.01 * jax.random.normal(next(it), (1, hidden), jnp.float32),
        "wo": 0.05 * jax.random.normal(next(it), (hidden, hidden), jnp.float32),
        "bo": 0.01 * jax.random.normal(next(it), (1, hidden), jnp.float32),
    }

  p = {
      "self_attn": attn_params(),
      "cross_attn": attn_params(),
      "norm1_g": jnp.ones((1, hidden), jnp.float32),
      "norm1_b": jnp.zeros((1, hidden), jnp.float32),
      "norm2_g": jnp.ones((1, hidden), jnp.float32),
      "norm2_b": jnp.zeros((1, hidden), jnp.float32),
      "norm3_g": jnp.ones((1, hidden), jnp.float32),
      "norm3_b": jnp.zeros((1, hidden), jnp.float32),
      "ff_w1": 0.05 * jax.random.normal(jax.random.PRNGKey(101),
                                        (hidden, ff_dim), jnp.float32),
      "ff_b1": 0.01 * jax.random.normal(jax.random.PRNGKey(102),
                                        (1, ff_dim), jnp.float32),
      "ff_w2": 0.05 * jax.random.normal(jax.random.PRNGKey(103),
                                        (ff_dim, hidden), jnp.float32),
      "ff_b2": 0.01 * jax.random.normal(jax.random.PRNGKey(104),
                                        (1, hidden), jnp.float32),
  }
  return p


# ------------------------------ main -------------------------------------------

if __name__ == "__main__":
  B, S_TGT, S_MEM, HIDDEN, HEADS = 2, 8, 16, 32, 4
  FF_DIM = 4 * HIDDEN

  key = jax.random.PRNGKey(0)
  k_x, k_mem, k_p, k_script = jax.random.split(key, 4)

  x = jax.random.normal(k_x, (B, S_TGT, HIDDEN), jnp.float32)
  memory = jax.random.normal(k_mem, (B, S_MEM, HIDDEN), jnp.float32)
  params = init_params(k_p, HIDDEN, FF_DIM)

  # Causal target mask (1 = attend), random script mask over memory keys.
  tgt_mask = jnp.tril(jnp.ones((S_TGT, S_TGT), jnp.float32))
  script_mask = (jax.random.uniform(k_script, (S_TGT, S_MEM)) > 0.2
                 ).astype(jnp.float32)

  out = decoder_layer(params, x, memory, tgt_mask=tgt_mask,
                      memory_mask=None, script_mask=script_mask,
                      num_heads=HEADS)
  out = jax.block_until_ready(out)

  # Cross-check against pure-JAX reference.
  self_bias = jnp.where(tgt_mask > 0, 0.0, -1e9).astype(jnp.float32)
  cross_bias = jnp.where(script_mask > 0, 0.0, -1e9).astype(jnp.float32)
  ref = _ref_decoder(params, x, memory, self_bias, cross_bias, HEADS)
  assert out.shape == (B, S_TGT, HIDDEN)
  assert jnp.allclose(out, ref, atol=5e-3, rtol=5e-3), "mismatch vs reference"

  print("KERNEL_OK")
</pallas_src>

<mosaic_0001>
module attributes {stable_mosaic.version = 11 : i64} {
  func.func @_decoder_layer_kernel(%arg0: i32, %arg1: memref<1x8x32xf32, #tpu.memory_space<vmem>>, %arg2: memref<1x16x32xf32, #tpu.memory_space<vmem>>, %arg3: memref<8x8xf32, #tpu.memory_space<vmem>>, %arg4: memref<8x16xf32, #tpu.memory_space<vmem>>, %arg5: memref<32x32xf32, #tpu.memory_space<vmem>>, %arg6: memref<1x32xf32, #tpu.memory_space<vmem>>, %arg7: memref<32x32xf32, #tpu.memory_space<vmem>>, %arg8: memref<1x32xf32, #tpu.memory_space<vmem>>, %arg9: memref<32x32xf32, #tpu.memory_space<vmem>>, %arg10: memref<1x32xf32, #tpu.memory_space<vmem>>, %arg11: memref<32x32xf32, #tpu.memory_space<vmem>>, %arg12: memref<1x32xf32, #tpu.memory_space<vmem>>, %arg13: memref<32x32xf32, #tpu.memory_space<vmem>>, %arg14: memref<1x32xf32, #tpu.memory_space<vmem>>, %arg15: memref<32x32xf32, #tpu.memory_space<vmem>>, %arg16: memref<1x32xf32, #tpu.memory_space<vmem>>, %arg17: memref<32x32xf32, #tpu.memory_space<vmem>>, %arg18: memref<1x32xf32, #tpu.memory_space<vmem>>, %arg19: memref<32x32xf32, #tpu.memory_space<vmem>>, %arg20: memref<1x32xf32, #tpu.memory_space<vmem>>, %arg21: memref<1x32xf32, #tpu.memory_space<vmem>>, %arg22: memref<1x32xf32, #tpu.memory_space<vmem>>, %arg23: memref<1x32xf32, #tpu.memory_space<vmem>>, %arg24: memref<1x32xf32, #tpu.memory_space<vmem>>, %arg25: memref<1x32xf32, #tpu.memory_space<vmem>>, %arg26: memref<1x32xf32, #tpu.memory_space<vmem>>, %arg27: memref<32x128xf32, #tpu.memory_space<vmem>>, %arg28: memref<1x128xf32, #tpu.memory_space<vmem>>, %arg29: memref<128x32xf32, #tpu.memory_space<vmem>>, %arg30: memref<1x32xf32, #tpu.memory_space<vmem>>, %arg31: memref<1x8x32xf32, #tpu.memory_space<vmem>>) attributes {dimension_semantics = [#tpu.dimension_semantics<parallel>], iteration_bounds = array<i64: 2>, scalar_prefetch = 0 : i64, scratch_operands = 0 : i64, tpu.core_type = #tpu.core_type<tc>, window_params = [{transform_indices = @transform_0, window_bounds = array<i64: 1, 8, 32>}, {transform_indices = @transform_1, window_bounds = array<i64: 1, 16, 32>}, {pipeline_mode = #tpu.pipeline_mode<synchronous>, transform_indices = @transform_2, window_bounds = array<i64: 8, 8>}, {pipeline_mode = #tpu.pipeline_mode<synchronous>, transform_indices = @transform_3, window_bounds = array<i64: 8, 16>}, {pipeline_mode = #tpu.pipeline_mode<synchronous>, transform_indices = @transform_4, window_bounds = array<i64: 32, 32>}, {pipeline_mode = #tpu.pipeline_mode<synchronous>, transform_indices = @transform_5, window_bounds = array<i64: 1, 32>}, {pipeline_mode = #tpu.pipeline_mode<synchronous>, transform_indices = @transform_6, window_bounds = array<i64: 32, 32>}, {pipeline_mode = #tpu.pipeline_mode<synchronous>, transform_indices = @transform_7, window_bounds = array<i64: 1, 32>}, {pipeline_mode = #tpu.pipeline_mode<synchronous>, transform_indices = @transform_8, window_bounds = array<i64: 32, 32>}, {pipeline_mode = #tpu.pipeline_mode<synchronous>, transform_indices = @transform_9, window_bounds = array<i64: 1, 32>}, {pipeline_mode = #tpu.pipeline_mode<synchronous>, transform_indices = @transform_10, window_bounds = array<i64: 32, 32>}, {pipeline_mode = #tpu.pipeline_mode<synchronous>, transform_indices = @transform_11, window_bounds = array<i64: 1, 32>}, {pipeline_mode = #tpu.pipeline_mode<synchronous>, transform_indices = @transform_12, window_bounds = array<i64: 32, 32>}, {pipeline_mode = #tpu.pipeline_mode<synchronous>, transform_indices = @transform_13, window_bounds = array<i64: 1, 32>}, {pipeline_mode = #tpu.pipeline_mode<synchronous>, transform_indices = @transform_14, window_bounds = array<i64: 32, 32>}, {pipeline_mode = #tpu.pipeline_mode<synchronous>, transform_indices = @transform_15, window_bounds = array<i64: 1, 32>}, {pipeline_mode = #tpu.pipeline_mode<synchronous>, transform_indices = @transform_16, window_bounds = array<i64: 32, 32>}, {pipeline_mode = #tpu.pipeline_mode<synchronous>, transform_indices = @transform_17, window_bounds = array<i64: 1, 32>}, {pipeline_mode = #tpu.pipeline_mode<synchronous>, transform_indices = @transform_18, window_bounds = array<i64: 32, 32>}, {pipeline_mode = #tpu.pipeline_mode<synchronous>, transform_indices = @transform_19, window_bounds = array<i64: 1, 32>}, {pipeline_mode = #tpu.pipeline_mode<synchronous>, transform_indices = @transform_20, window_bounds = array<i64: 1, 32>}, {pipeline_mode = #tpu.pipeline_mode<synchronous>, transform_indices = @transform_21, window_bounds = array<i64: 1, 32>}, {pipeline_mode = #tpu.pipeline_mode<synchronous>, transform_indices = @transform_22, window_bounds = array<i64: 1, 32>}, {pipeline_mode = #tpu.pipeline_mode<synchronous>, transform_indices = @transform_23, window_bounds = array<i64: 1, 32>}, {pipeline_mode = #tpu.pipeline_mode<synchronous>, transform_indices = @transform_24, window_bounds = array<i64: 1, 32>}, {pipeline_mode = #tpu.pipeline_mode<synchronous>, transform_indices = @transform_25, window_bounds = array<i64: 1, 32>}, {pipeline_mode = #tpu.pipeline_mode<synchronous>, transform_indices = @transform_26, window_bounds = array<i64: 32, 128>}, {pipeline_mode = #tpu.pipeline_mode<synchronous>, transform_indices = @transform_27, window_bounds = array<i64: 1, 128>}, {pipeline_mode = #tpu.pipeline_mode<synchronous>, transform_indices = @transform_28, window_bounds = array<i64: 128, 32>}, {pipeline_mode = #tpu.pipeline_mode<synchronous>, transform_indices = @transform_29, window_bounds = array<i64: 1, 32>}, {transform_indices = @transform_30, window_bounds = array<i64: 1, 8, 32>}]} {
    %c0 = arith.constant 0 : index
    %c0_0 = arith.constant 0 : index
    %c0_1 = arith.constant 0 : index
    %0 = vector.load %arg1[%c0, %c0_0, %c0_1] : memref<1x8x32xf32, #tpu.memory_space<vmem>>, vector<1x8x32xf32>
    %1 = vector.shape_cast %0 : vector<1x8x32xf32> to vector<8x32xf32>
    %c0_2 = arith.constant 0 : index
    %c0_3 = arith.constant 0 : index
    %c0_4 = arith.constant 0 : index
    %2 = vector.load %arg2[%c0_2, %c0_3, %c0_4] : memref<1x16x32xf32, #tpu.memory_space<vmem>>, vector<1x16x32xf32>
    %3 = vector.shape_cast %2 : vector<1x16x32xf32> to vector<16x32xf32>
    %c0_5 = arith.constant 0 : index
    %c0_6 = arith.constant 0 : index
    %4 = vector.load %arg3[%c0_5, %c0_6] : memref<8x8xf32, #tpu.memory_space<vmem>>, vector<8x8xf32>
    %cst = arith.constant 0.000000e+00 : f32
    %5 = vector.broadcast %cst : f32 to vector<8x8xf32>
    %6 = arith.cmpf ogt, %4, %5 : vector<8x8xf32>
    %cst_7 = arith.constant 0.000000e+00 : f32
    %cst_8 = arith.constant -1.000000e+09 : f32
    %7 = vector.broadcast %cst_7 : f32 to vector<8x8xf32>
    %8 = vector.broadcast %cst_8 : f32 to vector<8x8xf32>
    %9 = arith.select %6, %7, %8 : vector<8x8xi1>, vector<8x8xf32>
    %c0_9 = arith.constant 0 : index
    %c0_10 = arith.constant 0 : index
    %10 = vector.load %arg4[%c0_9, %c0_10] : memref<8x16xf32, #tpu.memory_space<vmem>>, vector<8x16xf32>
    %cst_11 = arith.constant 0.000000e+00 : f32
    %11 = vector.broadcast %cst_11 : f32 to vector<8x16xf32>
    %12 = arith.cmpf ogt, %10, %11 : vector<8x16xf32>
    %cst_12 = arith.constant 0.000000e+00 : f32
    %cst_13 = arith.constant -1.000000e+09 : f32
    %13 = vector.broadcast %cst_12 : f32 to vector<8x16xf32>
    %14 = vector.broadcast %cst_13 : f32 to vector<8x16xf32>
    %15 = arith.select %12, %13, %14 : vector<8x16xi1>, vector<8x16xf32>
    %c0_14 = arith.constant 0 : index
    %c0_15 = arith.constant 0 : index
    %16 = vector.load %arg5[%c0_14, %c0_15] : memref<32x32xf32, #tpu.memory_space<vmem>>, vector<32x32xf32>
    %cst_16 = arith.constant dense<0.000000e+00> : vector<8x32xf32>
    %17 = tpu.matmul %1, %16, %cst_16 {dimension_numbers = #tpu.dot_dimension_numbers<[1], [0], [0], [1], [0, 0, 1, 1], [], []>} : vector<8x32xf32>, vector<32x32xf32>, vector<8x32xf32> -> vector<8x32xf32>
    %c0_17 = arith.constant 0 : index
    %c0_18 = arith.constant 0 : index
    %18 = vector.load %arg6[%c0_17, %c0_18] : memref<1x32xf32, #tpu.memory_space<vmem>>, vector<1x32xf32>
    %19 = vector.broadcast %18 : vector<1x32xf32> to vector<8x32xf32>
    %20 = arith.addf %17, %19 : vector<8x32xf32>
    %21 = vector.shape_cast %20 : vector<8x32xf32> to vector<8x4x8xf32>
    %c0_19 = arith.constant 0 : index
    %c0_20 = arith.constant 0 : index
    %22 = vector.load %arg7[%c0_19, %c0_20] : memref<32x32xf32, #tpu.memory_space<vmem>>, vector<32x32xf32>
    %cst_21 = arith.constant dense<0.000000e+00> : vector<8x32xf32>
    %23 = tpu.matmul %1, %22, %cst_21 {dimension_numbers = #tpu.dot_dimension_numbers<[1], [0], [0], [1], [0, 0, 1, 1], [], []>} : vector<8x32xf32>, vector<32x32xf32>, vector<8x32xf32> -> vector<8x32xf32>
    %c0_22 = arith.constant 0 : index
    %c0_23 = arith.constant 0 : index
    %24 = vector.load %arg8[%c0_22, %c0_23] : memref<1x32xf32, #tpu.memory_space<vmem>>, vector<1x32xf32>
    %25 = vector.broadcast %24 : vector<1x32xf32> to vector<8x32xf32>
    %26 = arith.addf %23, %25 : vector<8x32xf32>
    %27 = vector.shape_cast %26 : vector<8x32xf32> to vector<8x4x8xf32>
    %c0_24 = arith.constant 0 : index
    %c0_25 = arith.constant 0 : index
    %28 = vector.load %arg9[%c0_24, %c0_25] : memref<32x32xf32, #tpu.memory_space<vmem>>, vector<32x32xf32>
    %cst_26 = arith.constant dense<0.000000e+00> : vector<8x32xf32>
    %29 = tpu.matmul %1, %28, %cst_26 {dimension_numbers = #tpu.dot_dimension_numbers<[1], [0], [0], [1], [0, 0, 1, 1], [], []>} : vector<8x32xf32>, vector<32x32xf32>, vector<8x32xf32> -> vector<8x32xf32>
    %c0_27 = arith.constant 0 : index
    %c0_28 = arith.constant 0 : index
    %30 = vector.load %arg10[%c0_27, %c0_28] : memref<1x32xf32, #tpu.memory_space<vmem>>, vector<1x32xf32>
    %31 = vector.broadcast %30 : vector<1x32xf32> to vector<8x32xf32>
    %32 = arith.addf %29, %31 : vector<8x32xf32>
    %33 = vector.shape_cast %32 : vector<8x32xf32> to vector<8x4x8xf32>
    "tpu.trace_start"() <{level = 10 : i32, message = "qnd,knd->nqk"}> : () -> ()
    %cst_29 = arith.constant dense<0.000000e+00> : vector<4x8x8xf32>
    %34 = tpu.matmul %21, %27, %cst_29 {dimension_numbers = #tpu.dot_dimension_numbers<[2], [2], [0], [0], [0, 1, 0, 0, 1, 0], [1], [1]>} : vector<8x4x8xf32>, vector<8x4x8xf32>, vector<4x8x8xf32> -> vector<4x8x8xf32>
    "tpu.trace_stop"() : () -> ()
    %cst_30 = arith.constant 0.353553385 : f32
    %35 = vector.broadcast %cst_30 : f32 to vector<4x8x8xf32>
    %36 = arith.mulf %34, %35 : vector<4x8x8xf32>
    %37 = vector.shape_cast %9 : vector<8x8xf32> to vector<1x8x8xf32>
    %38 = vector.broadcast %37 : vector<1x8x8xf32> to vector<4x8x8xf32>
    %39 = arith.addf %36, %38 : vector<4x8x8xf32>
    %cst_31 = arith.constant dense<0xFF800000> : vector<4x8xf32>
    %40 = vector.multi_reduction <maximumf>, %39, %cst_31 [2] : vector<4x8x8xf32> to vector<4x8xf32>
    %41 = vector.shape_cast %40 : vector<4x8xf32> to vector<4x8x1xf32>
    %42 = vector.broadcast %41 : vector<4x8x1xf32> to vector<4x8x8xf32>
    %43 = arith.subf %39, %42 : vector<4x8x8xf32>
    %44 = math.exp %43 : vector<4x8x8xf32>
    %cst_32 = arith.constant dense<0.000000e+00> : vector<4x8xf32>
    %45 = vector.multi_reduction <add>, %44, %cst_32 [2] : vector<4x8x8xf32> to vector<4x8xf32>
    %46 = vector.shape_cast %45 : vector<4x8xf32> to vector<4x8x1xf32>
    %47 = tpu.reciprocal %46 {approx = true} : vector<4x8x1xf32> -> vector<4x8x1xf32>
    %48 = vector.broadcast %47 : vector<4x8x1xf32> to vector<4x8x8xf32>
    %49 = arith.mulf %44, %48 : vector<4x8x8xf32>
    "tpu.trace_start"() <{level = 10 : i32, message = "nqk,knd->qnd"}> : () -> ()
    %cst_33 = arith.constant dense<0.000000e+00> : vector<4x8x8xf32>
    %50 = tpu.matmul %33, %49, %cst_33 {dimension_numbers = #tpu.dot_dimension_numbers<[0], [2], [2], [1], [0, 1, 0, 2, 1, 1], [1], [0]>} : vector<8x4x8xf32>, vector<4x8x8xf32>, vector<4x8x8xf32> -> vector<4x8x8xf32>
    %51 = tpu.transpose %50, [2, 0, 1] : vector<4x8x8xf32> -> vector<8x4x8xf32>
    "tpu.trace_stop"() : () -> ()
    %52 = vector.shape_cast %51 : vector<8x4x8xf32> to vector<8x32xf32>
    %c0_34 = arith.constant 0 : index
    %c0_35 = arith.constant 0 : index
    %53 = vector.load %arg11[%c0_34, %c0_35] : memref<32x32xf32, #tpu.memory_space<vmem>>, vector<32x32xf32>
    %cst_36 = arith.constant dense<0.000000e+00> : vector<8x32xf32>
    %54 = tpu.matmul %52, %53, %cst_36 {dimension_numbers = #tpu.dot_dimension_numbers<[1], [0], [0], [1], [0, 0, 1, 1], [], []>} : vector<8x32xf32>, vector<32x32xf32>, vector<8x32xf32> -> vector<8x32xf32>
    %c0_37 = arith.constant 0 : index
    %c0_38 = arith.constant 0 : index
    %55 = vector.load %arg12[%c0_37, %c0_38] : memref<1x32xf32, #tpu.memory_space<vmem>>, vector<1x32xf32>
    %56 = vector.broadcast %55 : vector<1x32xf32> to vector<8x32xf32>
    %57 = arith.addf %54, %56 : vector<8x32xf32>
    %58 = arith.addf %1, %57 : vector<8x32xf32>
    %cst_39 = arith.constant dense<0.000000e+00> : vector<8xf32>
    %59 = vector.multi_reduction <add>, %58, %cst_39 [1] : vector<8x32xf32> to vector<8xf32>
    %60 = vector.shape_cast %59 : vector<8xf32> to vector<8x1xf32>
    %cst_40 = arith.constant 3.200000e+01 : f32
    %61 = vector.broadcast %cst_40 : f32 to vector<8x1xf32>
    %62 = arith.divf %60, %61 : vector<8x1xf32>
    %63 = vector.broadcast %62 : vector<8x1xf32> to vector<8x32xf32>
    %64 = arith.subf %58, %63 : vector<8x32xf32>
    %65 = arith.mulf %64, %64 : vector<8x32xf32>
    %cst_41 = arith.constant dense<0.000000e+00> : vector<8xf32>
    %66 = vector.multi_reduction <add>, %65, %cst_41 [1] : vector<8x32xf32> to vector<8xf32>
    %67 = vector.shape_cast %66 : vector<8xf32> to vector<8x1xf32>
    %cst_42 = arith.constant 3.200000e+01 : f32
    %68 = vector.broadcast %cst_42 : f32 to vector<8x1xf32>
    %69 = arith.divf %67, %68 : vector<8x1xf32>
    %70 = vector.broadcast %62 : vector<8x1xf32> to vector<8x32xf32>
    %71 = arith.subf %58, %70 : vector<8x32xf32>
    %cst_43 = arith.constant 9.99999974E-6 : f32
    %72 = vector.broadcast %cst_43 : f32 to vector<8x1xf32>
    %73 = arith.addf %69, %72 : vector<8x1xf32>
    %74 = math.rsqrt %73 : vector<8x1xf32>
    %75 = vector.broadcast %74 : vector<8x1xf32> to vector<8x32xf32>
    %76 = arith.mulf %71, %75 : vector<8x32xf32>
    %c0_44 = arith.constant 0 : index
    %c0_45 = arith.constant 0 : index
    %77 = vector.load %arg21[%c0_44, %c0_45] : memref<1x32xf32, #tpu.memory_space<vmem>>, vector<1x32xf32>
    %78 = vector.broadcast %77 : vector<1x32xf32> to vector<8x32xf32>
    %79 = arith.mulf %76, %78 : vector<8x32xf32>
    %c0_46 = arith.constant 0 : index
    %c0_47 = arith.constant 0 : index
    %80 = vector.load %arg22[%c0_46, %c0_47] : memref<1x32xf32, #tpu.memory_space<vmem>>, vector<1x32xf32>
    %81 = vector.broadcast %80 : vector<1x32xf32> to vector<8x32xf32>
    %82 = arith.addf %79, %81 : vector<8x32xf32>
    %c0_48 = arith.constant 0 : index
    %c0_49 = arith.constant 0 : index
    %83 = vector.load %arg13[%c0_48, %c0_49] : memref<32x32xf32, #tpu.memory_space<vmem>>, vector<32x32xf32>
    %cst_50 = arith.constant dense<0.000000e+00> : vector<8x32xf32>
    %84 = tpu.matmul %82, %83, %cst_50 {dimension_numbers = #tpu.dot_dimension_numbers<[1], [0], [0], [1], [0, 0, 1, 1], [], []>} : vector<8x32xf32>, vector<32x32xf32>, vector<8x32xf32> -> vector<8x32xf32>
    %c0_51 = arith.constant 0 : index
    %c0_52 = arith.constant 0 : index
    %85 = vector.load %arg14[%c0_51, %c0_52] : memref<1x32xf32, #tpu.memory_space<vmem>>, vector<1x32xf32>
    %86 = vector.broadcast %85 : vector<1x32xf32> to vector<8x32xf32>
    %87 = arith.addf %84, %86 : vector<8x32xf32>
    %88 = vector.shape_cast %87 : vector<8x32xf32> to vector<8x4x8xf32>
    %c0_53 = arith.constant 0 : index
    %c0_54 = arith.constant 0 : index
    %89 = vector.load %arg15[%c0_53, %c0_54] : memref<32x32xf32, #tpu.memory_space<vmem>>, vector<32x32xf32>
    %cst_55 = arith.constant dense<0.000000e+00> : vector<16x32xf32>
    %90 = tpu.matmul %3, %89, %cst_55 {dimension_numbers = #tpu.dot_dimension_numbers<[1], [0], [0], [1], [0, 0, 1, 1], [], []>} : vector<16x32xf32>, vector<32x32xf32>, vector<16x32xf32> -> vector<16x32xf32>
    %c0_56 = arith.constant 0 : index
    %c0_57 = arith.constant 0 : index
    %91 = vector.load %arg16[%c0_56, %c0_57] : memref<1x32xf32, #tpu.memory_space<vmem>>, vector<1x32xf32>
    %92 = vector.broadcast %91 : vector<1x32xf32> to vector<16x32xf32>
    %93 = arith.addf %90, %92 : vector<16x32xf32>
    %94 = vector.shape_cast %93 : vector<16x32xf32> to vector<16x4x8xf32>
    %c0_58 = arith.constant 0 : index
    %c0_59 = arith.constant 0 : index
    %95 = vector.load %arg17[%c0_58, %c0_59] : memref<32x32xf32, #tpu.memory_space<vmem>>, vector<32x32xf32>
    %cst_60 = arith.constant dense<0.000000e+00> : vector<16x32xf32>
    %96 = tpu.matmul %3, %95, %cst_60 {dimension_numbers = #tpu.dot_dimension_numbers<[1], [0], [0], [1], [0, 0, 1, 1], [], []>} : vector<16x32xf32>, vector<32x32xf32>, vector<16x32xf32> -> vector<16x32xf32>
    %c0_61 = arith.constant 0 : index
    %c0_62 = arith.constant 0 : index
    %97 = vector.load %arg18[%c0_61, %c0_62] : memref<1x32xf32, #tpu.memory_space<vmem>>, vector<1x32xf32>
    %98 = vector.broadcast %97 : vector<1x32xf32> to vector<16x32xf32>
    %99 = arith.addf %96, %98 : vector<16x32xf32>
    %100 = vector.shape_cast %99 : vector<16x32xf32> to vector<16x4x8xf32>
    "tpu.trace_start"() <{level = 10 : i32, message = "qnd,knd->nqk"}> : () -> ()
    %cst_63 = arith.constant dense<0.000000e+00> : vector<4x8x16xf32>
    %101 = tpu.matmul %88, %94, %cst_63 {dimension_numbers = #tpu.dot_dimension_numbers<[2], [2], [0], [0], [0, 1, 0, 0, 1, 0], [1], [1]>} : vector<8x4x8xf32>, vector<16x4x8xf32>, vector<4x8x16xf32> -> vector<4x8x16xf32>
    "tpu.trace_stop"() : () -> ()
    %cst_64 = arith.constant 0.353553385 : f32
    %102 = vector.broadcast %cst_64 : f32 to vector<4x8x16xf32>
    %103 = arith.mulf %101, %102 : vector<4x8x16xf32>
    %104 = vector.shape_cast %15 : vector<8x16xf32> to vector<1x8x16xf32>
    %105 = vector.broadcast %104 : vector<1x8x16xf32> to vector<4x8x16xf32>
    %106 = arith.addf %103, %105 : vector<4x8x16xf32>
    %cst_65 = arith.constant dense<0xFF800000> : vector<4x8xf32>
    %107 = vector.multi_reduction <maximumf>, %106, %cst_65 [2] : vector<4x8x16xf32> to vector<4x8xf32>
    %108 = vector.shape_cast %107 : vector<4x8xf32> to vector<4x8x1xf32>
    %109 = vector.broadcast %108 : vector<4x8x1xf32> to vector<4x8x16xf32>
    %110 = arith.subf %106, %109 : vector<4x8x16xf32>
    %111 = math.exp %110 : vector<4x8x16xf32>
    %cst_66 = arith.constant dense<0.000000e+00> : vector<4x8xf32>
    %112 = vector.multi_reduction <add>, %111, %cst_66 [2] : vector<4x8x16xf32> to vector<4x8xf32>
    %113 = vector.shape_cast %112 : vector<4x8xf32> to vector<4x8x1xf32>
    %114 = tpu.reciprocal %113 {approx = true} : vector<4x8x1xf32> -> vector<4x8x1xf32>
    %115 = vector.broadcast %114 : vector<4x8x1xf32> to vector<4x8x16xf32>
    %116 = arith.mulf %111, %115 : vector<4x8x16xf32>
    "tpu.trace_start"() <{level = 10 : i32, message = "nqk,knd->qnd"}> : () -> ()
    %cst_67 = arith.constant dense<0.000000e+00> : vector<4x8x8xf32>
    %117 = tpu.matmul %100, %116, %cst_67 {dimension_numbers = #tpu.dot_dimension_numbers<[0], [2], [2], [1], [0, 1, 0, 2, 1, 1], [1], [0]>} : vector<16x4x8xf32>, vector<4x8x16xf32>, vector<4x8x8xf32> -> vector<4x8x8xf32>
    %118 = tpu.transpose %117, [2, 0, 1] : vector<4x8x8xf32> -> vector<8x4x8xf32>
    "tpu.trace_stop"() : () -> ()
    %119 = vector.shape_cast %118 : vector<8x4x8xf32> to vector<8x32xf32>
    %c0_68 = arith.constant 0 : index
    %c0_69 = arith.constant 0 : index
    %120 = vector.load %arg19[%c0_68, %c0_69] : memref<32x32xf32, #tpu.memory_space<vmem>>, vector<32x32xf32>
    %cst_70 = arith.constant dense<0.000000e+00> : vector<8x32xf32>
    %121 = tpu.matmul %119, %120, %cst_70 {dimension_numbers = #tpu.dot_dimension_numbers<[1], [0], [0], [1], [0, 0, 1, 1], [], []>} : vector<8x32xf32>, vector<32x32xf32>, vector<8x32xf32> -> vector<8x32xf32>
    %c0_71 = arith.constant 0 : index
    %c0_72 = arith.constant 0 : index
    %122 = vector.load %arg20[%c0_71, %c0_72] : memref<1x32xf32, #tpu.memory_space<vmem>>, vector<1x32xf32>
    %123 = vector.broadcast %122 : vector<1x32xf32> to vector<8x32xf32>
    %124 = arith.addf %121, %123 : vector<8x32xf32>
    %125 = arith.addf %82, %124 : vector<8x32xf32>
    %cst_73 = arith.constant dense<0.000000e+00> : vector<8xf32>
    %126 = vector.multi_reduction <add>, %125, %cst_73 [1] : vector<8x32xf32> to vector<8xf32>
    %127 = vector.shape_cast %126 : vector<8xf32> to vector<8x1xf32>
    %cst_74 = arith.constant 3.200000e+01 : f32
    %128 = vector.broadcast %cst_74 : f32 to vector<8x1xf32>
    %129 = arith.divf %127, %128 : vector<8x1xf32>
    %130 = vector.broadcast %129 : vector<8x1xf32> to vector<8x32xf32>
    %131 = arith.subf %125, %130 : vector<8x32xf32>
    %132 = arith.mulf %131, %131 : vector<8x32xf32>
    %cst_75 = arith.constant dense<0.000000e+00> : vector<8xf32>
    %133 = vector.multi_reduction <add>, %132, %cst_75 [1] : vector<8x32xf32> to vector<8xf32>
    %134 = vector.shape_cast %133 : vector<8xf32> to vector<8x1xf32>
    %cst_76 = arith.constant 3.200000e+01 : f32
    %135 = vector.broadcast %cst_76 : f32 to vector<8x1xf32>
    %136 = arith.divf %134, %135 : vector<8x1xf32>
    %137 = vector.broadcast %129 : vector<8x1xf32> to vector<8x32xf32>
    %138 = arith.subf %125, %137 : vector<8x32xf32>
    %cst_77 = arith.constant 9.99999974E-6 : f32
    %139 = vector.broadcast %cst_77 : f32 to vector<8x1xf32>
    %140 = arith.addf %136, %139 : vector<8x1xf32>
    %141 = math.rsqrt %140 : vector<8x1xf32>
    %142 = vector.broadcast %141 : vector<8x1xf32> to vector<8x32xf32>
    %143 = arith.mulf %138, %142 : vector<8x32xf32>
    %c0_78 = arith.constant 0 : index
    %c0_79 = arith.constant 0 : index
    %144 = vector.load %arg23[%c0_78, %c0_79] : memref<1x32xf32, #tpu.memory_space<vmem>>, vector<1x32xf32>
    %145 = vector.broadcast %144 : vector<1x32xf32> to vector<8x32xf32>
    %146 = arith.mulf %143, %145 : vector<8x32xf32>
    %c0_80 = arith.constant 0 : index
    %c0_81 = arith.constant 0 : index
    %147 = vector.load %arg24[%c0_80, %c0_81] : memref<1x32xf32, #tpu.memory_space<vmem>>, vector<1x32xf32>
    %148 = vector.broadcast %147 : vector<1x32xf32> to vector<8x32xf32>
    %149 = arith.addf %146, %148 : vector<8x32xf32>
    %c0_82 = arith.constant 0 : index
    %c0_83 = arith.constant 0 : index
    %150 = vector.load %arg27[%c0_82, %c0_83] : memref<32x128xf32, #tpu.memory_space<vmem>>, vector<32x128xf32>
    %cst_84 = arith.constant dense<0.000000e+00> : vector<8x128xf32>
    %151 = tpu.matmul %149, %150, %cst_84 {dimension_numbers = #tpu.dot_dimension_numbers<[1], [0], [0], [1], [0, 0, 1, 1], [], []>} : vector<8x32xf32>, vector<32x128xf32>, vector<8x128xf32> -> vector<8x128xf32>
    %c0_85 = arith.constant 0 : index
    %c0_86 = arith.constant 0 : index
    %152 = vector.load %arg28[%c0_85, %c0_86] : memref<1x128xf32, #tpu.memory_space<vmem>>, vector<1x128xf32>
    %153 = vector.broadcast %152 : vector<1x128xf32> to vector<8x128xf32>
    %154 = arith.addf %151, %153 : vector<8x128xf32>
    %cst_87 = arith.constant 0.000000e+00 : f32
    %155 = vector.broadcast %cst_87 : f32 to vector<8x128xf32>
    %156 = arith.maximumf %154, %155 : vector<8x128xf32>
    %c0_88 = arith.constant 0 : index
    %c0_89 = arith.constant 0 : index
    %157 = vector.load %arg29[%c0_88, %c0_89] : memref<128x32xf32, #tpu.memory_space<vmem>>, vector<128x32xf32>
    %cst_90 = arith.constant dense<0.000000e+00> : vector<8x32xf32>
    %158 = tpu.matmul %156, %157, %cst_90 {dimension_numbers = #tpu.dot_dimension_numbers<[1], [0], [0], [1], [0, 0, 1, 1], [], []>} : vector<8x128xf32>, vector<128x32xf32>, vector<8x32xf32> -> vector<8x32xf32>
    %c0_91 = arith.constant 0 : index
    %c0_92 = arith.constant 0 : index
    %159 = vector.load %arg30[%c0_91, %c0_92] : memref<1x32xf32, #tpu.memory_space<vmem>>, vector<1x32xf32>
    %160 = vector.broadcast %159 : vector<1x32xf32> to vector<8x32xf32>
    %161 = arith.addf %158, %160 : vector<8x32xf32>
    %162 = arith.addf %149, %161 : vector<8x32xf32>
    %cst_93 = arith.constant dense<0.000000e+00> : vector<8xf32>
    %163 = vector.multi_reduction <add>, %162, %cst_93 [1] : vector<8x32xf32> to vector<8xf32>
    %164 = vector.shape_cast %163 : vector<8xf32> to vector<8x1xf32>
    %cst_94 = arith.constant 3.200000e+01 : f32
    %165 = vector.broadcast %cst_94 : f32 to vector<8x1xf32>
    %166 = arith.divf %164, %165 : vector<8x1xf32>
    %167 = vector.broadcast %166 : vector<8x1xf32> to vector<8x32xf32>
    %168 = arith.subf %162, %167 : vector<8x32xf32>
    %169 = arith.mulf %168, %168 : vector<8x32xf32>
    %cst_95 = arith.constant dense<0.000000e+00> : vector<8xf32>
    %170 = vector.multi_reduction <add>, %169, %cst_95 [1] : vector<8x32xf32> to vector<8xf32>
    %171 = vector.shape_cast %170 : vector<8xf32> to vector<8x1xf32>
    %cst_96 = arith.constant 3.200000e+01 : f32
    %172 = vector.broadcast %cst_96 : f32 to vector<8x1xf32>
    %173 = arith.divf %171, %172 : vector<8x1xf32>
    %174 = vector.broadcast %166 : vector<8x1xf32> to vector<8x32xf32>
    %175 = arith.subf %162, %174 : vector<8x32xf32>
    %cst_97 = arith.constant 9.99999974E-6 : f32
    %176 = vector.broadcast %cst_97 : f32 to vector<8x1xf32>
    %177 = arith.addf %173, %176 : vector<8x1xf32>
    %178 = math.rsqrt %177 : vector<8x1xf32>
    %179 = vector.broadcast %178 : vector<8x1xf32> to vector<8x32xf32>
    %180 = arith.mulf %175, %179 : vector<8x32xf32>
    %c0_98 = arith.constant 0 : index
    %c0_99 = arith.constant 0 : index
    %181 = vector.load %arg25[%c0_98, %c0_99] : memref<1x32xf32, #tpu.memory_space<vmem>>, vector<1x32xf32>
    %182 = vector.broadcast %181 : vector<1x32xf32> to vector<8x32xf32>
    %183 = arith.mulf %180, %182 : vector<8x32xf32>
    %c0_100 = arith.constant 0 : index
    %c0_101 = arith.constant 0 : index
    %184 = vector.load %arg26[%c0_100, %c0_101] : memref<1x32xf32, #tpu.memory_space<vmem>>, vector<1x32xf32>
    %185 = vector.broadcast %184 : vector<1x32xf32> to vector<8x32xf32>
    %186 = arith.addf %183, %185 : vector<8x32xf32>
    %c0_102 = arith.constant 0 : index
    %c0_103 = arith.constant 0 : index
    %c0_104 = arith.constant 0 : index
    %187 = vector.load %arg31[%c0_102, %c0_103, %c0_104] : memref<1x8x32xf32, #tpu.memory_space<vmem>>, vector<1x8x32xf32>
    %188 = vector.shape_cast %187 : vector<1x8x32xf32> to vector<8x32xf32>
    %189 = vector.shape_cast %186 : vector<8x32xf32> to vector<1x8x32xf32>
    tpu.vector_store %arg31[%c0_102, %c0_103, %c0_104], %189 {strides = array<i32>} : memref<1x8x32xf32, #tpu.memory_space<vmem>>, vector<1x8x32xf32>,
    return
  }
  func.func @transform_0(%arg0: i32) -> (i32, i32, i32) {
    %c0_i32 = arith.constant 0 : i32
    %c0_i32_0 = arith.constant 0 : i32
    %c0_i32_1 = arith.constant 0 : i32
    return %arg0, %c0_i32, %c0_i32_0 : i32, i32, i32
  }
  func.func @transform_1(%arg0: i32) -> (i32, i32, i32) {
    %c0_i32 = arith.constant 0 : i32
    %c0_i32_0 = arith.constant 0 : i32
    %c0_i32_1 = arith.constant 0 : i32
    return %arg0, %c0_i32, %c0_i32_0 : i32, i32, i32
  }
  func.func @transform_2(%arg0: i32) -> (i32, i32) {
    %c0_i32 = arith.constant 0 : i32
    %c0_i32_0 = arith.constant 0 : i32
    %c0_i32_1 = arith.constant 0 : i32
    return %c0_i32, %c0_i32_0 : i32, i32
  }
  func.func @transform_3(%arg0: i32) -> (i32, i32) {
    %c0_i32 = arith.constant 0 : i32
    %c0_i32_0 = arith.constant 0 : i32
    %c0_i32_1 = arith.constant 0 : i32
    return %c0_i32, %c0_i32_0 : i32, i32
  }
  func.func @transform_4(%arg0: i32) -> (i32, i32) {
    %c0_i32 = arith.constant 0 : i32
    %c0_i32_0 = arith.constant 0 : i32
    %c0_i32_1 = arith.constant 0 : i32
    return %c0_i32, %c0_i32_0 : i32, i32
  }
  func.func @transform_5(%arg0: i32) -> (i32, i32) {
    %c0_i32 = arith.constant 0 : i32
    %c0_i32_0 = arith.constant 0 : i32
    %c0_i32_1 = arith.constant 0 : i32
    return %c0_i32, %c0_i32_0 : i32, i32
  }
  func.func @transform_6(%arg0: i32) -> (i32, i32) {
    %c0_i32 = arith.constant 0 : i32
    %c0_i32_0 = arith.constant 0 : i32
    %c0_i32_1 = arith.constant 0 : i32
    return %c0_i32, %c0_i32_0 : i32, i32
  }
  func.func @transform_7(%arg0: i32) -> (i32, i32) {
    %c0_i32 = arith.constant 0 : i32
    %c0_i32_0 = arith.constant 0 : i32
    %c0_i32_1 = arith.constant 0 : i32
    return %c0_i32, %c0_i32_0 : i32, i32
  }
  func.func @transform_8(%arg0: i32) -> (i32, i32) {
    %c0_i32 = arith.constant 0 : i32
    %c0_i32_0 = arith.constant 0 : i32
    %c0_i32_1 = arith.constant 0 : i32
    return %c0_i32, %c0_i32_0 : i32, i32
  }
  func.func @transform_9(%arg0: i32) -> (i32, i32) {
    %c0_i32 = arith.constant 0 : i32
    %c0_i32_0 = arith.constant 0 : i32
    %c0_i32_1 = arith.constant 0 : i32
    return %c0_i32, %c0_i32_0 : i32, i32
  }
  func.func @transform_10(%arg0: i32) -> (i32, i32) {
    %c0_i32 = arith.constant 0 : i32
    %c0_i32_0 = arith.constant 0 : i32
    %c0_i32_1 = arith.constant 0 : i32
    return %c0_i32, %c0_i32_0 : i32, i32
  }
  func.func @transform_11(%arg0: i32) -> (i32, i32) {
    %c0_i32 = arith.constant 0 : i32
    %c0_i32_0 = arith.constant 0 : i32
    %c0_i32_1 = arith.constant 0 : i32
    return %c0_i32, %c0_i32_0 : i32, i32
  }
  func.func @transform_12(%arg0: i32) -> (i32, i32) {
    %c0_i32 = arith.constant 0 : i32
    %c0_i32_0 = arith.constant 0 : i32
    %c0_i32_1 = arith.constant 0 : i32
    return %c0_i32, %c0_i32_0 : i32, i32
  }
  func.func @transform_13(%arg0: i32) -> (i32, i32) {
    %c0_i32 = arith.constant 0 : i32
    %c0_i32_0 = arith.constant 0 : i32
    %c0_i32_1 = arith.constant 0 : i32
    return %c0_i32, %c0_i32_0 : i32, i32
  }
  func.func @transform_14(%arg0: i32) -> (i32, i32) {
    %c0_i32 = arith.constant 0 : i32
    %c0_i32_0 = arith.constant 0 : i32
    %c0_i32_1 = arith.constant 0 : i32
    return %c0_i32, %c0_i32_0 : i32, i32
  }
  func.func @transform_15(%arg0: i32) -> (i32, i32) {
    %c0_i32 = arith.constant 0 : i32
    %c0_i32_0 = arith.constant 0 : i32
    %c0_i32_1 = arith.constant 0 : i32
    return %c0_i32, %c0_i32_0 : i32, i32
  }
  func.func @transform_16(%arg0: i32) -> (i32, i32) {
    %c0_i32 = arith.constant 0 : i32
    %c0_i32_0 = arith.constant 0 : i32
    %c0_i32_1 = arith.constant 0 : i32
    return %c0_i32, %c0_i32_0 : i32, i32
  }
  func.func @transform_17(%arg0: i32) -> (i32, i32) {
    %c0_i32 = arith.constant 0 : i32
    %c0_i32_0 = arith.constant 0 : i32
    %c0_i32_1 = arith.constant 0 : i32
    return %c0_i32, %c0_i32_0 : i32, i32
  }
  func.func @transform_18(%arg0: i32) -> (i32, i32) {
    %c0_i32 = arith.constant 0 : i32
    %c0_i32_0 = arith.constant 0 : i32
    %c0_i32_1 = arith.constant 0 : i32
    return %c0_i32, %c0_i32_0 : i32, i32
  }
  func.func @transform_19(%arg0: i32) -> (i32, i32) {
    %c0_i32 = arith.constant 0 : i32
    %c0_i32_0 = arith.constant 0 : i32
    %c0_i32_1 = arith.constant 0 : i32
    return %c0_i32, %c0_i32_0 : i32, i32
  }
  func.func @transform_20(%arg0: i32) -> (i32, i32) {
    %c0_i32 = arith.constant 0 : i32
    %c0_i32_0 = arith.constant 0 : i32
    %c0_i32_1 = arith.constant 0 : i32
    return %c0_i32, %c0_i32_0 : i32, i32
  }
  func.func @transform_21(%arg0: i32) -> (i32, i32) {
    %c0_i32 = arith.constant 0 : i32
    %c0_i32_0 = arith.constant 0 : i32
    %c0_i32_1 = arith.constant 0 : i32
    return %c0_i32, %c0_i32_0 : i32, i32
  }
  func.func @transform_22(%arg0: i32) -> (i32, i32) {
    %c0_i32 = arith.constant 0 : i32
    %c0_i32_0 = arith.constant 0 : i32
    %c0_i32_1 = arith.constant 0 : i32
    return %c0_i32, %c0_i32_0 : i32, i32
  }
  func.func @transform_23(%arg0: i32) -> (i32, i32) {
    %c0_i32 = arith.constant 0 : i32
    %c0_i32_0 = arith.constant 0 : i32
    %c0_i32_1 = arith.constant 0 : i32
    return %c0_i32, %c0_i32_0 : i32, i32
  }
  func.func @transform_24(%arg0: i32) -> (i32, i32) {
    %c0_i32 = arith.constant 0 : i32
    %c0_i32_0 = arith.constant 0 : i32
    %c0_i32_1 = arith.constant 0 : i32
    return %c0_i32, %c0_i32_0 : i32, i32
  }
  func.func @transform_25(%arg0: i32) -> (i32, i32) {
    %c0_i32 = arith.constant 0 : i32
    %c0_i32_0 = arith.constant 0 : i32
    %c0_i32_1 = arith.constant 0 : i32
    return %c0_i32, %c0_i32_0 : i32, i32
  }
  func.func @transform_26(%arg0: i32) -> (i32, i32) {
    %c0_i32 = arith.constant 0 : i32
    %c0_i32_0 = arith.constant 0 : i32
    %c0_i32_1 = arith.constant 0 : i32
    return %c0_i32, %c0_i32_0 : i32, i32
  }
  func.func @transform_27(%arg0: i32) -> (i32, i32) {
    %c0_i32 = arith.constant 0 : i32
    %c0_i32_0 = arith.constant 0 : i32
    %c0_i32_1 = arith.constant 0 : i32
    return %c0_i32, %c0_i32_0 : i32, i32
  }
  func.func @transform_28(%arg0: i32) -> (i32, i32) {
    %c0_i32 = arith.constant 0 : i32
    %c0_i32_0 = arith.constant 0 : i32
    %c0_i32_1 = arith.constant 0 : i32
    return %c0_i32, %c0_i32_0 : i32, i32
  }
  func.func @transform_29(%arg0: i32) -> (i32, i32) {
    %c0_i32 = arith.constant 0 : i32
    %c0_i32_0 = arith.constant 0 : i32
    %c0_i32_1 = arith.constant 0 : i32
    return %c0_i32, %c0_i32_0 : i32, i32
  }
  func.func @transform_30(%arg0: i32) -> (i32, i32, i32) {
    %c0_i32 = arith.constant 0 : i32
    %c0_i32_0 = arith.constant 0 : i32
    %c0_i32_1 = arith.constant 0 : i32
    return %arg0, %c0_i32, %c0_i32_0 : i32, i32, i32
  }
}

</mosaic_0001>

<llo_original>
// kernel: tpu_custom_call.1
$region0: #{tpu_custom_call.1}
  #allocation0 [shape = 'u32[]', space=smem, size = 0x4, offset = 0x4, fixed_abs, tag = 'smem constant byte address 0x4 - core index']
  #allocation1 [shape = 'u32[144,128]{1,0:T(1,128)}', space=vmem, size = 0x12000, scoped, tag = 'internal scratch']
  %s0 = inlined_call_operand.smem [shape: u32[31], index: -1, kind: input, shape index: {}]
  %s1 = sld [smem:[%s0]]
  %s2 = scalar_lea.smem %s0, 1
  %s3 = sld [smem:[%s2]]
  %s4 = scalar_lea.smem %s0, 2
  %s5 = sld [smem:[%s4]]
  %s6 = scalar_lea.smem %s0, 3
  %s7 = sld [smem:[%s6]]
  %s8 = scalar_lea.smem %s0, 4
  %s9 = sld [smem:[%s8]]
  %s10 = scalar_lea.smem %s0, 5
  %s11 = sld [smem:[%s10]]
  %s12 = scalar_lea.smem %s0, 6
  %s13 = sld [smem:[%s12]]
  %s14 = scalar_lea.smem %s0, 7
  %s15 = sld [smem:[%s14]]
  %s16 = scalar_lea.smem %s0, 8
  %s17 = sld [smem:[%s16]]
  %s18 = scalar_lea.smem %s0, 9
  %s19 = sld [smem:[%s18]]
  %s20 = scalar_lea.smem %s0, 10
  %s21 = sld [smem:[%s20]]
  %s22 = scalar_lea.smem %s0, 11
  %s23 = sld [smem:[%s22]]
  %s24 = scalar_lea.smem %s0, 12
  %s25 = sld [smem:[%s24]]
  %s26 = scalar_lea.smem %s0, 13
  %s27 = sld [smem:[%s26]]
  %s28 = scalar_lea.smem %s0, 14
  %s29 = sld [smem:[%s28]]
  %s30 = scalar_lea.smem %s0, 15
  %s31 = sld [smem:[%s30]]
  %s32 = scalar_lea.smem %s0, 16
  %s33 = sld [smem:[%s32]]
  %s34 = scalar_lea.smem %s0, 17
  %s35 = sld [smem:[%s34]]
  %s36 = scalar_lea.smem %s0, 18
  %s37 = sld [smem:[%s36]]
  %s38 = scalar_lea.smem %s0, 19
  %s39 = sld [smem:[%s38]]
  %s40 = scalar_lea.smem %s0, 20
  %s41 = sld [smem:[%s40]]
  %s42 = scalar_lea.smem %s0, 21
  %s43 = sld [smem:[%s42]]
  %s44 = scalar_lea.smem %s0, 22
  %s45 = sld [smem:[%s44]]
  %s46 = scalar_lea.smem %s0, 23
  %s47 = sld [smem:[%s46]]
  %s48 = scalar_lea.smem %s0, 24
  %s49 = sld [smem:[%s48]]
  %s50 = scalar_lea.smem %s0, 25
  %s51 = sld [smem:[%s50]]
  %s52 = scalar_lea.smem %s0, 26
  %s53 = sld [smem:[%s52]]
  %s54 = scalar_lea.smem %s0, 27
  %s55 = sld [smem:[%s54]]
  %s56 = scalar_lea.smem %s0, 28
  %s57 = sld [smem:[%s56]]
  %s58 = scalar_lea.smem %s0, 29
  %s59 = sld [smem:[%s58]]
  %s60 = scalar_lea.smem %s0, 30
  %s61 = sld [smem:[%s60]]
  %s62 = sld [smem:[#allocation0]]
  $region213: #{tpu_custom_call.1} parent=0
    _
  %s64 = ssub.s32 1, %s62
  %s65 = scalar_select 0, %s64, %s62
  $region1: #{tpu_custom_call.1} parent=0
    #allocation2 [shape = 'u8[8192]{0}', space=vmem, size = 0x2000, scoped, tag = 'input window, operand 0']
    #allocation3 [shape = 's32[2]{0}', space=sflag, size = 0x8, scoped, tag = 'scoped memory for tpu_custom_call.1']
    #allocation4 [shape = 's32[2]{0}', space=sflag, size = 0x8, scoped, tag = 'scoped memory for tpu_custom_call.1']
    #allocation5 [shape = 'u8[4096]{0}', space=vmem, size = 0x1000, scoped, tag = 'input window, operand 2, single buffered']
    #allocation6 [shape = 's32[1]{0}', space=sflag, size = 0x4, scoped, tag = 'scoped memory for tpu_custom_call.1']
    #allocation7 [shape = 'u8[4096]{0}', space=vmem, size = 0x1000, scoped, tag = 'input window, operand 3, single buffered']
    #allocation8 [shape = 'u8[512]{0}', space=vmem, size = 0x400, scoped, tag = 'input window, operand 5, single buffered']
    #allocation9 [shape = 's32[1]{0}', space=sflag, size = 0x4, scoped, tag = 'scoped memory for tpu_custom_call.1']
    #allocation10 [shape = 'u8[512]{0}', space=vmem, size = 0x400, scoped, tag = 'input window, operand 7, single buffered']
    #allocation11 [shape = 'u8[512]{0}', space=vmem, size = 0x400, scoped, tag = 'input window, operand 9, single buffered']
    #allocation12 [shape = 's32[1]{0}', space=sflag, size = 0x4, scoped, tag = 'scoped memory for tpu_custom_call.1']
    #allocation13 [shape = 'u8[512]{0}', space=vmem, size = 0x400, scoped, tag = 'input window, operand 11, single buffered']
    #allocation14 [shape = 'u8[16384]{0}', space=vmem, size = 0x4000, scoped, tag = 'input window, operand 12, single buffered']
    #allocation15 [shape = 's32[1]{0}', space=sflag, size = 0x4, scoped, tag = 'scoped memory for tpu_custom_call.1']
    #allocation16 [shape = 'u8[512]{0}', space=vmem, size = 0x400, scoped, tag = 'input window, operand 13, single buffered']
    #allocation17 [shape = 'u8[16384]{0}', space=vmem, size = 0x4000, scoped, tag = 'input window, operand 14, single buffered']
    #allocation18 [shape = 's32[1]{0}', space=sflag, size = 0x4, scoped, tag = 'scoped memory for tpu_custom_call.1']
    #allocation19 [shape = 'u8[512]{0}', space=vmem, size = 0x400, scoped, tag = 'input window, operand 15, single buffered']
    #allocation20 [shape = 'u8[16384]{0}', space=vmem, size = 0x4000, scoped, tag = 'input window, operand 16, single buffered']
    #allocation21 [shape = 's32[1]{0}', space=sflag, size = 0x4, scoped, tag = 'scoped memory for tpu_custom_call.1']
    #allocation22 [shape = 'u8[512]{0}', space=vmem, size = 0x400, scoped, tag = 'input window, operand 17, single buffered']
    #allocation23 [shape = 'u8[512]{0}', space=vmem, size = 0x400, scoped, tag = 'input window, operand 19, single buffered']
    #allocation24 [shape = 's32[1]{0}', space=sflag, size = 0x4, scoped, tag = 'scoped memory for tpu_custom_call.1']
    #allocation25 [shape = 'u8[16384]{0}', space=vmem, size = 0x4000, scoped, tag = 'input window, operand 26, single buffered']
    #allocation26 [shape = 'u8[8192]{0}', space=vmem, size = 0x2000, scoped, tag = 'output window, operand 0']
    %66 = vsyncpa [#allocation3], 0
    %s67 = scalar_lea.sflag [#allocation3], 1
    %68 = vsyncpa %s67, 0
    %69 = vsyncpa [#allocation6], 0
    %70 = vsyncpa [#allocation9], 0
    %71 = vsyncpa [#allocation12], 0
    %72 = vsyncpa [#allocation15], 0
    %73 = vsyncpa [#allocation18], 0
    %74 = vsyncpa [#allocation21], 0
    %75 = vsyncpa [#allocation24], 0
    %76 = vsyncpa [#allocation4], 0
    %s77 = scalar_lea.sflag [#allocation4], 1
    %78 = vsyncpa %s77, 0
    loop: start=0, step=1, limit=4
    $region2: #{tpu_custom_call.1} parent=1 // loop_pre_header
      _
    $region3: #{tpu_custom_call.1} parent=1 // loop_header
      %s80 = sphi 0, %s84
      %p81 = scmp.ge.s32.totalorder %s80, 4
      %s90 = sphi 0, %s92
      %s93 = sphi 0, %s90
      %s94 = sphi 0, %s93
      %s110 = sphi 0, %s94
      %s116 = sphi 0, %s118
      %s119 = sphi 0, %s116
      %s120 = sphi 0, %s119
      %s136 = sphi 0, %s120
      %s140 = sphi 0, %s140
      %s142 = sphi 0, %s140
      %s143 = sphi 0, %s142
      %s157 = sphi 0, %s143
      %s161 = sphi 0, %s161
      %s163 = sphi 0, %s161
      %s164 = sphi 0, %s163
      %s178 = sphi 0, %s164
      %s182 = sphi 0, %s182
      %s184 = sphi 0, %s182
      %s185 = sphi 0, %s184
      %s199 = sphi 0, %s185
      %s203 = sphi 0, %s203
      %s205 = sphi 0, %s203
      %s206 = sphi 0, %s205
      %s220 = sphi 0, %s206
      %s224 = sphi 0, %s224
      %s226 = sphi 0, %s224
      %s227 = sphi 0, %s226
      %s241 = sphi 0, %s227
      %s245 = sphi 0, %s245
      %s247 = sphi 0, %s245
      %s248 = sphi 0, %s247
      %s262 = sphi 0, %s248
      %s266 = sphi 0, %s266
      %s268 = sphi 0, %s266
      %s269 = sphi 0, %s268
      %s283 = sphi 0, %s269
      %s287 = sphi 0, %s287
      %s289 = sphi 0, %s287
      %s290 = sphi 0, %s289
      %s304 = sphi 0, %s290
      %s308 = sphi 0, %s308
      %s310 = sphi 0, %s308
      %s311 = sphi 0, %s310
      %s325 = sphi 0, %s311
      %s329 = sphi 0, %s329
      %s331 = sphi 0, %s329
      %s332 = sphi 0, %s331
      %s346 = sphi 0, %s332
      %s350 = sphi 0, %s350
      %s352 = sphi 0, %s350
      %s353 = sphi 0, %s352
      %s367 = sphi 0, %s353
      %s371 = sphi 0, %s371
      %s373 = sphi 0, %s371
      %s374 = sphi 0, %s373
      %s388 = sphi 0, %s374
      %s392 = sphi 0, %s392
      %s394 = sphi 0, %s392
      %s395 = sphi 0, %s394
      %s409 = sphi 0, %s395
      %s413 = sphi 0, %s413
      %s415 = sphi 0, %s413
      %s416 = sphi 0, %s415
      %s430 = sphi 0, %s416
      %s434 = sphi 0, %s434
      %s436 = sphi 0, %s434
      %s437 = sphi 0, %s436
      %s451 = sphi 0, %s437
      %s455 = sphi 0, %s455
      %s457 = sphi 0, %s455
      %s458 = sphi 0, %s457
      %s472 = sphi 0, %s458
      %s476 = sphi 0, %s476
      %s478 = sphi 0, %s476
      %s479 = sphi 0, %s478
      %s493 = sphi 0, %s479
      %s497 = sphi 0, %s497
      %s499 = sphi 0, %s497
      %s500 = sphi 0, %s499
      %s514 = sphi 0, %s500
      %s518 = sphi 0, %s518
      %s520 = sphi 0, %s518
      %s521 = sphi 0, %s520
      %s535 = sphi 0, %s521
      %s539 = sphi 0, %s539
      %s541 = sphi 0, %s539
      %s542 = sphi 0, %s541
      %s556 = sphi 0, %s542
      %s560 = sphi 0, %s560
      %s562 = sphi 0, %s560
      %s563 = sphi 0, %s562
      %s577 = sphi 0, %s563
      %s581 = sphi 0, %s581
      %s583 = sphi 0, %s581
      %s584 = sphi 0, %s583
      %s598 = sphi 0, %s584
      %s602 = sphi 0, %s602
      %s604 = sphi 0, %s602
      %s605 = sphi 0, %s604
      %s619 = sphi 0, %s605
      %s623 = sphi 0, %s623
      %s625 = sphi 0, %s623
      %s626 = sphi 0, %s625
      %s640 = sphi 0, %s626
      %s644 = sphi 0, %s644
      %s646 = sphi 0, %s644
      %s647 = sphi 0, %s646
      %s661 = sphi 0, %s647
      %s665 = sphi 0, %s665
      %s667 = sphi 0, %s665
      %s668 = sphi 0, %s667
      %s682 = sphi 0, %s668
      %s686 = sphi 0, %s686
      %s688 = sphi 0, %s686
      %s689 = sphi 0, %s688
      %s703 = sphi 0, %s689
      %s707 = sphi 0, %s707
      %s709 = sphi 0, %s707
      %s710 = sphi 0, %s709
      %s724 = sphi 0, %s710
      %s730 = sphi 0, %s732
      %s733 = sphi 0, %s730
      %s734 = sphi 0, %s733
      %s750 = sphi 0, %s734
    $region4: #{tpu_custom_call.1} parent=1 // loop_header_branch
      %83 = sbr.rel (%p81) target = $region8
    $region5: #{tpu_custom_call.1} parent=1 // loop_body
      %s85 = ssub.s32 %s80, 1
      %s86 = ssub.s32 %s80, 2
      %s87 = sadd.s32 %s80, 1
      %s88 = ssub.s32 %s80, %s87
      %p89 = scmp.eq.s32.totalorder %s88, 0
      %s91 = sadd.s32 %s90, 1
      %s92 = scalar_select %p89, %s90, %s91
      %p95 = pneg %p89
      %p96 = scmp.eq.s32.totalorder %s80, 1
      %p97 = por %p95, %p96
      %p98 = scmp.ne.s32.totalorder %s90, %s93
      %p99 = scmp.eq.s32.totalorder %s80, 0
      %p100 = por %p98, %p99
      %p101 = scmp.ne.s32.totalorder %s90, %s93
      %p102 = scmp.eq.s32.totalorder %s85, 1
      %p103 = por %p101, %p102
      %p104 = scmp.ne.s32.totalorder %s93, %s94
      %p105 = scmp.eq.s32.totalorder %s85, 0
      %p106 = por %p104, %p105
      %p107 = scmp.ne.s32.totalorder %s93, %s94
      %p108 = scmp.eq.s32.totalorder %s86, 1
      %p109 = por %p107, %p108
      %p111 = scmp.ne.s32.totalorder %s94, %s110
      %p112 = scmp.eq.s32.totalorder %s86, 0
      %p113 = por %p111, %p112
      %s114 = ssub.s32 %s80, %s87
      %p115 = scmp.eq.s32.totalorder %s114, 0
      %s117 = sadd.s32 %s116, 1
      %s118 = scalar_select %p115, %s116, %s117
      %p121 = pneg %p115
      %p122 = scmp.eq.s32.totalorder %s80, 1
      %p123 = por %p121, %p122
      %p124 = scmp.ne.s32.totalorder %s116, %s119
      %p125 = scmp.eq.s32.totalorder %s80, 0
      %p126 = por %p124, %p125
      %p127 = scmp.ne.s32.totalorder %s116, %s119
      %p128 = scmp.eq.s32.totalorder %s85, 1
      %p129 = por %p127, %p128
      %p130 = scmp.ne.s32.totalorder %s119, %s120
      %p131 = scmp.eq.s32.totalorder %s85, 0
      %p132 = por %p130, %p131
      %p133 = scmp.ne.s32.totalorder %s119, %s120
      %p134 = scmp.eq.s32.totalorder %s86, 1
      %p135 = por %p133, %p134
      %p137 = scmp.ne.s32.totalorder %s120, %s136
      %p138 = scmp.eq.s32.totalorder %s86, 0
      %p139 = por %p137, %p138
      %s141 = sadd.s32 %s140, 1
      %p144 = scmp.eq.s32.totalorder %s80, 1
      %p145 = scmp.ne.s32.totalorder %s140, %s142
      %p146 = scmp.eq.s32.totalorder %s80, 0
      %p147 = por %p145, %p146
      %p148 = scmp.ne.s32.totalorder %s140, %s142
      %p149 = scmp.eq.s32.totalorder %s85, 1
      %p150 = por %p148, %p149
      %p151 = scmp.ne.s32.totalorder %s142, %s143
      %p152 = scmp.eq.s32.totalorder %s85, 0
      %p153 = por %p151, %p152
      %p154 = scmp.ne.s32.totalorder %s142, %s143
      %p155 = scmp.eq.s32.totalorder %s86, 1
      %p156 = por %p154, %p155
      %p158 = scmp.ne.s32.totalorder %s143, %s157
      %p159 = scmp.eq.s32.totalorder %s86, 0
      %p160 = por %p158, %p159
      %s162 = sadd.s32 %s161, 1
      %p165 = scmp.eq.s32.totalorder %s80, 1
      %p166 = scmp.ne.s32.totalorder %s161, %s163
      %p167 = scmp.eq.s32.totalorder %s80, 0
      %p168 = por %p166, %p167
      %p169 = scmp.ne.s32.totalorder %s161, %s163
      %p170 = scmp.eq.s32.totalorder %s85, 1
      %p171 = por %p169, %p170
      %p172 = scmp.ne.s32.totalorder %s163, %s164
      %p173 = scmp.eq.s32.totalorder %s85, 0
      %p174 = por %p172, %p173
      %p175 = scmp.ne.s32.totalorder %s163, %s164
      %p176 = scmp.eq.s32.totalorder %s86, 1
      %p177 = por %p175, %p176
      %p179 = scmp.ne.s32.totalorder %s164, %s178
      %p180 = scmp.eq.s32.totalorder %s86, 0
      %p181 = por %p179, %p180
      %s183 = sadd.s32 %s182, 1
      %p186 = scmp.eq.s32.totalorder %s80, 1
      %p187 = scmp.ne.s32.totalorder %s182, %s184
      %p188 = scmp.eq.s32.totalorder %s80, 0
      %p189 = por %p187, %p188
      %p190 = scmp.ne.s32.totalorder %s182, %s184
      %p191 = scmp.eq.s32.totalorder %s85, 1
      %p192 = por %p190, %p191
      %p193 = scmp.ne.s32.totalorder %s184, %s185
      %p194 = scmp.eq.s32.totalorder %s85, 0
      %p195 = por %p193, %p194
      %p196 = scmp.ne.s32.totalorder %s184, %s185
      %p197 = scmp.eq.s32.totalorder %s86, 1
      %p198 = por %p196, %p197
      %p200 = scmp.ne.s32.totalorder %s185, %s199
      %p201 = scmp.eq.s32.totalorder %s86, 0
      %p202 = por %p200, %p201
      %s204 = sadd.s32 %s203, 1
      %p207 = scmp.eq.s32.totalorder %s80, 1
      %p208 = scmp.ne.s32.totalorder %s203, %s205
      %p209 = scmp.eq.s32.totalorder %s80, 0
      %p210 = por %p208, %p209
      %p211 = scmp.ne.s32.totalorder %s203, %s205
      %p212 = scmp.eq.s32.totalorder %s85, 1
      %p213 = por %p211, %p212
      %p214 = scmp.ne.s32.totalorder %s205, %s206
      %p215 = scmp.eq.s32.totalorder %s85, 0
      %p216 = por %p214, %p215
      %p217 = scmp.ne.s32.totalorder %s205, %s206
      %p218 = scmp.eq.s32.totalorder %s86, 1
      %p219 = por %p217, %p218
      %p221 = scmp.ne.s32.totalorder %s206, %s220
      %p222 = scmp.eq.s32.totalorder %s86, 0
      %p223 = por %p221, %p222
      %s225 = sadd.s32 %s224, 1
      %p228 = scmp.eq.s32.totalorder %s80, 1
      %p229 = scmp.ne.s32.totalorder %s224, %s226
      %p230 = scmp.eq.s32.totalorder %s80, 0
      %p231 = por %p229, %p230
      %p232 = scmp.ne.s32.totalorder %s224, %s226
      %p233 = scmp.eq.s32.totalorder %s85, 1
      %p234 = por %p232, %p233
      %p235 = scmp.ne.s32.totalorder %s226, %s227
      %p236 = scmp.eq.s32.totalorder %s85, 0
      %p237 = por %p235, %p236
      %p238 = scmp.ne.s32.totalorder %s226, %s227
      %p239 = scmp.eq.s32.totalorder %s86, 1
      %p240 = por %p238, %p239
      %p242 = scmp.ne.s32.totalorder %s227, %s241
      %p243 = scmp.eq.s32.totalorder %s86, 0
      %p244 = por %p242, %p243
      %s246 = sadd.s32 %s245, 1
      %p249 = scmp.eq.s32.totalorder %s80, 1
      %p250 = scmp.ne.s32.totalorder %s245, %s247
      %p251 = scmp.eq.s32.totalorder %s80, 0
      %p252 = por %p250, %p251
      %p253 = scmp.ne.s32.totalorder %s245, %s247
      %p254 = scmp.eq.s32.totalorder %s85, 1
      %p255 = por %p253, %p254
      %p256 = scmp.ne.s32.totalorder %s247, %s248
      %p257 = scmp.eq.s32.totalorder %s85, 0
      %p258 = por %p256, %p257
      %p259 = scmp.ne.s32.totalorder %s247, %s248
      %p260 = scmp.eq.s32.totalorder %s86, 1
      %p261 = por %p259, %p260
      %p263 = scmp.ne.s32.totalorder %s248, %s262
      %p264 = scmp.eq.s32.totalorder %s86, 0
      %p265 = por %p263, %p264
      %s267 = sadd.s32 %s266, 1
      %p270 = scmp.eq.s32.totalorder %s80, 1
      %p271 = scmp.ne.s32.totalorder %s266, %s268
      %p272 = scmp.eq.s32.totalorder %s80, 0
      %p273 = por %p271, %p272
      %p274 = scmp.ne.s32.totalorder %s266, %s268
      %p275 = scmp.eq.s32.totalorder %s85, 1
      %p276 = por %p274, %p275
      %p277 = scmp.ne.s32.totalorder %s268, %s269
      %p278 = scmp.eq.s32.totalorder %s85, 0
      %p279 = por %p277, %p278
      %p280 = scmp.ne.s32.totalorder %s268, %s269
      %p281 = scmp.eq.s32.totalorder %s86, 1
      %p282 = por %p280, %p281
      %p284 = scmp.ne.s32.totalorder %s269, %s283
      %p285 = scmp.eq.s32.totalorder %s86, 0
      %p286 = por %p284, %p285
      %s288 = sadd.s32 %s287, 1
      %p291 = scmp.eq.s32.totalorder %s80, 1
      %p292 = scmp.ne.s32.totalorder %s287, %s289
      %p293 = scmp.eq.s32.totalorder %s80, 0
      %p294 = por %p292, %p293
      %p295 = scmp.ne.s32.totalorder %s287, %s289
      %p296 = scmp.eq.s32.totalorder %s85, 1
      %p297 = por %p295, %p296
      %p298 = scmp.ne.s32.totalorder %s289, %s290
      %p299 = scmp.eq.s32.totalorder %s85, 0
      %p300 = por %p298, %p299
      %p301 = scmp.ne.s32.totalorder %s289, %s290
      %p302 = scmp.eq.s32.totalorder %s86, 1
      %p303 = por %p301, %p302
      %p305 = scmp.ne.s32.totalorder %s290, %s304
      %p306 = scmp.eq.s32.totalorder %s86, 0
      %p307 = por %p305, %p306
      %s309 = sadd.s32 %s308, 1
      %p312 = scmp.eq.s32.totalorder %s80, 1
      %p313 = scmp.ne.s32.totalorder %s308, %s310
      %p314 = scmp.eq.s32.totalorder %s80, 0
      %p315 = por %p313, %p314
      %p316 = scmp.ne.s32.totalorder %s308, %s310
      %p317 = scmp.eq.s32.totalorder %s85, 1
      %p318 = por %p316, %p317
      %p319 = scmp.ne.s32.totalorder %s310, %s311
      %p320 = scmp.eq.s32.totalorder %s85, 0
      %p321 = por %p319, %p320
      %p322 = scmp.ne.s32.totalorder %s310, %s311
      %p323 = scmp.eq.s32.totalorder %s86, 1
      %p324 = por %p322, %p323
      %p326 = scmp.ne.s32.totalorder %s311, %s325
      %p327 = scmp.eq.s32.totalorder %s86, 0
      %p328 = por %p326, %p327
      %s330 = sadd.s32 %s329, 1
      %p333 = scmp.eq.s32.totalorder %s80, 1
      %p334 = scmp.ne.s32.totalorder %s329, %s331
      %p335 = scmp.eq.s32.totalorder %s80, 0
      %p336 = por %p334, %p335
      %p337 = scmp.ne.s32.totalorder %s329, %s331
      %p338 = scmp.eq.s32.totalorder %s85, 1
      %p339 = por %p337, %p338
      %p340 = scmp.ne.s32.totalorder %s331, %s332
      %p341 = scmp.eq.s32.totalorder %s85, 0
      %p342 = por %p340, %p341
      %p343 = scmp.ne.s32.totalorder %s331, %s332
      %p344 = scmp.eq.s32.totalorder %s86, 1
      %p345 = por %p343, %p344
      %p347 = scmp.ne.s32.totalorder %s332, %s346
      %p348 = scmp.eq.s32.totalorder %s86, 0
      %p349 = por %p347, %p348
      %s351 = sadd.s32 %s350, 1
      %p354 = scmp.eq.s32.totalorder %s80, 1
      %p355 = scmp.ne.s32.totalorder %s350, %s352
      %p356 = scmp.eq.s32.totalorder %s80, 0
      %p357 = por %p355, %p356
      %p358 = scmp.ne.s32.totalorder %s350, %s352
      %p359 = scmp.eq.s32.totalorder %s85, 1
      %p360 = por %p358, %p359
      %p361 = scmp.ne.s32.totalorder %s352, %s353
      %p362 = scmp.eq.s32.totalorder %s85, 0
      %p363 = por %p361, %p362
      %p364 = scmp.ne.s32.totalorder %s352, %s353
      %p365 = scmp.eq.s32.totalorder %s86, 1
      %p366 = por %p364, %p365
      %p368 = scmp.ne.s32.totalorder %s353, %s367
      %p369 = scmp.eq.s32.totalorder %s86, 0
      %p370 = por %p368, %p369
      %s372 = sadd.s32 %s371, 1
      %p375 = scmp.eq.s32.totalorder %s80, 1
      %p376 = scmp.ne.s32.totalorder %s371, %s373
      %p377 = scmp.eq.s32.totalorder %s80, 0
      %p378 = por %p376, %p377
      %p379 = scmp.ne.s32.totalorder %s371, %s373
      %p380 = scmp.eq.s32.totalorder %s85, 1
      %p381 = por %p379, %p380
      %p382 = scmp.ne.s32.totalorder %s373, %s374
      %p383 = scmp.eq.s32.totalorder %s85, 0
      %p384 = por %p382, %p383
      %p385 = scmp.ne.s32.totalorder %s373, %s374
      %p386 = scmp.eq.s32.totalorder %s86, 1
      %p387 = por %p385, %p386
      %p389 = scmp.ne.s32.totalorder %s374, %s388
      %p390 = scmp.eq.s32.totalorder %s86, 0
      %p391 = por %p389, %p390
      %s393 = sadd.s32 %s392, 1
      %p396 = scmp.eq.s32.totalorder %s80, 1
      %p397 = scmp.ne.s32.totalorder %s392, %s394
      %p398 = scmp.eq.s32.totalorder %s80, 0
      %p399 = por %p397, %p398
      %p400 = scmp.ne.s32.totalorder %s392, %s394
      %p401 = scmp.eq.s32.totalorder %s85, 1
      %p402 = por %p400, %p401
      %p403 = scmp.ne.s32.totalorder %s394, %s395
      %p404 = scmp.eq.s32.totalorder %s85, 0
      %p405 = por %p403, %p404
      %p406 = scmp.ne.s32.totalorder %s394, %s395
      %p407 = scmp.eq.s32.totalorder %s86, 1
      %p408 = por %p406, %p407
      %p410 = scmp.ne.s32.totalorder %s395, %s409
      %p411 = scmp.eq.s32.totalorder %s86, 0
      %p412 = por %p410, %p411
      %s414 = sadd.s32 %s413, 1
      %p417 = scmp.eq.s32.totalorder %s80, 1
      %p418 = scmp.ne.s32.totalorder %s413, %s415
      %p419 = scmp.eq.s32.totalorder %s80, 0
      %p420 = por %p418, %p419
      %p421 = scmp.ne.s32.totalorder %s413, %s415
      %p422 = scmp.eq.s32.totalorder %s85, 1
      %p423 = por %p421, %p422
      %p424 = scmp.ne.s32.totalorder %s415, %s416
      %p425 = scmp.eq.s32.totalorder %s85, 0
      %p426 = por %p424, %p425
      %p427 = scmp.ne.s32.totalorder %s415, %s416
      %p428 = scmp.eq.s32.totalorder %s86, 1
      %p429 = por %p427, %p428
      %p431 = scmp.ne.s32.totalorder %s416, %s430
      %p432 = scmp.eq.s32.totalorder %s86, 0
      %p433 = por %p431, %p432
      %s435 = sadd.s32 %s434, 1
      %p438 = scmp.eq.s32.totalorder %s80, 1
      %p439 = scmp.ne.s32.totalorder %s434, %s436
      %p440 = scmp.eq.s32.totalorder %s80, 0
      %p441 = por %p439, %p440
      %p442 = scmp.ne.s32.totalorder %s434, %s436
      %p443 = scmp.eq.s32.totalorder %s85, 1
      %p444 = por %p442, %p443
      %p445 = scmp.ne.s32.totalorder %s436, %s437
      %p446 = scmp.eq.s32.totalorder %s85, 0
      %p447 = por %p445, %p446
      %p448 = scmp.ne.s32.totalorder %s436, %s437
      %p449 = scmp.eq.s32.totalorder %s86, 1
      %p450 = por %p448, %p449
      %p452 = scmp.ne.s32.totalorder %s437, %s451
      %p453 = scmp.eq.s32.totalorder %s86, 0
      %p454 = por %p452, %p453
      %s456 = sadd.s32 %s455, 1
      %p459 = scmp.eq.s32.totalorder %s80, 1
      %p460 = scmp.ne.s32.totalorder %s455, %s457
      %p461 = scmp.eq.s32.totalorder %s80, 0
      %p462 = por %p460, %p461
      %p463 = scmp.ne.s32.totalorder %s455, %s457
      %p464 = scmp.eq.s32.totalorder %s85, 1
      %p465 = por %p463, %p464
      %p466 = scmp.ne.s32.totalorder %s457, %s458
      %p467 = scmp.eq.s32.totalorder %s85, 0
      %p468 = por %p466, %p467
      %p469 = scmp.ne.s32.totalorder %s457, %s458
      %p470 = scmp.eq.s32.totalorder %s86, 1
      %p471 = por %p469, %p470
      %p473 = scmp.ne.s32.totalorder %s458, %s472
      %p474 = scmp.eq.s32.totalorder %s86, 0
      %p475 = por %p473, %p474
      %s477 = sadd.s32 %s476, 1
      %p480 = scmp.eq.s32.totalorder %s80, 1
      %p481 = scmp.ne.s32.totalorder %s476, %s478
      %p482 = scmp.eq.s32.totalorder %s80, 0
      %p483 = por %p481, %p482
      %p484 = scmp.ne.s32.totalorder %s476, %s478
      %p485 = scmp.eq.s32.totalorder %s85, 1
      %p486 = por %p484, %p485
      %p487 = scmp.ne.s32.totalorder %s478, %s479
      %p488 = scmp.eq.s32.totalorder %s85, 0
      %p489 = por %p487, %p488
      %p490 = scmp.ne.s32.totalorder %s478, %s479
      %p491 = scmp.eq.s32.totalorder %s86, 1
      %p492 = por %p490, %p491
      %p494 = scmp.ne.s32.totalorder %s479, %s493
      %p495 = scmp.eq.s32.totalorder %s86, 0
      %p496 = por %p494, %p495
      %s498 = sadd.s32 %s497, 1
      %p501 = scmp.eq.s32.totalorder %s80, 1
      %p502 = scmp.ne.s32.totalorder %s497, %s499
      %p503 = scmp.eq.s32.totalorder %s80, 0
      %p504 = por %p502, %p503
      %p505 = scmp.ne.s32.totalorder %s497, %s499
      %p506 = scmp.eq.s32.totalorder %s85, 1
      %p507 = por %p505, %p506
      %p508 = scmp.ne.s32.totalorder %s499, %s500
      %p509 = scmp.eq.s32.totalorder %s85, 0
      %p510 = por %p508, %p509
      %p511 = scmp.ne.s32.totalorder %s499, %s500
      %p512 = scmp.eq.s32.totalorder %s86, 1
      %p513 = por %p511, %p512
      %p515 = scmp.ne.s32.totalorder %s500, %s514
      %p516 = scmp.eq.s32.totalorder %s86, 0
      %p517 = por %p515, %p516
      %s519 = sadd.s32 %s518, 1
      %p522 = scmp.eq.s32.totalorder %s80, 1
      %p523 = scmp.ne.s32.totalorder %s518, %s520
      %p524 = scmp.eq.s32.totalorder %s80, 0
      %p525 = por %p523, %p524
      %p526 = scmp.ne.s32.totalorder %s518, %s520
      %p527 = scmp.eq.s32.totalorder %s85, 1
      %p528 = por %p526, %p527
      %p529 = scmp.ne.s32.totalorder %s520, %s521
      %p530 = scmp.eq.s32.totalorder %s85, 0
      %p531 = por %p529, %p530
      %p532 = scmp.ne.s32.totalorder %s520, %s521
      %p533 = scmp.eq.s32.totalorder %s86, 1
      %p534 = por %p532, %p533
      %p536 = scmp.ne.s32.totalorder %s521, %s535
      %p537 = scmp.eq.s32.totalorder %s86, 0
      %p538 = por %p536, %p537
      %s540 = sadd.s32 %s539, 1
      %p543 = scmp.eq.s32.totalorder %s80, 1
      %p544 = scmp.ne.s32.totalorder %s539, %s541
      %p545 = scmp.eq.s32.totalorder %s80, 0
      %p546 = por %p544, %p545
      %p547 = scmp.ne.s32.totalorder %s539, %s541
      %p548 = scmp.eq.s32.totalorder %s85, 1
      %p549 = por %p547, %p548
      %p550 = scmp.ne.s32.totalorder %s541, %s542
      %p551 = scmp.eq.s32.totalorder %s85, 0
      %p552 = por %p550, %p551
      %p553 = scmp.ne.s32.totalorder %s541, %s542
      %p554 = scmp.eq.s32.totalorder %s86, 1
      %p555 = por %p553, %p554
      %p557 = scmp.ne.s32.totalorder %s542, %s556
      %p558 = scmp.eq.s32.totalorder %s86, 0
      %p559 = por %p557, %p558
      %s561 = sadd.s32 %s560, 1
      %p564 = scmp.eq.s32.totalorder %s80, 1
      %p565 = scmp.ne.s32.totalorder %s560, %s562
      %p566 = scmp.eq.s32.totalorder %s80, 0
      %p567 = por %p565, %p566
      %p568 = scmp.ne.s32.totalorder %s560, %s562
      %p569 = scmp.eq.s32.totalorder %s85, 1
      %p570 = por %p568, %p569
      %p571 = scmp.ne.s32.totalorder %s562, %s563
      %p572 = scmp.eq.s32.totalorder %s85, 0
      %p573 = por %p571, %p572
      %p574 = scmp.ne.s32.totalorder %s562, %s563
      %p575 = scmp.eq.s32.totalorder %s86, 1
      %p576 = por %p574, %p575
      %p578 = scmp.ne.s32.totalorder %s563, %s577
      %p579 = scmp.eq.s32.totalorder %s86, 0
      %p580 = por %p578, %p579
      %s582 = sadd.s32 %s581, 1
      %p585 = scmp.eq.s32.totalorder %s80, 1
      %p586 = scmp.ne.s32.totalorder %s581, %s583
      %p587 = scmp.eq.s32.totalorder %s80, 0
      %p588 = por %p586, %p587
      %p589 = scmp.ne.s32.totalorder %s581, %s583
      %p590 = scmp.eq.s32.totalorder %s85, 1
      %p591 = por %p589, %p590
      %p592 = scmp.ne.s32.totalorder %s583, %s584
      %p593 = scmp.eq.s32.totalorder %s85, 0
      %p594 = por %p592, %p593
      %p595 = scmp.ne.s32.totalorder %s583, %s584
      %p596 = scmp.eq.s32.totalorder %s86, 1
      %p597 = por %p595, %p596
      %p599 = scmp.ne.s32.totalorder %s584, %s598
      %p600 = scmp.eq.s32.totalorder %s86, 0
      %p601 = por %p599, %p600
      %s603 = sadd.s32 %s602, 1
      %p606 = scmp.eq.s32.totalorder %s80, 1
      %p607 = scmp.ne.s32.totalorder %s602, %s604
      %p608 = scmp.eq.s32.totalorder %s80, 0
      %p609 = por %p607, %p608
      %p610 = scmp.ne.s32.totalorder %s602, %s604
      %p611 = scmp.eq.s32.totalorder %s85, 1
      %p612 = por %p610, %p611
      %p613 = scmp.ne.s32.totalorder %s604, %s605
      %p614 = scmp.eq.s32.totalorder %s85, 0
      %p615 = por %p613, %p614
      %p616 = scmp.ne.s32.totalorder %s604, %s605
      %p617 = scmp.eq.s32.totalorder %s86, 1
      %p618 = por %p616, %p617
      %p620 = scmp.ne.s32.totalorder %s605, %s619
      %p621 = scmp.eq.s32.totalorder %s86, 0
      %p622 = por %p620, %p621
      %s624 = sadd.s32 %s623, 1
      %p627 = scmp.eq.s32.totalorder %s80, 1
      %p628 = scmp.ne.s32.totalorder %s623, %s625
      %p629 = scmp.eq.s32.totalorder %s80, 0
      %p630 = por %p628, %p629
      %p631 = scmp.ne.s32.totalorder %s623, %s625
      %p632 = scmp.eq.s32.totalorder %s85, 1
      %p633 = por %p631, %p632
      %p634 = scmp.ne.s32.totalorder %s625, %s626
      %p635 = scmp.eq.s32.totalorder %s85, 0
      %p636 = por %p634, %p635
      %p637 = scmp.ne.s32.totalorder %s625, %s626
      %p638 = scmp.eq.s32.totalorder %s86, 1
      %p639 = por %p637, %p638
      %p641 = scmp.ne.s32.totalorder %s626, %s640
      %p642 = scmp.eq.s32.totalorder %s86, 0
      %p643 = por %p641, %p642
      %s645 = sadd.s32 %s644, 1
      %p648 = scmp.eq.s32.totalorder %s80, 1
      %p649 = scmp.ne.s32.totalorder %s644, %s646
      %p650 = scmp.eq.s32.totalorder %s80, 0
      %p651 = por %p649, %p650
      %p652 = scmp.ne.s32.totalorder %s644, %s646
      %p653 = scmp.eq.s32.totalorder %s85, 1
      %p654 = por %p652, %p653
      %p655 = scmp.ne.s32.totalorder %s646, %s647
      %p656 = scmp.eq.s32.totalorder %s85, 0
      %p657 = por %p655, %p656
      %p658 = scmp.ne.s32.totalorder %s646, %s647
      %p659 = scmp.eq.s32.totalorder %s86, 1
      %p660 = por %p658, %p659
      %p662 = scmp.ne.s32.totalorder %s647, %s661
      %p663 = scmp.eq.s32.totalorder %s86, 0
      %p664 = por %p662, %p663
      %s666 = sadd.s32 %s665, 1
      %p669 = scmp.eq.s32.totalorder %s80, 1
      %p670 = scmp.ne.s32.totalorder %s665, %s667
      %p671 = scmp.eq.s32.totalorder %s80, 0
      %p672 = por %p670, %p671
      %p673 = scmp.ne.s32.totalorder %s665, %s667
      %p674 = scmp.eq.s32.totalorder %s85, 1
      %p675 = por %p673, %p674
      %p676 = scmp.ne.s32.totalorder %s667, %s668
      %p677 = scmp.eq.s32.totalorder %s85, 0
      %p678 = por %p676, %p677
      %p679 = scmp.ne.s32.totalorder %s667, %s668
      %p680 = scmp.eq.s32.totalorder %s86, 1
      %p681 = por %p679, %p680
      %p683 = scmp.ne.s32.totalorder %s668, %s682
      %p684 = scmp.eq.s32.totalorder %s86, 0
      %p685 = por %p683, %p684
      %s687 = sadd.s32 %s686, 1
      %p690 = scmp.eq.s32.totalorder %s80, 1
      %p691 = scmp.ne.s32.totalorder %s686, %s688
      %p692 = scmp.eq.s32.totalorder %s80, 0
      %p693 = por %p691, %p692
      %p694 = scmp.ne.s32.totalorder %s686, %s688
      %p695 = scmp.eq.s32.totalorder %s85, 1
      %p696 = por %p694, %p695
      %p697 = scmp.ne.s32.totalorder %s688, %s689
      %p698 = scmp.eq.s32.totalorder %s85, 0
      %p699 = por %p697, %p698
      %p700 = scmp.ne.s32.totalorder %s688, %s689
      %p701 = scmp.eq.s32.totalorder %s86, 1
      %p702 = por %p700, %p701
      %p704 = scmp.ne.s32.totalorder %s689, %s703
      %p705 = scmp.eq.s32.totalorder %s86, 0
      %p706 = por %p704, %p705
      %s708 = sadd.s32 %s707, 1
      %p711 = scmp.eq.s32.totalorder %s80, 1
      %p712 = scmp.ne.s32.totalorder %s707, %s709
      %p713 = scmp.eq.s32.totalorder %s80, 0
      %p714 = por %p712, %p713
      %p715 = scmp.ne.s32.totalorder %s707, %s709
      %p716 = scmp.eq.s32.totalorder %s85, 1
      %p717 = por %p715, %p716
      %p718 = scmp.ne.s32.totalorder %s709, %s710
      %p719 = scmp.eq.s32.totalorder %s85, 0
      %p720 = por %p718, %p719
      %p721 = scmp.ne.s32.totalorder %s709, %s710
      %p722 = scmp.eq.s32.totalorder %s86, 1
      %p723 = por %p721, %p722
      %p725 = scmp.ne.s32.totalorder %s710, %s724
      %p726 = scmp.eq.s32.totalorder %s86, 0
      %p727 = por %p725, %p726
      %s728 = ssub.s32 %s80, %s87
      %p729 = scmp.eq.s32.totalorder %s728, 0
      %s731 = sadd.s32 %s730, 1
      %s732 = scalar_select %p729, %s730, %s731
      %p735 = pneg %p729
      %p736 = scmp.eq.s32.totalorder %s80, 1
      %p737 = por %p735, %p736
      %p738 = scmp.ne.s32.totalorder %s730, %s733
      %p739 = scmp.eq.s32.totalorder %s80, 0
      %p740 = por %p738, %p739
      %p741 = scmp.ne.s32.totalorder %s730, %s733
      %p742 = scmp.eq.s32.totalorder %s85, 1
      %p743 = por %p741, %p742
      %p744 = scmp.ne.s32.totalorder %s733, %s734
      %p745 = scmp.eq.s32.totalorder %s85, 0
      %p746 = por %p744, %p745
      %p747 = scmp.ne.s32.totalorder %s733, %s734
      %p748 = scmp.eq.s32.totalorder %s86, 1
      %p749 = por %p747, %p748
      %p751 = scmp.ne.s32.totalorder %s734, %s750
      %p752 = scmp.eq.s32.totalorder %s86, 0
      %p753 = por %p751, %p752
      %p754 = scmp.le.s32.totalorder 1, %s80
      %p755 = scmp.lt.s32.totalorder %s80, 3
      %p756 = pnand %p754, %p755
      %p757 = pneg %p756
      // Predicated region
      $region9: #{tpu_custom_call.1} parent=5 // pred_check
        _
      $region10: #{tpu_custom_call.1} parent=5 // pred_check_branch
        %759 = sbr.rel (%p756) target = $region12
      $region11: #{tpu_custom_call.1} parent=5 // pred_region
        %s760 = ssub.s32 %s80, 1
        // Predicated region
        $region13: #{tpu_custom_call.1} parent=11 // pred_check
          %p761 = pneg %p153
        $region14: #{tpu_custom_call.1} parent=11 // pred_check_branch
          %763 = sbr.rel (%p761) target = $region16
        $region15: #{tpu_custom_call.1} parent=11 // pred_region
          %s765 = ssub.s32 128, 128
          %766 = vsyncadd [#allocation6], %s765
          %s768 = sshll.u32 [#allocation5], 4
          %s769 = int_to_ptr.vmem [resolvable:$true] %s768
          %771 = dma.hbm_to_vmem [thread:$0]  %s5, 128, %s769, [#allocation6]
        $region16: #{tpu_custom_call.1} parent=11 // pred_fallthru
          _
        // Predicated region
        $region17: #{tpu_custom_call.1} parent=11 // pred_check
          %p772 = pneg %p174
        $region18: #{tpu_custom_call.1} parent=11 // pred_check_branch
          %774 = sbr.rel (%p772) target = $region20
        $region19: #{tpu_custom_call.1} parent=11 // pred_region
          %s776 = ssub.s32 128, 128
          %777 = vsyncadd [#allocation6], %s776
          %s779 = sshll.u32 [#allocation7], 4
          %s780 = int_to_ptr.vmem [resolvable:$true] %s779
          %782 = dma.hbm_to_vmem [thread:$0]  %s7, 128, %s780, [#allocation6]
        $region20: #{tpu_custom_call.1} parent=11 // pred_fallthru
          _
        // Predicated region
        $region21: #{tpu_custom_call.1} parent=11 // pred_check
          %p783 = pneg %p195
        $region22: #{tpu_custom_call.1} parent=11 // pred_check_branch
          %785 = sbr.rel (%p783) target = $region24
        $region23: #{tpu_custom_call.1} parent=11 // pred_region
          _
        $region24: #{tpu_custom_call.1} parent=11 // pred_fallthru
          _
        // Predicated region
        $region25: #{tpu_custom_call.1} parent=11 // pred_check
          %p786 = pneg %p216
        $region26: #{tpu_custom_call.1} parent=11 // pred_check_branch
          %788 = sbr.rel (%p786) target = $region28
        $region27: #{tpu_custom_call.1} parent=11 // pred_region
          %s790 = ssub.s32 16, 16
          %791 = vsyncadd [#allocation9], %s790
          %s793 = sshll.u32 [#allocation8], 4
          %s794 = int_to_ptr.vmem [resolvable:$true] %s793
          %796 = dma.hbm_to_vmem [thread:$0]  %s11, 16, %s794, [#allocation9]
        $region28: #{tpu_custom_call.1} parent=11 // pred_fallthru
          _
        // Predicated region
        $region29: #{tpu_custom_call.1} parent=11 // pred_check
          %p797 = pneg %p237
        $region30: #{tpu_custom_call.1} parent=11 // pred_check_branch
          %799 = sbr.rel (%p797) target = $region32
        $region31: #{tpu_custom_call.1} parent=11 // pred_region
          _
        $region32: #{tpu_custom_call.1} parent=11 // pred_fallthru
          _
        // Predicated region
        $region33: #{tpu_custom_call.1} parent=11 // pred_check
          %p800 = pneg %p258
        $region34: #{tpu_custom_call.1} parent=11 // pred_check_branch
          %802 = sbr.rel (%p800) target = $region36
        $region35: #{tpu_custom_call.1} parent=11 // pred_region
          %s804 = ssub.s32 16, 16
          %805 = vsyncadd [#allocation9], %s804
          %s807 = sshll.u32 [#allocation10], 4
          %s808 = int_to_ptr.vmem [resolvable:$true] %s807
          %810 = dma.hbm_to_vmem [thread:$0]  %s15, 16, %s808, [#allocation9]
        $region36: #{tpu_custom_call.1} parent=11 // pred_fallthru
          _
        // Predicated region
        $region37: #{tpu_custom_call.1} parent=11 // pred_check
          %p811 = pneg %p279
        $region38: #{tpu_custom_call.1} parent=11 // pred_check_branch
          %813 = sbr.rel (%p811) target = $region40
        $region39: #{tpu_custom_call.1} parent=11 // pred_region
          _
        $region40: #{tpu_custom_call.1} parent=11 // pred_fallthru
          _
        // Predicated region
        $region41: #{tpu_custom_call.1} parent=11 // pred_check
          %p814 = pneg %p300
        $region42: #{tpu_custom_call.1} parent=11 // pred_check_branch
          %816 = sbr.rel (%p814) target = $region44
        $region43: #{tpu_custom_call.1} parent=11 // pred_region
          %s818 = ssub.s32 16, 16
          %819 = vsyncadd [#allocation12], %s818
          %s821 = sshll.u32 [#allocation11], 4
          %s822 = int_to_ptr.vmem [resolvable:$true] %s821
          %824 = dma.hbm_to_vmem [thread:$0]  %s19, 16, %s822, [#allocation12]
        $region44: #{tpu_custom_call.1} parent=11 // pred_fallthru
          _
        // Predicated region
        $region45: #{tpu_custom_call.1} parent=11 // pred_check
          %p825 = pneg %p321
        $region46: #{tpu_custom_call.1} parent=11 // pred_check_branch
          %827 = sbr.rel (%p825) target = $region48
        $region47: #{tpu_custom_call.1} parent=11 // pred_region
          _
        $region48: #{tpu_custom_call.1} parent=11 // pred_fallthru
          _
        // Predicated region
        $region49: #{tpu_custom_call.1} parent=11 // pred_check
          %p828 = pneg %p342
        $region50: #{tpu_custom_call.1} parent=11 // pred_check_branch
          %830 = sbr.rel (%p828) target = $region52
        $region51: #{tpu_custom_call.1} parent=11 // pred_region
          %s832 = ssub.s32 16, 16
          %833 = vsyncadd [#allocation12], %s832
          %s835 = sshll.u32 [#allocation13], 4
          %s836 = int_to_ptr.vmem [resolvable:$true] %s835
          %838 = dma.hbm_to_vmem [thread:$0]  %s23, 16, %s836, [#allocation12]
        $region52: #{tpu_custom_call.1} parent=11 // pred_fallthru
          _
        // Predicated region
        $region53: #{tpu_custom_call.1} parent=11 // pred_check
          %p839 = pneg %p363
        $region54: #{tpu_custom_call.1} parent=11 // pred_check_branch
          %841 = sbr.rel (%p839) target = $region56
        $region55: #{tpu_custom_call.1} parent=11 // pred_region
          %s843 = ssub.s32 512, 512
          %844 = vsyncadd [#allocation15], %s843
          %s845 = sshll.u32 [#allocation14], 4
          %s846 = int_to_ptr.vmem [resolvable:$true] %s845
          %851 = dma.hbm_to_vmem [thread:$0]  %s25, 512, %s846, [#allocation15], 128, 128, 8
        $region56: #{tpu_custom_call.1} parent=11 // pred_fallthru
          _
        // Predicated region
        $region57: #{tpu_custom_call.1} parent=11 // pred_check
          %p852 = pneg %p384
        $region58: #{tpu_custom_call.1} parent=11 // pred_check_branch
          %854 = sbr.rel (%p852) target = $region60
        $region59: #{tpu_custom_call.1} parent=11 // pred_region
          %s856 = ssub.s32 16, 16
          %857 = vsyncadd [#allocation15], %s856
          %s859 = sshll.u32 [#allocation16], 4
          %s860 = int_to_ptr.vmem [resolvable:$true] %s859
          %862 = dma.hbm_to_vmem [thread:$0]  %s27, 16, %s860, [#allocation15]
        $region60: #{tpu_custom_call.1} parent=11 // pred_fallthru
          _
        // Predicated region
        $region61: #{tpu_custom_call.1} parent=11 // pred_check
          %p863 = pneg %p405
        $region62: #{tpu_custom_call.1} parent=11 // pred_check_branch
          %865 = sbr.rel (%p863) target = $region64
        $region63: #{tpu_custom_call.1} parent=11 // pred_region
          %s867 = ssub.s32 512, 512
          %868 = vsyncadd [#allocation18], %s867
          %s869 = sshll.u32 [#allocation17], 4
          %s870 = int_to_ptr.vmem [resolvable:$true] %s869
          %875 = dma.hbm_to_vmem [thread:$0]  %s29, 512, %s870, [#allocation18], 128, 128, 8
        $region64: #{tpu_custom_call.1} parent=11 // pred_fallthru
          _
        // Predicated region
        $region65: #{tpu_custom_call.1} parent=11 // pred_check
          %p876 = pneg %p426
        $region66: #{tpu_custom_call.1} parent=11 // pred_check_branch
          %878 = sbr.rel (%p876) target = $region68
        $region67: #{tpu_custom_call.1} parent=11 // pred_region
          %s880 = ssub.s32 16, 16
          %881 = vsyncadd [#allocation18], %s880
          %s883 = sshll.u32 [#allocation19], 4
          %s884 = int_to_ptr.vmem [resolvable:$true] %s883
          %886 = dma.hbm_to_vmem [thread:$0]  %s31, 16, %s884, [#allocation18]
        $region68: #{tpu_custom_call.1} parent=11 // pred_fallthru
          _
        // Predicated region
        $region69: #{tpu_custom_call.1} parent=11 // pred_check
          %p887 = pneg %p447
        $region70: #{tpu_custom_call.1} parent=11 // pred_check_branch
          %889 = sbr.rel (%p887) target = $region72
        $region71: #{tpu_custom_call.1} parent=11 // pred_region
          %s891 = ssub.s32 512, 512
          %892 = vsyncadd [#allocation21], %s891
          %s893 = sshll.u32 [#allocation20], 4
          %s894 = int_to_ptr.vmem [resolvable:$true] %s893
          %899 = dma.hbm_to_vmem [thread:$0]  %s33, 512, %s894, [#allocation21], 128, 128, 8
        $region72: #{tpu_custom_call.1} parent=11 // pred_fallthru
          _
        // Predicated region
        $region73: #{tpu_custom_call.1} parent=11 // pred_check
          %p900 = pneg %p468
        $region74: #{tpu_custom_call.1} parent=11 // pred_check_branch
          %902 = sbr.rel (%p900) target = $region76
        $region75: #{tpu_custom_call.1} parent=11 // pred_region
          %s904 = ssub.s32 16, 16
          %905 = vsyncadd [#allocation21], %s904
          %s907 = sshll.u32 [#allocation22], 4
          %s908 = int_to_ptr.vmem [resolvable:$true] %s907
          %910 = dma.hbm_to_vmem [thread:$0]  %s35, 16, %s908, [#allocation21]
        $region76: #{tpu_custom_call.1} parent=11 // pred_fallthru
          _
        // Predicated region
        $region77: #{tpu_custom_call.1} parent=11 // pred_check
          %p911 = pneg %p489
        $region78: #{tpu_custom_call.1} parent=11 // pred_check_branch
          %913 = sbr.rel (%p911) target = $region80
        $region79: #{tpu_custom_call.1} parent=11 // pred_region
          _
        $region80: #{tpu_custom_call.1} parent=11 // pred_fallthru
          _
        // Predicated region
        $region81: #{tpu_custom_call.1} parent=11 // pred_check
          %p914 = pneg %p510
        $region82: #{tpu_custom_call.1} parent=11 // pred_check_branch
          %916 = sbr.rel (%p914) target = $region84
        $region83: #{tpu_custom_call.1} parent=11 // pred_region
          %s918 = ssub.s32 16, 16
          %919 = vsyncadd [#allocation24], %s918
          %s921 = sshll.u32 [#allocation23], 4
          %s922 = int_to_ptr.vmem [resolvable:$true] %s921
          %924 = dma.hbm_to_vmem [thread:$0]  %s39, 16, %s922, [#allocation24]
        $region84: #{tpu_custom_call.1} parent=11 // pred_fallthru
          _
        // Predicated region
        $region85: #{tpu_custom_call.1} parent=11 // pred_check
          %p925 = pneg %p531
        $region86: #{tpu_custom_call.1} parent=11 // pred_check_branch
          %927 = sbr.rel (%p925) target = $region88
        $region87: #{tpu_custom_call.1} parent=11 // pred_region
          _
        $region88: #{tpu_custom_call.1} parent=11 // pred_fallthru
          _
        // Predicated region
        $region89: #{tpu_custom_call.1} parent=11 // pred_check
          %p928 = pneg %p552
        $region90: #{tpu_custom_call.1} parent=11 // pred_check_branch
          %930 = sbr.rel (%p928) target = $region92
        $region91: #{tpu_custom_call.1} parent=11 // pred_region
          _
        $region92: #{tpu_custom_call.1} parent=11 // pred_fallthru
          _
        // Predicated region
        $region93: #{tpu_custom_call.1} parent=11 // pred_check
          %p931 = pneg %p573
        $region94: #{tpu_custom_call.1} parent=11 // pred_check_branch
          %933 = sbr.rel (%p931) target = $region96
        $region95: #{tpu_custom_call.1} parent=11 // pred_region
          _
        $region96: #{tpu_custom_call.1} parent=11 // pred_fallthru
          _
        // Predicated region
        $region97: #{tpu_custom_call.1} parent=11 // pred_check
          %p934 = pneg %p594
        $region98: #{tpu_custom_call.1} parent=11 // pred_check_branch
          %936 = sbr.rel (%p934) target = $region100
        $region99: #{tpu_custom_call.1} parent=11 // pred_region
          _
        $region100: #{tpu_custom_call.1} parent=11 // pred_fallthru
          _
        // Predicated region
        $region101: #{tpu_custom_call.1} parent=11 // pred_check
          %p937 = pneg %p615
        $region102: #{tpu_custom_call.1} parent=11 // pred_check_branch
          %939 = sbr.rel (%p937) target = $region104
        $region103: #{tpu_custom_call.1} parent=11 // pred_region
          _
        $region104: #{tpu_custom_call.1} parent=11 // pred_fallthru
          _
        // Predicated region
        $region105: #{tpu_custom_call.1} parent=11 // pred_check
          %p940 = pneg %p636
        $region106: #{tpu_custom_call.1} parent=11 // pred_check_branch
          %942 = sbr.rel (%p940) target = $region108
        $region107: #{tpu_custom_call.1} parent=11 // pred_region
          _
        $region108: #{tpu_custom_call.1} parent=11 // pred_fallthru
          _
        // Predicated region
        $region109: #{tpu_custom_call.1} parent=11 // pred_check
          %p943 = pneg %p657
        $region110: #{tpu_custom_call.1} parent=11 // pred_check_branch
          %945 = sbr.rel (%p943) target = $region112
        $region111: #{tpu_custom_call.1} parent=11 // pred_region
          %s947 = ssub.s32 512, 512
          %948 = vsyncadd [#allocation24], %s947
          %s949 = sshll.u32 [#allocation25], 4
          %s950 = int_to_ptr.vmem [resolvable:$true] %s949
          %955 = dma.hbm_to_vmem [thread:$0]  %s53, 512, %s950, [#allocation24], 128, 128, 8
        $region112: #{tpu_custom_call.1} parent=11 // pred_fallthru
          _
        // Predicated region
        $region113: #{tpu_custom_call.1} parent=11 // pred_check
          %p956 = pneg %p678
        $region114: #{tpu_custom_call.1} parent=11 // pred_check_branch
          %958 = sbr.rel (%p956) target = $region116
        $region115: #{tpu_custom_call.1} parent=11 // pred_region
          _
        $region116: #{tpu_custom_call.1} parent=11 // pred_fallthru
          _
        // Predicated region
        $region117: #{tpu_custom_call.1} parent=11 // pred_check
          %p959 = pneg %p699
        $region118: #{tpu_custom_call.1} parent=11 // pred_check_branch
          %961 = sbr.rel (%p959) target = $region120
        $region119: #{tpu_custom_call.1} parent=11 // pred_region
          _
        $region120: #{tpu_custom_call.1} parent=11 // pred_fallthru
          _
        // Predicated region
        $region121: #{tpu_custom_call.1} parent=11 // pred_check
          %p962 = pneg %p720
        $region122: #{tpu_custom_call.1} parent=11 // pred_check_branch
          %964 = sbr.rel (%p962) target = $region124
        $region123: #{tpu_custom_call.1} parent=11 // pred_region
          _
        $region124: #{tpu_custom_call.1} parent=11 // pred_fallthru
          _
      $region12: #{tpu_custom_call.1} parent=5 // pred_fallthru
        _
      %p965 = scmp.lt.s32.totalorder %s80, 2
      // Predicated region
      $region125: #{tpu_custom_call.1} parent=5 // pred_check
        %p966 = pneg %p965
      $region126: #{tpu_custom_call.1} parent=5 // pred_check_branch
        %968 = sbr.rel (%p966) target = $region128
      $region127: #{tpu_custom_call.1} parent=5 // pred_region
        // Predicated region
        $region129: #{tpu_custom_call.1} parent=127 // pred_check
          %p969 = pneg %p100
        $region130: #{tpu_custom_call.1} parent=127 // pred_check_branch
          %971 = sbr.rel (%p969) target = $region132
        $region131: #{tpu_custom_call.1} parent=127 // pred_region
          %s972 = sand.u32 %s90, 1
          %s973 = scalar_lea.sflag [#allocation3], %s972
          %s974 = sand.u32 %s90, 1
          %s975 = smul.addr %s974, 8
          %s976 = scalar_lea.vmem [#allocation2], %s975
          %s978 = ssub.s32 128, 128
          %979 = vsyncadd %s973, %s978
          %s980 = smul.addr %s80, 128
          %s981 = scalar_lea.hbm %s1, %s980
          %s983 = sshll.u32 %s976, 4
          %s984 = int_to_ptr.vmem [resolvable:$true] %s983
          %986 = dma.hbm_to_vmem [thread:$0]  %s981, 128, %s984, %s973
        $region132: #{tpu_custom_call.1} parent=127 // pred_fallthru
          _
        // Predicated region
        $region133: #{tpu_custom_call.1} parent=127 // pred_check
          %p987 = pneg %p126
        $region134: #{tpu_custom_call.1} parent=127 // pred_check_branch
          %989 = sbr.rel (%p987) target = $region136
        $region135: #{tpu_custom_call.1} parent=127 // pred_region
          %p990 = scmp.lt.s32.totalorder %s80, 1
          %s991 = scalar_select %p990, %s80, 1
          %s992 = smul.addr %s991, 2
          %s993 = smul.addr %s992, 8
          %s994 = scalar_lea.vmem %s3, %s993
        $region136: #{tpu_custom_call.1} parent=127 // pred_fallthru
          _
      $region128: #{tpu_custom_call.1} parent=5 // pred_fallthru
        _
      %p995 = scmp.le.s32.totalorder 1, %s80
      %p996 = scmp.lt.s32.totalorder %s80, 3
      %p997 = pnand %p995, %p996
      %p998 = pneg %p997
      // Predicated region
      $region137: #{tpu_custom_call.1} parent=5 // pred_check
        _
      $region138: #{tpu_custom_call.1} parent=5 // pred_check_branch
        %1000 = sbr.rel (%p997) target = $region140
      $region139: #{tpu_custom_call.1} parent=5 // pred_region
        %s1001 = ssub.s32 %s80, 1
        %s1002 = sand.u32 %s93, 1
        %s1003 = scalar_lea.sflag [#allocation3], %s1002
        %s1004 = sand.u32 %s93, 1
        %s1005 = smul.addr %s1004, 8
        %s1006 = scalar_lea.vmem [#allocation2], %s1005
        // Predicated region
        $region141: #{tpu_custom_call.1} parent=139 // pred_check
          %p1007 = pneg %p106
        $region142: #{tpu_custom_call.1} parent=139 // pred_check_branch
          %1009 = sbr.rel (%p1007) target = $region144
        $region143: #{tpu_custom_call.1} parent=139 // pred_region
          %1010 = dma.done %s1003, 128
        $region144: #{tpu_custom_call.1} parent=139 // pred_fallthru
          _
        // Predicated region
        $region145: #{tpu_custom_call.1} parent=139 // pred_check
          %p1011 = pneg %p153
        $region146: #{tpu_custom_call.1} parent=139 // pred_check_branch
          %1013 = sbr.rel (%p1011) target = $region148
        $region147: #{tpu_custom_call.1} parent=139 // pred_region
          %1014 = dma.done [#allocation6], 128
        $region148: #{tpu_custom_call.1} parent=139 // pred_fallthru
          _
        // Predicated region
        $region149: #{tpu_custom_call.1} parent=139 // pred_check
          %p1015 = pneg %p174
        $region150: #{tpu_custom_call.1} parent=139 // pred_check_branch
          %1017 = sbr.rel (%p1015) target = $region152
        $region151: #{tpu_custom_call.1} parent=139 // pred_region
          %1018 = dma.done [#allocation6], 128
        $region152: #{tpu_custom_call.1} parent=139 // pred_fallthru
          _
        // Predicated region
        $region153: #{tpu_custom_call.1} parent=139 // pred_check
          %p1019 = pneg %p216
        $region154: #{tpu_custom_call.1} parent=139 // pred_check_branch
          %1021 = sbr.rel (%p1019) target = $region156
        $region155: #{tpu_custom_call.1} parent=139 // pred_region
          %1022 = dma.done [#allocation9], 16
        $region156: #{tpu_custom_call.1} parent=139 // pred_fallthru
          _
        // Predicated region
        $region157: #{tpu_custom_call.1} parent=139 // pred_check
          %p1023 = pneg %p258
        $region158: #{tpu_custom_call.1} parent=139 // pred_check_branch
          %1025 = sbr.rel (%p1023) target = $region160
        $region159: #{tpu_custom_call.1} parent=139 // pred_region
          %1026 = dma.done [#allocation9], 16
        $region160: #{tpu_custom_call.1} parent=139 // pred_fallthru
          _
        // Predicated region
        $region161: #{tpu_custom_call.1} parent=139 // pred_check
          %p1027 = pneg %p300
        $region162: #{tpu_custom_call.1} parent=139 // pred_check_branch
          %1029 = sbr.rel (%p1027) target = $region164
        $region163: #{tpu_custom_call.1} parent=139 // pred_region
          %1030 = dma.done [#allocation12], 16
        $region164: #{tpu_custom_call.1} parent=139 // pred_fallthru
          _
        // Predicated region
        $region165: #{tpu_custom_call.1} parent=139 // pred_check
          %p1031 = pneg %p342
        $region166: #{tpu_custom_call.1} parent=139 // pred_check_branch
          %1033 = sbr.rel (%p1031) target = $region168
        $region167: #{tpu_custom_call.1} parent=139 // pred_region
          %1034 = dma.done [#allocation12], 16
        $region168: #{tpu_custom_call.1} parent=139 // pred_fallthru
          _
        // Predicated region
        $region169: #{tpu_custom_call.1} parent=139 // pred_check
          %p1035 = pneg %p363
        $region170: #{tpu_custom_call.1} parent=139 // pred_check_branch
          %1037 = sbr.rel (%p1035) target = $region172
        $region171: #{tpu_custom_call.1} parent=139 // pred_region
          %1038 = dma.done [#allocation15], 512
        $region172: #{tpu_custom_call.1} parent=139 // pred_fallthru
          _
        // Predicated region
        $region173: #{tpu_custom_call.1} parent=139 // pred_check
          %p1039 = pneg %p384
        $region174: #{tpu_custom_call.1} parent=139 // pred_check_branch
          %1041 = sbr.rel (%p1039) target = $region176
        $region175: #{tpu_custom_call.1} parent=139 // pred_region
          %1042 = dma.done [#allocation15], 16
        $region176: #{tpu_custom_call.1} parent=139 // pred_fallthru
          _
        // Predicated region
        $region177: #{tpu_custom_call.1} parent=139 // pred_check
          %p1043 = pneg %p405
        $region178: #{tpu_custom_call.1} parent=139 // pred_check_branch
          %1045 = sbr.rel (%p1043) target = $region180
        $region179: #{tpu_custom_call.1} parent=139 // pred_region
          %1046 = dma.done [#allocation18], 512
        $region180: #{tpu_custom_call.1} parent=139 // pred_fallthru
          _
        // Predicated region
        $region181: #{tpu_custom_call.1} parent=139 // pred_check
          %p1047 = pneg %p426
        $region182: #{tpu_custom_call.1} parent=139 // pred_check_branch
          %1049 = sbr.rel (%p1047) target = $region184
        $region183: #{tpu_custom_call.1} parent=139 // pred_region
          %1050 = dma.done [#allocation18], 16
        $region184: #{tpu_custom_call.1} parent=139 // pred_fallthru
          _
        // Predicated region
        $region185: #{tpu_custom_call.1} parent=139 // pred_check
          %p1051 = pneg %p447
        $region186: #{tpu_custom_call.1} parent=139 // pred_check_branch
          %1053 = sbr.rel (%p1051) target = $region188
        $region187: #{tpu_custom_call.1} parent=139 // pred_region
          %1054 = dma.done [#allocation21], 512
        $region188: #{tpu_custom_call.1} parent=139 // pred_fallthru
          _
        // Predicated region
        $region189: #{tpu_custom_call.1} parent=139 // pred_check
          %p1055 = pneg %p468
        $region190: #{tpu_custom_call.1} parent=139 // pred_check_branch
          %1057 = sbr.rel (%p1055) target = $region192
        $region191: #{tpu_custom_call.1} parent=139 // pred_region
          %1058 = dma.done [#allocation21], 16
        $region192: #{tpu_custom_call.1} parent=139 // pred_fallthru
          _
        // Predicated region
        $region193: #{tpu_custom_call.1} parent=139 // pred_check
          %p1059 = pneg %p510
        $region194: #{tpu_custom_call.1} parent=139 // pred_check_branch
          %1061 = sbr.rel (%p1059) target = $region196
        $region195: #{tpu_custom_call.1} parent=139 // pred_region
          %1062 = dma.done [#allocation24], 16
        $region196: #{tpu_custom_call.1} parent=139 // pred_fallthru
          _
        // Predicated region
        $region197: #{tpu_custom_call.1} parent=139 // pred_check
          %p1063 = pneg %p657
        $region198: #{tpu_custom_call.1} parent=139 // pred_check_branch
          %1065 = sbr.rel (%p1063) target = $region200
        $region199: #{tpu_custom_call.1} parent=139 // pred_region
          %1066 = dma.done [#allocation24], 512
        $region200: #{tpu_custom_call.1} parent=139 // pred_fallthru
          _
        %s1067 = sand.u32 %s93, 1
        %s1068 = scalar_lea.sflag [#allocation3], %s1067
        %s1069 = sand.u32 %s93, 1
        %s1070 = smul.addr %s1069, 8
        %s1071 = scalar_lea.vmem [#allocation2], %s1070
        %p1072 = pneg %p106
        %p1073 = pneg %p103
        %p1074 = scmp.lt.s32.totalorder %s85, 1
        %s1075 = scalar_select %p1074, %s85, 1
        %s1076 = smul.addr %s1075, 2
        %s1077 = smul.addr %s1076, 8
        %s1078 = scalar_lea.vmem %s3, %s1077
        %p1079 = pneg %p132
        %p1080 = pneg %p129
        %p1081 = pneg %p153
        %p1082 = pneg %p150
        %p1083 = pneg %p174
        %p1084 = pneg %p171
        %p1085 = pneg %p195
        %p1086 = pneg %p192
        %p1087 = pneg %p216
        %p1088 = pneg %p213
        %p1089 = pneg %p237
        %p1090 = pneg %p234
        %p1091 = pneg %p258
        %p1092 = pneg %p255
        %p1093 = pneg %p279
        %p1094 = pneg %p276
        %p1095 = pneg %p300
        %p1096 = pneg %p297
        %p1097 = pneg %p321
        %p1098 = pneg %p318
        %p1099 = pneg %p342
        %p1100 = pneg %p339
        %p1101 = pneg %p363
        %p1102 = pneg %p360
        %p1103 = pneg %p384
        %p1104 = pneg %p381
        %p1105 = pneg %p405
        %p1106 = pneg %p402
        %p1107 = pneg %p426
        %p1108 = pneg %p423
        %p1109 = pneg %p447
        %p1110 = pneg %p444
        %p1111 = pneg %p468
        %p1112 = pneg %p465
        %p1113 = pneg %p489
        %p1114 = pneg %p486
        %p1115 = pneg %p510
        %p1116 = pneg %p507
        %p1117 = pneg %p531
        %p1118 = pneg %p528
        %p1119 = pneg %p552
        %p1120 = pneg %p549
        %p1121 = pneg %p573
        %p1122 = pneg %p570
        %p1123 = pneg %p594
        %p1124 = pneg %p591
        %p1125 = pneg %p615
        %p1126 = pneg %p612
        %p1127 = pneg %p636
        %p1128 = pneg %p633
        %p1129 = pneg %p657
        %p1130 = pneg %p654
        %p1131 = pneg %p678
        %p1132 = pneg %p675
        %p1133 = pneg %p699
        %p1134 = pneg %p696
        %p1135 = pneg %p720
        %p1136 = pneg %p717
        %p1137 = pneg %p746
        %p1138 = pneg %p743
        %s1139 = sand.u32 %s733, 1
        %s1140 = scalar_lea.sflag [#allocation4], %s1139
        %s1141 = sand.u32 %s733, 1
        %s1142 = smul.addr %s1141, 8
        %s1143 = scalar_lea.vmem [#allocation26], %s1142
        %p1144 = scmp.lt.s32.totalorder %s85, 1
        %s1145 = scalar_select %p1144, %s85, 1
        %s1146 = smul.addr %s1145, 2
        %s1147 = smul.addr %s1146, 8
        %s1148 = scalar_lea.vmem %s3, %s1147
        %v1149 = vld [vmem:[%s1006] sm:$0xff]
        %v1150 = vld [vmem:[%s1148] sm:$0xff]
        %v1151 = vld [vmem:[%s1148 + $0x8] sm:$0xff]
        %v1152 = vld [vmem:[#allocation5] sm:$0xff]
        %vm1153 = vcmp.gt.f32.partialorder %v1152, 0.0
        %v1154 = vsel %vm1153, 0.0, -1e+09
        %v1155 = vld [vmem:[#allocation7] sm:$0xff]
        %vm1156 = vcmp.gt.f32.partialorder %v1155, 0.0
        %v1157 = vsel %vm1156, 0.0, -1e+09
        %v1158 = vld [vmem:[%s9] sm:$0xff]
        %v1159 = vld [vmem:[%s9 + $0x8] sm:$0xff]
        %v1160 = vld [vmem:[%s9 + $0x10] sm:$0xff]
        %v1161 = vld [vmem:[%s9 + $0x18] sm:$0xff]
        %v1162 = vld [vmem:[#allocation8] sm:$0x1]
        %v1164 = vlaneseq
        %v1165 = vshrl.u32 %v1164, 7
        %v1166 = vsub.s32 0, %v1165
        %v1167 = vrot.slane %v1162, %v1166
        %vm1169 = vcmask 261120
        %v1171 = vsel %vm1169, %v1149, 0
        %1173 = vmatprep.subr.mxu0 0.0
        %1174 = vmatpush1.msra.mxu0 0.0
        %1175 = vmatprep.subr.mxu0 0.0
        %1176 = vmatpush1.msra.mxu0 0.0
        %1177 = vmatprep.subr.mxu0 0.0
        %1178 = vmatpush1.msra.mxu0 0.0
        %1179 = vmatprep.subr.mxu0 0.0
        %1180 = vmatpush1.msra.mxu0 0.0
        %1181 = vmatprep.subr.mxu0 0.0
        %1182 = vmatpush1.msra.mxu0 0.0
        %1183 = vmatprep.subr.mxu0 0.0
        %1184 = vmatpush1.msra.mxu0 0.0
        %1185 = vmatprep.subr.mxu0 0.0
        %1186 = vmatpush1.msra.mxu0 0.0
        %1187 = vmatprep.subr.mxu0 0.0
        %1188 = vmatpush1.msra.mxu0 0.0
        %1189 = vmatprep.subr.mxu0 0.0
        %1190 = vmatpush1.msra.mxu0 0.0
        %1191 = vmatprep.subr.mxu0 0.0
        %1192 = vmatpush1.msra.mxu0 0.0
        %1193 = vmatprep.subr.mxu0 0.0
        %1194 = vmatpush1.msra.mxu0 0.0
        %1195 = vmatprep.subr.mxu0 0.0
        %1196 = vmatpush1.msra.mxu0 0.0
        %1197 = vmatprep.subr.mxu0 0.0
        %1198 = vmatpush1.msra.mxu0 %v1161
        %1199 = vmatprep.subr.mxu0 0.0
        %1200 = vmatpush1.msra.mxu0 %v1160
        %1201 = vmatprep.subr.mxu0 0.0
        %1202 = vmatpush1.msra.mxu0 %v1159
        %1203 = vmatprep.subr.mxu0 0.0
        %1204 = vmatpush1.msra.mxu0 %v1158
        %1205 = vmatprep.subr.mxu0 0.0
        %1206 = vmatpush2.msra.mxu0 0.0
        %1207 = vmatprep.subr.mxu0 0.0
        %1208 = vmatpush2.msra.mxu0 0.0
        %1209 = vmatprep.subr.mxu0 0.0
        %1210 = vmatpush2.msra.mxu0 0.0
        %1211 = vmatprep.subr.mxu0 0.0
        %1212 = vmatpush2.msra.mxu0 0.0
        %1213 = vmatprep.subr.mxu0 0.0
        %1214 = vmatpush2.msra.mxu0 0.0
        %1215 = vmatprep.subr.mxu0 0.0
        %1216 = vmatpush2.msra.mxu0 0.0
        %1217 = vmatprep.subr.mxu0 0.0
        %1218 = vmatpush2.msra.mxu0 0.0
        %1219 = vmatprep.subr.mxu0 0.0
        %1220 = vmatpush2.msra.mxu0 0.0
        %1221 = vmatprep.subr.mxu0 0.0
        %1222 = vmatpush2.msra.mxu0 0.0
        %1223 = vmatprep.subr.mxu0 0.0
        %1224 = vmatpush2.msra.mxu0 0.0
        %1225 = vmatprep.subr.mxu0 0.0
        %1226 = vmatpush2.msra.mxu0 0.0
        %1227 = vmatprep.subr.mxu0 0.0
        %1228 = vmatpush2.msra.mxu0 0.0
        %1229 = vmatprep.subr.mxu0 0.0
        %1230 = vmatpush2.msra.mxu0 0.0
        %1231 = vmatprep.subr.mxu0 0.0
        %1232 = vmatpush2.msra.mxu0 0.0
        %1233 = vmatprep.subr.mxu0 0.0
        %1234 = vmatpush2.msra.mxu0 0.0
        %1235 = vmatprep.subr.mxu0 0.0
        %1236 = vmatpush2.msra.mxu0 0.0
        %1237 = vmatprep.mubr.f32.mxu0 0.0
        %1238 = vmatmul.mubr.f32.gmra.mxu0 %v1171
        %v1239 = vpop.f32.mrf.mxu0
        %v1240 = vadd.f32 %v1167, %v1239
        %v1241 = vpop.f32.mrf.mxu0
        %1242 = vdwg.mxu0
        %1244 = vrot.lane.b32.xlu0 %v1240, 120
        %v1245 = vpop.permute.xlu0 %1244
        %1246 = vrot.lane.b32.xlu0 %v1240, 112
        %v1247 = vpop.permute.xlu0 %1246
        %1248 = vrot.lane.b32.xlu0 %v1240, 104
        %v1249 = vpop.permute.xlu0 %1248
        %v1250 = vld [vmem:[%s13] sm:$0xff]
        %v1251 = vld [vmem:[%s13 + $0x8] sm:$0xff]
        %v1252 = vld [vmem:[%s13 + $0x10] sm:$0xff]
        %v1253 = vld [vmem:[%s13 + $0x18] sm:$0xff]
        %v1254 = vld [vmem:[#allocation10] sm:$0x1]
        %v1256 = vlaneseq
        %v1257 = vshrl.u32 %v1256, 7
        %v1258 = vsub.s32 0, %v1257
        %v1259 = vrot.slane %v1254, %v1258
        %1261 = vmatprep.subr.mxu0 0.0
        %1262 = vmatpush1.msra.mxu0 0.0
        %1263 = vmatprep.subr.mxu0 0.0
        %1264 = vmatpush1.msra.mxu0 0.0
        %1265 = vmatprep.subr.mxu0 0.0
        %1266 = vmatpush1.msra.mxu0 0.0
        %1267 = vmatprep.subr.mxu0 0.0
        %1268 = vmatpush1.msra.mxu0 0.0
        %1269 = vmatprep.subr.mxu0 0.0
        %1270 = vmatpush1.msra.mxu0 0.0
        %1271 = vmatprep.subr.mxu0 0.0
        %1272 = vmatpush1.msra.mxu0 0.0
        %1273 = vmatprep.subr.mxu0 0.0
        %1274 = vmatpush1.msra.mxu0 0.0
        %1275 = vmatprep.subr.mxu0 0.0
        %1276 = vmatpush1.msra.mxu0 0.0
        %1277 = vmatprep.subr.mxu0 0.0
        %1278 = vmatpush1.msra.mxu0 0.0
        %1279 = vmatprep.subr.mxu0 0.0
        %1280 = vmatpush1.msra.mxu0 0.0
        %1281 = vmatprep.subr.mxu0 0.0
        %1282 = vmatpush1.msra.mxu0 0.0
        %1283 = vmatprep.subr.mxu0 0.0
        %1284 = vmatpush1.msra.mxu0 0.0
        %1285 = vmatprep.subr.mxu0 0.0
        %1286 = vmatpush1.msra.mxu0 %v1253
        %1287 = vmatprep.subr.mxu0 0.0
        %1288 = vmatpush1.msra.mxu0 %v1252
        %1289 = vmatprep.subr.mxu0 0.0
        %1290 = vmatpush1.msra.mxu0 %v1251
        %1291 = vmatprep.subr.mxu0 0.0
        %1292 = vmatpush1.msra.mxu0 %v1250
        %1293 = vmatprep.subr.mxu0 0.0
        %1294 = vmatpush2.msra.mxu0 0.0
        %1295 = vmatprep.subr.mxu0 0.0
        %1296 = vmatpush2.msra.mxu0 0.0
        %1297 = vmatprep.subr.mxu0 0.0
        %1298 = vmatpush2.msra.mxu0 0.0
        %1299 = vmatprep.subr.mxu0 0.0
        %1300 = vmatpush2.msra.mxu0 0.0
        %1301 = vmatprep.subr.mxu0 0.0
        %1302 = vmatpush2.msra.mxu0 0.0
        %1303 = vmatprep.subr.mxu0 0.0
        %1304 = vmatpush2.msra.mxu0 0.0
        %1305 = vmatprep.subr.mxu0 0.0
        %1306 = vmatpush2.msra.mxu0 0.0
        %1307 = vmatprep.subr.mxu0 0.0
        %1308 = vmatpush2.msra.mxu0 0.0
        %1309 = vmatprep.subr.mxu0 0.0
        %1310 = vmatpush2.msra.mxu0 0.0
        %1311 = vmatprep.subr.mxu0 0.0
        %1312 = vmatpush2.msra.mxu0 0.0
        %1313 = vmatprep.subr.mxu0 0.0
        %1314 = vmatpush2.msra.mxu0 0.0
        %1315 = vmatprep.subr.mxu0 0.0
        %1316 = vmatpush2.msra.mxu0 0.0
        %1317 = vmatprep.subr.mxu0 0.0
        %1318 = vmatpush2.msra.mxu0 0.0
        %1319 = vmatprep.subr.mxu0 0.0
        %1320 = vmatpush2.msra.mxu0 0.0
        %1321 = vmatprep.subr.mxu0 0.0
        %1322 = vmatpush2.msra.mxu0 0.0
        %1323 = vmatprep.subr.mxu0 0.0
        %1324 = vmatpush2.msra.mxu0 0.0
        %1325 = vmatprep.mubr.f32.mxu0 0.0
        %1326 = vmatmul.mubr.f32.gmra.mxu0 %v1171
        %v1327 = vpop.f32.mrf.mxu0
        %v1328 = vadd.f32 %v1259, %v1327
        %v1329 = vpop.f32.mrf.mxu0
        %1330 = vdwg.mxu0
        %1332 = vrot.lane.b32.xlu0 %v1328, 120
        %v1333 = vpop.permute.xlu0 %1332
        %1335 = vrot.lane.b32.xlu0 %v1328, 112
        %v1336 = vpop.permute.xlu0 %1335
        %1338 = vrot.lane.b32.xlu0 %v1328, 104
        %v1339 = vpop.permute.xlu0 %1338
        %v1341 = vld [vmem:[%s17] sm:$0xff]
        %v1342 = vld [vmem:[%s17 + $0x8] sm:$0xff]
        %v1343 = vld [vmem:[%s17 + $0x10] sm:$0xff]
        %v1344 = vld [vmem:[%s17 + $0x18] sm:$0xff]
        %v1345 = vld [vmem:[#allocation11] sm:$0x1]
        %v1347 = vlaneseq
        %v1348 = vshrl.u32 %v1347, 7
        %v1349 = vsub.s32 0, %v1348
        %v1350 = vrot.slane %v1345, %v1349
        %1352 = vmatprep.subr.mxu0 0.0
        %1353 = vmatpush1.msra.mxu0 0.0
        %1354 = vmatprep.subr.mxu0 0.0
        %1355 = vmatpush1.msra.mxu0 0.0
        %1356 = vmatprep.subr.mxu0 0.0
        %1357 = vmatpush1.msra.mxu0 0.0
        %1358 = vmatprep.subr.mxu0 0.0
        %1359 = vmatpush1.msra.mxu0 0.0
        %1360 = vmatprep.subr.mxu0 0.0
        %1361 = vmatpush1.msra.mxu0 0.0
        %1362 = vmatprep.subr.mxu0 0.0
        %1363 = vmatpush1.msra.mxu0 0.0
        %1364 = vmatprep.subr.mxu0 0.0
        %1365 = vmatpush1.msra.mxu0 0.0
        %1366 = vmatprep.subr.mxu0 0.0
        %1367 = vmatpush1.msra.mxu0 0.0
        %1368 = vmatprep.subr.mxu0 0.0
        %1369 = vmatpush1.msra.mxu0 0.0
        %1370 = vmatprep.subr.mxu0 0.0
        %1371 = vmatpush1.msra.mxu0 0.0
        %1372 = vmatprep.subr.mxu0 0.0
        %1373 = vmatpush1.msra.mxu0 0.0
        %1374 = vmatprep.subr.mxu0 0.0
        %1375 = vmatpush1.msra.mxu0 0.0
        %1376 = vmatprep.subr.mxu0 0.0
        %1377 = vmatpush1.msra.mxu0 %v1344
        %1378 = vmatprep.subr.mxu0 0.0
        %1379 = vmatpush1.msra.mxu0 %v1343
        %1380 = vmatprep.subr.mxu0 0.0
        %1381 = vmatpush1.msra.mxu0 %v1342
        %1382 = vmatprep.subr.mxu0 0.0
        %1383 = vmatpush1.msra.mxu0 %v1341
        %1384 = vmatprep.subr.mxu0 0.0
        %1385 = vmatpush2.msra.mxu0 0.0
        %1386 = vmatprep.subr.mxu0 0.0
        %1387 = vmatpush2.msra.mxu0 0.0
        %1388 = vmatprep.subr.mxu0 0.0
        %1389 = vmatpush2.msra.mxu0 0.0
        %1390 = vmatprep.subr.mxu0 0.0
        %1391 = vmatpush2.msra.mxu0 0.0
        %1392 = vmatprep.subr.mxu0 0.0
        %1393 = vmatpush2.msra.mxu0 0.0
        %1394 = vmatprep.subr.mxu0 0.0
        %1395 = vmatpush2.msra.mxu0 0.0
        %1396 = vmatprep.subr.mxu0 0.0
        %1397 = vmatpush2.msra.mxu0 0.0
        %1398 = vmatprep.subr.mxu0 0.0
        %1399 = vmatpush2.msra.mxu0 0.0
        %1400 = vmatprep.subr.mxu0 0.0
        %1401 = vmatpush2.msra.mxu0 0.0
        %1402 = vmatprep.subr.mxu0 0.0
        %1403 = vmatpush2.msra.mxu0 0.0
        %1404 = vmatprep.subr.mxu0 0.0
        %1405 = vmatpush2.msra.mxu0 0.0
        %1406 = vmatprep.subr.mxu0 0.0
        %1407 = vmatpush2.msra.mxu0 0.0
        %1408 = vmatprep.subr.mxu0 0.0
        %1409 = vmatpush2.msra.mxu0 0.0
        %1410 = vmatprep.subr.mxu0 0.0
        %1411 = vmatpush2.msra.mxu0 0.0
        %1412 = vmatprep.subr.mxu0 0.0
        %1413 = vmatpush2.msra.mxu0 0.0
        %1414 = vmatprep.subr.mxu0 0.0
        %1415 = vmatpush2.msra.mxu0 0.0
        %1416 = vmatprep.mubr.f32.mxu0 0.0
        %1417 = vmatmul.mubr.f32.gmra.mxu0 %v1171
        %v1418 = vpop.f32.mrf.mxu0
        %v1419 = vadd.f32 %v1350, %v1418
        %v1420 = vpop.f32.mrf.mxu0
        %1421 = vdwg.mxu0
        %1423 = vrot.lane.b32.xlu0 %v1419, 120
        %v1424 = vpop.permute.xlu0 %1423
        %1426 = vrot.lane.b32.xlu0 %v1419, 112
        %v1427 = vpop.permute.xlu0 %1426
        %1429 = vrot.lane.b32.xlu0 %v1419, 104
        %v1430 = vpop.permute.xlu0 %1429
        %1432 = vxpose.xlu0.b32.start [1/16] %v1328, 128
        %1433 = vxpose.xlu0.b32.cont [2/16] 0.0, 128
        %1434 = vxpose.xlu0.b32.cont [3/16] 0.0, 128
        %1435 = vxpose.xlu0.b32.cont [4/16] 0.0, 128
        %1436 = vxpose.xlu0.b32.cont [5/16] 0.0, 128
        %1437 = vxpose.xlu0.b32.cont [6/16] 0.0, 128
        %1438 = vxpose.xlu0.b32.cont [7/16] 0.0, 128
        %1439 = vxpose.xlu0.b32.cont [8/16] 0.0, 128
        %1440 = vxpose.xlu0.b32.cont [9/16] 0.0, 128
        %1441 = vxpose.xlu0.b32.cont [10/16] 0.0, 128
        %1442 = vxpose.xlu0.b32.cont [11/16] 0.0, 128
        %1443 = vxpose.xlu0.b32.cont [12/16] 0.0, 128
        %1444 = vxpose.xlu0.b32.cont [13/16] 0.0, 128
        %1445 = vxpose.xlu0.b32.cont [14/16] 0.0, 128
        %1446 = vxpose.xlu0.b32.cont [15/16] 0.0, 128
        %1447 = vxpose.xlu0.b32.end [16/16] 0.0, 128
        %v1448 = vpop.trf.xlu0
        %v1449 = vpop.trf.xlu0
        %v1450 = vpop.trf.xlu0
        %v1451 = vpop.trf.xlu0
        %v1452 = vpop.trf.xlu0
        %v1453 = vpop.trf.xlu0
        %v1454 = vpop.trf.xlu0
        %v1455 = vpop.trf.xlu0
        %v1456 = vpop.trf.xlu0
        %v1457 = vpop.trf.xlu0
        %v1458 = vpop.trf.xlu0
        %v1459 = vpop.trf.xlu0
        %v1460 = vpop.trf.xlu0
        %v1461 = vpop.trf.xlu0
        %v1462 = vpop.trf.xlu0
        %v1463 = vpop.trf.xlu0
        %1464 = vxpose.xlu0.b32.start [1/16] %v1333, 128
        %1465 = vxpose.xlu0.b32.cont [2/16] 0.0, 128
        %1466 = vxpose.xlu0.b32.cont [3/16] 0.0, 128
        %1467 = vxpose.xlu0.b32.cont [4/16] 0.0, 128
        %1468 = vxpose.xlu0.b32.cont [5/16] 0.0, 128
        %1469 = vxpose.xlu0.b32.cont [6/16] 0.0, 128
        %1470 = vxpose.xlu0.b32.cont [7/16] 0.0, 128
        %1471 = vxpose.xlu0.b32.cont [8/16] 0.0, 128
        %1472 = vxpose.xlu0.b32.cont [9/16] 0.0, 128
        %1473 = vxpose.xlu0.b32.cont [10/16] 0.0, 128
        %1474 = vxpose.xlu0.b32.cont [11/16] 0.0, 128
        %1475 = vxpose.xlu0.b32.cont [12/16] 0.0, 128
        %1476 = vxpose.xlu0.b32.cont [13/16] 0.0, 128
        %1477 = vxpose.xlu0.b32.cont [14/16] 0.0, 128
        %1478 = vxpose.xlu0.b32.cont [15/16] 0.0, 128
        %1479 = vxpose.xlu0.b32.end [16/16] 0.0, 128
        %v1480 = vpop.trf.xlu0
        %v1481 = vpop.trf.xlu0
        %v1482 = vpop.trf.xlu0
        %v1483 = vpop.trf.xlu0
        %v1484 = vpop.trf.xlu0
        %v1485 = vpop.trf.xlu0
        %v1486 = vpop.trf.xlu0
        %v1487 = vpop.trf.xlu0
        %v1488 = vpop.trf.xlu0
        %v1489 = vpop.trf.xlu0
        %v1490 = vpop.trf.xlu0
        %v1491 = vpop.trf.xlu0
        %v1492 = vpop.trf.xlu0
        %v1493 = vpop.trf.xlu0
        %v1494 = vpop.trf.xlu0
        %v1495 = vpop.trf.xlu0
        %1496 = vxpose.xlu0.b32.start [1/16] %v1336, 128
        %1497 = vxpose.xlu0.b32.cont [2/16] 0.0, 128
        %1498 = vxpose.xlu0.b32.cont [3/16] 0.0, 128
        %1499 = vxpose.xlu0.b32.cont [4/16] 0.0, 128
        %1500 = vxpose.xlu0.b32.cont [5/16] 0.0, 128
        %1501 = vxpose.xlu0.b32.cont [6/16] 0.0, 128
        %1502 = vxpose.xlu0.b32.cont [7/16] 0.0, 128
        %1503 = vxpose.xlu0.b32.cont [8/16] 0.0, 128
        %1504 = vxpose.xlu0.b32.cont [9/16] 0.0, 128
        %1505 = vxpose.xlu0.b32.cont [10/16] 0.0, 128
        %1506 = vxpose.xlu0.b32.cont [11/16] 0.0, 128
        %1507 = vxpose.xlu0.b32.cont [12/16] 0.0, 128
        %1508 = vxpose.xlu0.b32.cont [13/16] 0.0, 128
        %1509 = vxpose.xlu0.b32.cont [14/16] 0.0, 128
        %1510 = vxpose.xlu0.b32.cont [15/16] 0.0, 128
        %1511 = vxpose.xlu0.b32.end [16/16] 0.0, 128
        %v1512 = vpop.trf.xlu0
        %v1513 = vpop.trf.xlu0
        %v1514 = vpop.trf.xlu0
        %v1515 = vpop.trf.xlu0
        %v1516 = vpop.trf.xlu0
        %v1517 = vpop.trf.xlu0
        %v1518 = vpop.trf.xlu0
        %v1519 = vpop.trf.xlu0
        %v1520 = vpop.trf.xlu0
        %v1521 = vpop.trf.xlu0
        %v1522 = vpop.trf.xlu0
        %v1523 = vpop.trf.xlu0
        %v1524 = vpop.trf.xlu0
        %v1525 = vpop.trf.xlu0
        %v1526 = vpop.trf.xlu0
        %v1527 = vpop.trf.xlu0
        %1528 = vxpose.xlu0.b32.start [1/16] %v1339, 128
        %1529 = vxpose.xlu0.b32.cont [2/16] 0.0, 128
        %1530 = vxpose.xlu0.b32.cont [3/16] 0.0, 128
        %1531 = vxpose.xlu0.b32.cont [4/16] 0.0, 128
        %1532 = vxpose.xlu0.b32.cont [5/16] 0.0, 128
        %1533 = vxpose.xlu0.b32.cont [6/16] 0.0, 128
        %1534 = vxpose.xlu0.b32.cont [7/16] 0.0, 128
        %1535 = vxpose.xlu0.b32.cont [8/16] 0.0, 128
        %1536 = vxpose.xlu0.b32.cont [9/16] 0.0, 128
        %1537 = vxpose.xlu0.b32.cont [10/16] 0.0, 128
        %1538 = vxpose.xlu0.b32.cont [11/16] 0.0, 128
        %1539 = vxpose.xlu0.b32.cont [12/16] 0.0, 128
        %1540 = vxpose.xlu0.b32.cont [13/16] 0.0, 128
        %1541 = vxpose.xlu0.b32.cont [14/16] 0.0, 128
        %1542 = vxpose.xlu0.b32.cont [15/16] 0.0, 128
        %1543 = vxpose.xlu0.b32.end [16/16] 0.0, 128
        %v1544 = vpop.trf.xlu0
        %v1545 = vpop.trf.xlu0
        %v1546 = vpop.trf.xlu0
        %v1547 = vpop.trf.xlu0
        %v1548 = vpop.trf.xlu0
        %v1549 = vpop.trf.xlu0
        %v1550 = vpop.trf.xlu0
        %v1551 = vpop.trf.xlu0
        %v1552 = vpop.trf.xlu0
        %v1553 = vpop.trf.xlu0
        %v1554 = vpop.trf.xlu0
        %v1555 = vpop.trf.xlu0
        %v1556 = vpop.trf.xlu0
        %v1557 = vpop.trf.xlu0
        %v1558 = vpop.trf.xlu0
        %v1559 = vpop.trf.xlu0
        %vm1560 = vcmask 64512
        %v1561 = vsel %vm1560, %v1240, 0
        %1563 = vmatprep.subr.mxu0 0.0
        %1564 = vmatpush1.msra.mxu0 0.0
        %1565 = vmatprep.subr.mxu0 0.0
        %1566 = vmatpush1.msra.mxu0 0.0
        %1567 = vmatprep.subr.mxu0 0.0
        %1568 = vmatpush1.msra.mxu0 0.0
        %1569 = vmatprep.subr.mxu0 0.0
        %1570 = vmatpush1.msra.mxu0 0.0
        %1571 = vmatprep.subr.mxu0 0.0
        %1572 = vmatpush1.msra.mxu0 0.0
        %1573 = vmatprep.subr.mxu0 0.0
        %1574 = vmatpush1.msra.mxu0 0.0
        %1575 = vmatprep.subr.mxu0 0.0
        %1576 = vmatpush1.msra.mxu0 0.0
        %1577 = vmatprep.subr.mxu0 0.0
        %1578 = vmatpush1.msra.mxu0 0.0
        %1579 = vmatprep.subr.mxu0 0.0
        %1580 = vmatpush1.msra.mxu0 0.0
        %1581 = vmatprep.subr.mxu0 0.0
        %1582 = vmatpush1.msra.mxu0 0.0
        %1583 = vmatprep.subr.mxu0 0.0
        %1584 = vmatpush1.msra.mxu0 0.0
        %1585 = vmatprep.subr.mxu0 0.0
        %1586 = vmatpush1.msra.mxu0 0.0
        %1587 = vmatprep.subr.mxu0 0.0
        %1588 = vmatpush1.msra.mxu0 0.0
        %1589 = vmatprep.subr.mxu0 0.0
        %1590 = vmatpush1.msra.mxu0 0.0
        %1591 = vmatprep.subr.mxu0 0.0
        %1592 = vmatpush1.msra.mxu0 0.0
        %1593 = vmatprep.subr.mxu0 0.0
        %1594 = vmatpush1.msra.mxu0 %v1448
        %1595 = vmatprep.subr.mxu0 0.0
        %1596 = vmatpush2.msra.mxu0 0.0
        %1597 = vmatprep.subr.mxu0 0.0
        %1598 = vmatpush2.msra.mxu0 0.0
        %1599 = vmatprep.subr.mxu0 0.0
        %1600 = vmatpush2.msra.mxu0 0.0
        %1601 = vmatprep.subr.mxu0 0.0
        %1602 = vmatpush2.msra.mxu0 0.0
        %1603 = vmatprep.subr.mxu0 0.0
        %1604 = vmatpush2.msra.mxu0 0.0
        %1605 = vmatprep.subr.mxu0 0.0
        %1606 = vmatpush2.msra.mxu0 0.0
        %1607 = vmatprep.subr.mxu0 0.0
        %1608 = vmatpush2.msra.mxu0 0.0
        %1609 = vmatprep.subr.mxu0 0.0
        %1610 = vmatpush2.msra.mxu0 0.0
        %1611 = vmatprep.subr.mxu0 0.0
        %1612 = vmatpush2.msra.mxu0 0.0
        %1613 = vmatprep.subr.mxu0 0.0
        %1614 = vmatpush2.msra.mxu0 0.0
        %1615 = vmatprep.subr.mxu0 0.0
        %1616 = vmatpush2.msra.mxu0 0.0
        %1617 = vmatprep.subr.mxu0 0.0
        %1618 = vmatpush2.msra.mxu0 0.0
        %1619 = vmatprep.subr.mxu0 0.0
        %1620 = vmatpush2.msra.mxu0 0.0
        %1621 = vmatprep.subr.mxu0 0.0
        %1622 = vmatpush2.msra.mxu0 0.0
        %1623 = vmatprep.subr.mxu0 0.0
        %1624 = vmatpush2.msra.mxu0 0.0
        %1625 = vmatprep.subr.mxu0 0.0
        %1626 = vmatpush2.msra.mxu0 0.0
        %1627 = vmatprep.mubr.f32.mxu0 0.0
        %1628 = vmatmul.mubr.f32.gmra.mxu0 %v1561
        %v1629 = vpop.f32.mrf.mxu0
        %v1630 = vadd.f32 0.0, %v1629
        %v1631 = vpop.f32.mrf.mxu0
        %1632 = vdwg.mxu0
        %v1633 = vsel %vm1560, %v1245, 0
        %1635 = vmatprep.subr.mxu0 0.0
        %1636 = vmatpush1.msra.mxu0 0.0
        %1637 = vmatprep.subr.mxu0 0.0
        %1638 = vmatpush1.msra.mxu0 0.0
        %1639 = vmatprep.subr.mxu0 0.0
        %1640 = vmatpush1.msra.mxu0 0.0
        %1641 = vmatprep.subr.mxu0 0.0
        %1642 = vmatpush1.msra.mxu0 0.0
        %1643 = vmatprep.subr.mxu0 0.0
        %1644 = vmatpush1.msra.mxu0 0.0
        %1645 = vmatprep.subr.mxu0 0.0
        %1646 = vmatpush1.msra.mxu0 0.0
        %1647 = vmatprep.subr.mxu0 0.0
        %1648 = vmatpush1.msra.mxu0 0.0
        %1649 = vmatprep.subr.mxu0 0.0
        %1650 = vmatpush1.msra.mxu0 0.0
        %1651 = vmatprep.subr.mxu0 0.0
        %1652 = vmatpush1.msra.mxu0 0.0
        %1653 = vmatprep.subr.mxu0 0.0
        %1654 = vmatpush1.msra.mxu0 0.0
        %1655 = vmatprep.subr.mxu0 0.0
        %1656 = vmatpush1.msra.mxu0 0.0
        %1657 = vmatprep.subr.mxu0 0.0
        %1658 = vmatpush1.msra.mxu0 0.0
        %1659 = vmatprep.subr.mxu0 0.0
        %1660 = vmatpush1.msra.mxu0 0.0
        %1661 = vmatprep.subr.mxu0 0.0
        %1662 = vmatpush1.msra.mxu0 0.0
        %1663 = vmatprep.subr.mxu0 0.0
        %1664 = vmatpush1.msra.mxu0 0.0
        %1665 = vmatprep.subr.mxu0 0.0
        %1666 = vmatpush1.msra.mxu0 %v1480
        %1667 = vmatprep.subr.mxu0 0.0
        %1668 = vmatpush2.msra.mxu0 0.0
        %1669 = vmatprep.subr.mxu0 0.0
        %1670 = vmatpush2.msra.mxu0 0.0
        %1671 = vmatprep.subr.mxu0 0.0
        %1672 = vmatpush2.msra.mxu0 0.0
        %1673 = vmatprep.subr.mxu0 0.0
        %1674 = vmatpush2.msra.mxu0 0.0
        %1675 = vmatprep.subr.mxu0 0.0
        %1676 = vmatpush2.msra.mxu0 0.0
        %1677 = vmatprep.subr.mxu0 0.0
        %1678 = vmatpush2.msra.mxu0 0.0
        %1679 = vmatprep.subr.mxu0 0.0
        %1680 = vmatpush2.msra.mxu0 0.0
        %1681 = vmatprep.subr.mxu0 0.0
        %1682 = vmatpush2.msra.mxu0 0.0
        %1683 = vmatprep.subr.mxu0 0.0
        %1684 = vmatpush2.msra.mxu0 0.0
        %1685 = vmatprep.subr.mxu0 0.0
        %1686 = vmatpush2.msra.mxu0 0.0
        %1687 = vmatprep.subr.mxu0 0.0
        %1688 = vmatpush2.msra.mxu0 0.0
        %1689 = vmatprep.subr.mxu0 0.0
        %1690 = vmatpush2.msra.mxu0 0.0
        %1691 = vmatprep.subr.mxu0 0.0
        %1692 = vmatpush2.msra.mxu0 0.0
        %1693 = vmatprep.subr.mxu0 0.0
        %1694 = vmatpush2.msra.mxu0 0.0
        %1695 = vmatprep.subr.mxu0 0.0
        %1696 = vmatpush2.msra.mxu0 0.0
        %1697 = vmatprep.subr.mxu0 0.0
        %1698 = vmatpush2.msra.mxu0 0.0
        %1699 = vmatprep.mubr.f32.mxu0 0.0
        %1700 = vmatmul.mubr.f32.gmra.mxu0 %v1633
        %v1701 = vpop.f32.mrf.mxu0
        %v1702 = vadd.f32 0.0, %v1701
        %v1703 = vpop.f32.mrf.mxu0
        %1704 = vdwg.mxu0
        %v1705 = vsel %vm1560, %v1247, 0
        %1707 = vmatprep.subr.mxu0 0.0
        %1708 = vmatpush1.msra.mxu0 0.0
        %1709 = vmatprep.subr.mxu0 0.0
        %1710 = vmatpush1.msra.mxu0 0.0
        %1711 = vmatprep.subr.mxu0 0.0
        %1712 = vmatpush1.msra.mxu0 0.0
        %1713 = vmatprep.subr.mxu0 0.0
        %1714 = vmatpush1.msra.mxu0 0.0
        %1715 = vmatprep.subr.mxu0 0.0
        %1716 = vmatpush1.msra.mxu0 0.0
        %1717 = vmatprep.subr.mxu0 0.0
        %1718 = vmatpush1.msra.mxu0 0.0
        %1719 = vmatprep.subr.mxu0 0.0
        %1720 = vmatpush1.msra.mxu0 0.0
        %1721 = vmatprep.subr.mxu0 0.0
        %1722 = vmatpush1.msra.mxu0 0.0
        %1723 = vmatprep.subr.mxu0 0.0
        %1724 = vmatpush1.msra.mxu0 0.0
        %1725 = vmatprep.subr.mxu0 0.0
        %1726 = vmatpush1.msra.mxu0 0.0
        %1727 = vmatprep.subr.mxu0 0.0
        %1728 = vmatpush1.msra.mxu0 0.0
        %1729 = vmatprep.subr.mxu0 0.0
        %1730 = vmatpush1.msra.mxu0 0.0
        %1731 = vmatprep.subr.mxu0 0.0
        %1732 = vmatpush1.msra.mxu0 0.0
        %1733 = vmatprep.subr.mxu0 0.0
        %1734 = vmatpush1.msra.mxu0 0.0
        %1735 = vmatprep.subr.mxu0 0.0
        %1736 = vmatpush1.msra.mxu0 0.0
        %1737 = vmatprep.subr.mxu0 0.0
        %1738 = vmatpush1.msra.mxu0 %v1512
        %1739 = vmatprep.subr.mxu0 0.0
        %1740 = vmatpush2.msra.mxu0 0.0
        %1741 = vmatprep.subr.mxu0 0.0
        %1742 = vmatpush2.msra.mxu0 0.0
        %1743 = vmatprep.subr.mxu0 0.0
        %1744 = vmatpush2.msra.mxu0 0.0
        %1745 = vmatprep.subr.mxu0 0.0
        %1746 = vmatpush2.msra.mxu0 0.0
        %1747 = vmatprep.subr.mxu0 0.0
        %1748 = vmatpush2.msra.mxu0 0.0
        %1749 = vmatprep.subr.mxu0 0.0
        %1750 = vmatpush2.msra.mxu0 0.0
        %1751 = vmatprep.subr.mxu0 0.0
        %1752 = vmatpush2.msra.mxu0 0.0
        %1753 = vmatprep.subr.mxu0 0.0
        %1754 = vmatpush2.msra.mxu0 0.0
        %1755 = vmatprep.subr.mxu0 0.0
        %1756 = vmatpush2.msra.mxu0 0.0
        %1757 = vmatprep.subr.mxu0 0.0
        %1758 = vmatpush2.msra.mxu0 0.0
        %1759 = vmatprep.subr.mxu0 0.0
        %1760 = vmatpush2.msra.mxu0 0.0
        %1761 = vmatprep.subr.mxu0 0.0
        %1762 = vmatpush2.msra.mxu0 0.0
        %1763 = vmatprep.subr.mxu0 0.0
        %1764 = vmatpush2.msra.mxu0 0.0
        %1765 = vmatprep.subr.mxu0 0.0
        %1766 = vmatpush2.msra.mxu0 0.0
        %1767 = vmatprep.subr.mxu0 0.0
        %1768 = vmatpush2.msra.mxu0 0.0
        %1769 = vmatprep.subr.mxu0 0.0
        %1770 = vmatpush2.msra.mxu0 0.0
        %1771 = vmatprep.mubr.f32.mxu0 0.0
        %1772 = vmatmul.mubr.f32.gmra.mxu0 %v1705
        %v1773 = vpop.f32.mrf.mxu0
        %v1774 = vadd.f32 0.0, %v1773
        %v1775 = vpop.f32.mrf.mxu0
        %1776 = vdwg.mxu0
        %v1777 = vsel %vm1560, %v1249, 0
        %1779 = vmatprep.subr.mxu0 0.0
        %1780 = vmatpush1.msra.mxu0 0.0
        %1781 = vmatprep.subr.mxu0 0.0
        %1782 = vmatpush1.msra.mxu0 0.0
        %1783 = vmatprep.subr.mxu0 0.0
        %1784 = vmatpush1.msra.mxu0 0.0
        %1785 = vmatprep.subr.mxu0 0.0
        %1786 = vmatpush1.msra.mxu0 0.0
        %1787 = vmatprep.subr.mxu0 0.0
        %1788 = vmatpush1.msra.mxu0 0.0
        %1789 = vmatprep.subr.mxu0 0.0
        %1790 = vmatpush1.msra.mxu0 0.0
        %1791 = vmatprep.subr.mxu0 0.0
        %1792 = vmatpush1.msra.mxu0 0.0
        %1793 = vmatprep.subr.mxu0 0.0
        %1794 = vmatpush1.msra.mxu0 0.0
        %1795 = vmatprep.subr.mxu0 0.0
        %1796 = vmatpush1.msra.mxu0 0.0
        %1797 = vmatprep.subr.mxu0 0.0
        %1798 = vmatpush1.msra.mxu0 0.0
        %1799 = vmatprep.subr.mxu0 0.0
        %1800 = vmatpush1.msra.mxu0 0.0
        %1801 = vmatprep.subr.mxu0 0.0
        %1802 = vmatpush1.msra.mxu0 0.0
        %1803 = vmatprep.subr.mxu0 0.0
        %1804 = vmatpush1.msra.mxu0 0.0
        %1805 = vmatprep.subr.mxu0 0.0
        %1806 = vmatpush1.msra.mxu0 0.0
        %1807 = vmatprep.subr.mxu0 0.0
        %1808 = vmatpush1.msra.mxu0 0.0
        %1809 = vmatprep.subr.mxu0 0.0
        %1810 = vmatpush1.msra.mxu0 %v1544
        %1811 = vmatprep.subr.mxu0 0.0
        %1812 = vmatpush2.msra.mxu0 0.0
        %1813 = vmatprep.subr.mxu0 0.0
        %1814 = vmatpush2.msra.mxu0 0.0
        %1815 = vmatprep.subr.mxu0 0.0
        %1816 = vmatpush2.msra.mxu0 0.0
        %1817 = vmatprep.subr.mxu0 0.0
        %1818 = vmatpush2.msra.mxu0 0.0
        %1819 = vmatprep.subr.mxu0 0.0
        %1820 = vmatpush2.msra.mxu0 0.0
        %1821 = vmatprep.subr.mxu0 0.0
        %1822 = vmatpush2.msra.mxu0 0.0
        %1823 = vmatprep.subr.mxu0 0.0
        %1824 = vmatpush2.msra.mxu0 0.0
        %1825 = vmatprep.subr.mxu0 0.0
        %1826 = vmatpush2.msra.mxu0 0.0
        %1827 = vmatprep.subr.mxu0 0.0
        %1828 = vmatpush2.msra.mxu0 0.0
        %1829 = vmatprep.subr.mxu0 0.0
        %1830 = vmatpush2.msra.mxu0 0.0
        %1831 = vmatprep.subr.mxu0 0.0
        %1832 = vmatpush2.msra.mxu0 0.0
        %1833 = vmatprep.subr.mxu0 0.0
        %1834 = vmatpush2.msra.mxu0 0.0
        %1835 = vmatprep.subr.mxu0 0.0
        %1836 = vmatpush2.msra.mxu0 0.0
        %1837 = vmatprep.subr.mxu0 0.0
        %1838 = vmatpush2.msra.mxu0 0.0
        %1839 = vmatprep.subr.mxu0 0.0
        %1840 = vmatpush2.msra.mxu0 0.0
        %1841 = vmatprep.subr.mxu0 0.0
        %1842 = vmatpush2.msra.mxu0 0.0
        %1843 = vmatprep.mubr.f32.mxu0 0.0
        %1844 = vmatmul.mubr.f32.gmra.mxu0 %v1777
        %v1845 = vpop.f32.mrf.mxu0
        %v1846 = vadd.f32 0.0, %v1845
        %v1847 = vpop.f32.mrf.mxu0
        %1848 = vdwg.mxu0
        %v1849 = vmul.f32 %v1630, 0.35355338
        %v1850 = vmul.f32 %v1702, 0.35355338
        %v1851 = vmul.f32 %v1774, 0.35355338
        %v1852 = vmul.f32 %v1846, 0.35355338
        %v1853 = vadd.f32 %v1849, %v1154
        %v1854 = vadd.f32 %v1850, %v1154
        %v1855 = vadd.f32 %v1851, %v1154
        %v1856 = vadd.f32 %v1852, %v1154
        %v1857 = vsel %vm1560, %v1853, -inf
        %1858 = vmax.xlane.f32.xlu0 %v1857
        %v1859 = vpop.xlane.xlu0 %1858
        %v1860 = vsel %vm1560, %v1854, -inf
        %1861 = vmax.xlane.f32.xlu0 %v1860
        %v1862 = vpop.xlane.xlu0 %1861
        %v1863 = vsel %vm1560, %v1855, -inf
        %1864 = vmax.xlane.f32.xlu0 %v1863
        %v1865 = vpop.xlane.xlu0 %1864
        %v1866 = vsel %vm1560, %v1856, -inf
        %1867 = vmax.xlane.f32.xlu0 %v1866
        %v1868 = vpop.xlane.xlu0 %1867
        %v1869 = vsub.f32 %v1853, %v1859
        %v1870 = vsub.f32 %v1854, %v1862
        %v1871 = vsub.f32 %v1855, %v1865
        %v1872 = vsub.f32 %v1856, %v1868
        %v1873 = vmul.f32 %v1869, 1.442695
        %v1874 = vpow.pop %v1873
        %v1875 = vmul.f32 %v1870, 1.442695
        %v1876 = vpow.pop %v1875
        %v1877 = vmul.f32 %v1871, 1.442695
        %v1878 = vpow.pop %v1877
        %v1879 = vmul.f32 %v1872, 1.442695
        %v1880 = vpow.pop %v1879
        %v1881 = vsel %vm1560, %v1874, 0.0
        %1882 = vadd.xlane.f32.xlu0 %v1881
        %v1883 = vpop.xlane.xlu0 %1882
        %v1884 = vsel %vm1560, %v1876, 0.0
        %1885 = vadd.xlane.f32.xlu0 %v1884
        %v1886 = vpop.xlane.xlu0 %1885
        %v1887 = vsel %vm1560, %v1878, 0.0
        %1888 = vadd.xlane.f32.xlu0 %v1887
        %v1889 = vpop.xlane.xlu0 %1888
        %v1890 = vsel %vm1560, %v1880, 0.0
        %1891 = vadd.xlane.f32.xlu0 %v1890
        %v1892 = vpop.xlane.xlu0 %1891
        %v1893 = vrcp.pop %v1883
        %v1894 = vrcp.pop %v1886
        %v1895 = vrcp.pop %v1889
        %v1896 = vrcp.pop %v1892
        %v1897 = vmul.f32 %v1874, %v1893
        %v1898 = vmul.f32 %v1876, %v1894
        %v1899 = vmul.f32 %v1878, %v1895
        %v1900 = vmul.f32 %v1880, %v1896
        %1901 = vxpose.xlu0.b32.start [1/16] %v1419, 128
        %1902 = vxpose.xlu0.b32.cont [2/16] 0.0, 128
        %1903 = vxpose.xlu0.b32.cont [3/16] 0.0, 128
        %1904 = vxpose.xlu0.b32.cont [4/16] 0.0, 128
        %1905 = vxpose.xlu0.b32.cont [5/16] 0.0, 128
        %1906 = vxpose.xlu0.b32.cont [6/16] 0.0, 128
        %1907 = vxpose.xlu0.b32.cont [7/16] 0.0, 128
        %1908 = vxpose.xlu0.b32.cont [8/16] 0.0, 128
        %1909 = vxpose.xlu0.b32.cont [9/16] 0.0, 128
        %1910 = vxpose.xlu0.b32.cont [10/16] 0.0, 128
        %1911 = vxpose.xlu0.b32.cont [11/16] 0.0, 128
        %1912 = vxpose.xlu0.b32.cont [12/16] 0.0, 128
        %1913 = vxpose.xlu0.b32.cont [13/16] 0.0, 128
        %1914 = vxpose.xlu0.b32.cont [14/16] 0.0, 128
        %1915 = vxpose.xlu0.b32.cont [15/16] 0.0, 128
        %1916 = vxpose.xlu0.b32.end [16/16] 0.0, 128
        %v1917 = vpop.trf.xlu0
        %v1918 = vpop.trf.xlu0
        %v1919 = vpop.trf.xlu0
        %v1920 = vpop.trf.xlu0
        %v1921 = vpop.trf.xlu0
        %v1922 = vpop.trf.xlu0
        %v1923 = vpop.trf.xlu0
        %v1924 = vpop.trf.xlu0
        %v1925 = vpop.trf.xlu0
        %v1926 = vpop.trf.xlu0
        %v1927 = vpop.trf.xlu0
        %v1928 = vpop.trf.xlu0
        %v1929 = vpop.trf.xlu0
        %v1930 = vpop.trf.xlu0
        %v1931 = vpop.trf.xlu0
        %v1932 = vpop.trf.xlu0
        %1933 = vxpose.xlu0.b32.start [1/16] %v1424, 128
        %1934 = vxpose.xlu0.b32.cont [2/16] 0.0, 128
        %1935 = vxpose.xlu0.b32.cont [3/16] 0.0, 128
        %1936 = vxpose.xlu0.b32.cont [4/16] 0.0, 128
        %1937 = vxpose.xlu0.b32.cont [5/16] 0.0, 128
        %1938 = vxpose.xlu0.b32.cont [6/16] 0.0, 128
        %1939 = vxpose.xlu0.b32.cont [7/16] 0.0, 128
        %1940 = vxpose.xlu0.b32.cont [8/16] 0.0, 128
        %1941 = vxpose.xlu0.b32.cont [9/16] 0.0, 128
        %1942 = vxpose.xlu0.b32.cont [10/16] 0.0, 128
        %1943 = vxpose.xlu0.b32.cont [11/16] 0.0, 128
        %1944 = vxpose.xlu0.b32.cont [12/16] 0.0, 128
        %1945 = vxpose.xlu0.b32.cont [13/16] 0.0, 128
        %1946 = vxpose.xlu0.b32.cont [14/16] 0.0, 128
        %1947 = vxpose.xlu0.b32.cont [15/16] 0.0, 128
        %1948 = vxpose.xlu0.b32.end [16/16] 0.0, 128
        %v1949 = vpop.trf.xlu0
        %v1950 = vpop.trf.xlu0
        %v1951 = vpop.trf.xlu0
        %v1952 = vpop.trf.xlu0
        %v1953 = vpop.trf.xlu0
        %v1954 = vpop.trf.xlu0
        %v1955 = vpop.trf.xlu0
        %v1956 = vpop.trf.xlu0
        %v1957 = vpop.trf.xlu0
        %v1958 = vpop.trf.xlu0
        %v1959 = vpop.trf.xlu0
        %v1960 = vpop.trf.xlu0
        %v1961 = vpop.trf.xlu0
        %v1962 = vpop.trf.xlu0
        %v1963 = vpop.trf.xlu0
        %v1964 = vpop.trf.xlu0
        %1965 = vxpose.xlu0.b32.start [1/16] %v1427, 128
        %1966 = vxpose.xlu0.b32.cont [2/16] 0.0, 128
        %1967 = vxpose.xlu0.b32.cont [3/16] 0.0, 128
        %1968 = vxpose.xlu0.b32.cont [4/16] 0.0, 128
        %1969 = vxpose.xlu0.b32.cont [5/16] 0.0, 128
        %1970 = vxpose.xlu0.b32.cont [6/16] 0.0, 128
        %1971 = vxpose.xlu0.b32.cont [7/16] 0.0, 128
        %1972 = vxpose.xlu0.b32.cont [8/16] 0.0, 128
        %1973 = vxpose.xlu0.b32.cont [9/16] 0.0, 128
        %1974 = vxpose.xlu0.b32.cont [10/16] 0.0, 128
        %1975 = vxpose.xlu0.b32.cont [11/16] 0.0, 128
        %1976 = vxpose.xlu0.b32.cont [12/16] 0.0, 128
        %1977 = vxpose.xlu0.b32.cont [13/16] 0.0, 128
        %1978 = vxpose.xlu0.b32.cont [14/16] 0.0, 128
        %1979 = vxpose.xlu0.b32.cont [15/16] 0.0, 128
        %1980 = vxpose.xlu0.b32.end [16/16] 0.0, 128
        %v1981 = vpop.trf.xlu0
        %v1982 = vpop.trf.xlu0
        %v1983 = vpop.trf.xlu0
        %v1984 = vpop.trf.xlu0
        %v1985 = vpop.trf.xlu0
        %v1986 = vpop.trf.xlu0
        %v1987 = vpop.trf.xlu0
        %v1988 = vpop.trf.xlu0
        %v1989 = vpop.trf.xlu0
        %v1990 = vpop.trf.xlu0
        %v1991 = vpop.trf.xlu0
        %v1992 = vpop.trf.xlu0
        %v1993 = vpop.trf.xlu0
        %v1994 = vpop.trf.xlu0
        %v1995 = vpop.trf.xlu0
        %v1996 = vpop.trf.xlu0
        %1997 = vxpose.xlu0.b32.start [1/16] %v1430, 128
        %1998 = vxpose.xlu0.b32.cont [2/16] 0.0, 128
        %1999 = vxpose.xlu0.b32.cont [3/16] 0.0, 128
        %2000 = vxpose.xlu0.b32.cont [4/16] 0.0, 128
        %2001 = vxpose.xlu0.b32.cont [5/16] 0.0, 128
        %2002 = vxpose.xlu0.b32.cont [6/16] 0.0, 128
        %2003 = vxpose.xlu0.b32.cont [7/16] 0.0, 128
        %2004 = vxpose.xlu0.b32.cont [8/16] 0.0, 128
        %2005 = vxpose.xlu0.b32.cont [9/16] 0.0, 128
        %2006 = vxpose.xlu0.b32.cont [10/16] 0.0, 128
        %2007 = vxpose.xlu0.b32.cont [11/16] 0.0, 128
        %2008 = vxpose.xlu0.b32.cont [12/16] 0.0, 128
        %2009 = vxpose.xlu0.b32.cont [13/16] 0.0, 128
        %2010 = vxpose.xlu0.b32.cont [14/16] 0.0, 128
        %2011 = vxpose.xlu0.b32.cont [15/16] 0.0, 128
        %2012 = vxpose.xlu0.b32.end [16/16] 0.0, 128
        %v2013 = vpop.trf.xlu0
        %v2014 = vpop.trf.xlu0
        %v2015 = vpop.trf.xlu0
        %v2016 = vpop.trf.xlu0
        %v2017 = vpop.trf.xlu0
        %v2018 = vpop.trf.xlu0
        %v2019 = vpop.trf.xlu0
        %v2020 = vpop.trf.xlu0
        %v2021 = vpop.trf.xlu0
        %v2022 = vpop.trf.xlu0
        %v2023 = vpop.trf.xlu0
        %v2024 = vpop.trf.xlu0
        %v2025 = vpop.trf.xlu0
        %v2026 = vpop.trf.xlu0
        %v2027 = vpop.trf.xlu0
        %v2028 = vpop.trf.xlu0
        %v2030 = vsel %vm1560, %v1917, 0
        %v2033 = vsel %vm1560, %v1897, 0
        %2035 = vmatprep.subr.mxu0 0.0
        %2036 = vmatpush1.xpose.msra.mxu0 0.0
        %2037 = vmatprep.subr.mxu0 0.0
        %2038 = vmatpush1.xpose.msra.mxu0 0.0
        %2039 = vmatprep.subr.mxu0 0.0
        %2040 = vmatpush1.xpose.msra.mxu0 0.0
        %2041 = vmatprep.subr.mxu0 0.0
        %2042 = vmatpush1.xpose.msra.mxu0 0.0
        %2043 = vmatprep.subr.mxu0 0.0
        %2044 = vmatpush1.xpose.msra.mxu0 0.0
        %2045 = vmatprep.subr.mxu0 0.0
        %2046 = vmatpush1.xpose.msra.mxu0 0.0
        %2047 = vmatprep.subr.mxu0 0.0
        %2048 = vmatpush1.xpose.msra.mxu0 0.0
        %2049 = vmatprep.subr.mxu0 0.0
        %2050 = vmatpush1.xpose.msra.mxu0 0.0
        %2051 = vmatprep.subr.mxu0 0.0
        %2052 = vmatpush1.xpose.msra.mxu0 0.0
        %2053 = vmatprep.subr.mxu0 0.0
        %2054 = vmatpush1.xpose.msra.mxu0 0.0
        %2055 = vmatprep.subr.mxu0 0.0
        %2056 = vmatpush1.xpose.msra.mxu0 0.0
        %2057 = vmatprep.subr.mxu0 0.0
        %2058 = vmatpush1.xpose.msra.mxu0 0.0
        %2059 = vmatprep.subr.mxu0 0.0
        %2060 = vmatpush1.xpose.msra.mxu0 0.0
        %2061 = vmatprep.subr.mxu0 0.0
        %2062 = vmatpush1.xpose.msra.mxu0 0.0
        %2063 = vmatprep.subr.mxu0 0.0
        %2064 = vmatpush1.xpose.msra.mxu0 0.0
        %2065 = vmatprep.subr.mxu0 0.0
        %2066 = vmatpush1.xpose.msra.mxu0 %v2033
        %2067 = vmatprep.subr.mxu0 0.0
        %2068 = vmatpush2.xpose.msra.mxu0 0.0
        %2069 = vmatprep.subr.mxu0 0.0
        %2070 = vmatpush2.xpose.msra.mxu0 0.0
        %2071 = vmatprep.subr.mxu0 0.0
        %2072 = vmatpush2.xpose.msra.mxu0 0.0
        %2073 = vmatprep.subr.mxu0 0.0
        %2074 = vmatpush2.xpose.msra.mxu0 0.0
        %2075 = vmatprep.subr.mxu0 0.0
        %2076 = vmatpush2.xpose.msra.mxu0 0.0
        %2077 = vmatprep.subr.mxu0 0.0
        %2078 = vmatpush2.xpose.msra.mxu0 0.0
        %2079 = vmatprep.subr.mxu0 0.0
        %2080 = vmatpush2.xpose.msra.mxu0 0.0
        %2081 = vmatprep.subr.mxu0 0.0
        %2082 = vmatpush2.xpose.msra.mxu0 0.0
        %2083 = vmatprep.subr.mxu0 0.0
        %2084 = vmatpush2.xpose.msra.mxu0 0.0
        %2085 = vmatprep.subr.mxu0 0.0
        %2086 = vmatpush2.xpose.msra.mxu0 0.0
        %2087 = vmatprep.subr.mxu0 0.0
        %2088 = vmatpush2.xpose.msra.mxu0 0.0
        %2089 = vmatprep.subr.mxu0 0.0
        %2090 = vmatpush2.xpose.msra.mxu0 0.0
        %2091 = vmatprep.subr.mxu0 0.0
        %2092 = vmatpush2.xpose.msra.mxu0 0.0
        %2093 = vmatprep.subr.mxu0 0.0
        %2094 = vmatpush2.xpose.msra.mxu0 0.0
        %2095 = vmatprep.subr.mxu0 0.0
        %2096 = vmatpush2.xpose.msra.mxu0 0.0
        %2097 = vmatprep.subr.mxu0 0.0
        %2098 = vmatpush2.xpose.msra.mxu0 0.0
        %2099 = vmatprep.mubr.f32.mxu0 0.0
        %2100 = vmatmul.mubr.f32.gmra.mxu0 %v2030
        %v2101 = vpop.f32.mrf.mxu0
        %v2102 = vadd.f32 0.0, %v2101
        %v2103 = vpop.f32.mrf.mxu0
        %2104 = vdwg.mxu0
        %v2106 = vsel %vm1560, %v1949, 0
        %v2109 = vsel %vm1560, %v1898, 0
        %2111 = vmatprep.subr.mxu0 0.0
        %2112 = vmatpush1.xpose.msra.mxu0 0.0
        %2113 = vmatprep.subr.mxu0 0.0
        %2114 = vmatpush1.xpose.msra.mxu0 0.0
        %2115 = vmatprep.subr.mxu0 0.0
        %2116 = vmatpush1.xpose.msra.mxu0 0.0
        %2117 = vmatprep.subr.mxu0 0.0
        %2118 = vmatpush1.xpose.msra.mxu0 0.0
        %2119 = vmatprep.subr.mxu0 0.0
        %2120 = vmatpush1.xpose.msra.mxu0 0.0
        %2121 = vmatprep.subr.mxu0 0.0
        %2122 = vmatpush1.xpose.msra.mxu0 0.0
        %2123 = vmatprep.subr.mxu0 0.0
        %2124 = vmatpush1.xpose.msra.mxu0 0.0
        %2125 = vmatprep.subr.mxu0 0.0
        %2126 = vmatpush1.xpose.msra.mxu0 0.0
        %2127 = vmatprep.subr.mxu0 0.0
        %2128 = vmatpush1.xpose.msra.mxu0 0.0
        %2129 = vmatprep.subr.mxu0 0.0
        %2130 = vmatpush1.xpose.msra.mxu0 0.0
        %2131 = vmatprep.subr.mxu0 0.0
        %2132 = vmatpush1.xpose.msra.mxu0 0.0
        %2133 = vmatprep.subr.mxu0 0.0
        %2134 = vmatpush1.xpose.msra.mxu0 0.0
        %2135 = vmatprep.subr.mxu0 0.0
        %2136 = vmatpush1.xpose.msra.mxu0 0.0
        %2137 = vmatprep.subr.mxu0 0.0
        %2138 = vmatpush1.xpose.msra.mxu0 0.0
        %2139 = vmatprep.subr.mxu0 0.0
        %2140 = vmatpush1.xpose.msra.mxu0 0.0
        %2141 = vmatprep.subr.mxu0 0.0
        %2142 = vmatpush1.xpose.msra.mxu0 %v2109
        %2143 = vmatprep.subr.mxu0 0.0
        %2144 = vmatpush2.xpose.msra.mxu0 0.0
        %2145 = vmatprep.subr.mxu0 0.0
        %2146 = vmatpush2.xpose.msra.mxu0 0.0
        %2147 = vmatprep.subr.mxu0 0.0
        %2148 = vmatpush2.xpose.msra.mxu0 0.0
        %2149 = vmatprep.subr.mxu0 0.0
        %2150 = vmatpush2.xpose.msra.mxu0 0.0
        %2151 = vmatprep.subr.mxu0 0.0
        %2152 = vmatpush2.xpose.msra.mxu0 0.0
        %2153 = vmatprep.subr.mxu0 0.0
        %2154 = vmatpush2.xpose.msra.mxu0 0.0
        %2155 = vmatprep.subr.mxu0 0.0
        %2156 = vmatpush2.xpose.msra.mxu0 0.0
        %2157 = vmatprep.subr.mxu0 0.0
        %2158 = vmatpush2.xpose.msra.mxu0 0.0
        %2159 = vmatprep.subr.mxu0 0.0
        %2160 = vmatpush2.xpose.msra.mxu0 0.0
        %2161 = vmatprep.subr.mxu0 0.0
        %2162 = vmatpush2.xpose.msra.mxu0 0.0
        %2163 = vmatprep.subr.mxu0 0.0
        %2164 = vmatpush2.xpose.msra.mxu0 0.0
        %2165 = vmatprep.subr.mxu0 0.0
        %2166 = vmatpush2.xpose.msra.mxu0 0.0
        %2167 = vmatprep.subr.mxu0 0.0
        %2168 = vmatpush2.xpose.msra.mxu0 0.0
        %2169 = vmatprep.subr.mxu0 0.0
        %2170 = vmatpush2.xpose.msra.mxu0 0.0
        %2171 = vmatprep.subr.mxu0 0.0
        %2172 = vmatpush2.xpose.msra.mxu0 0.0
        %2173 = vmatprep.subr.mxu0 0.0
        %2174 = vmatpush2.xpose.msra.mxu0 0.0
        %2175 = vmatprep.mubr.f32.mxu0 0.0
        %2176 = vmatmul.mubr.f32.gmra.mxu0 %v2106
        %v2177 = vpop.f32.mrf.mxu0
        %v2178 = vadd.f32 0.0, %v2177
        %v2179 = vpop.f32.mrf.mxu0
        %2180 = vdwg.mxu0
        %v2182 = vsel %vm1560, %v1981, 0
        %v2185 = vsel %vm1560, %v1899, 0
        %2187 = vmatprep.subr.mxu0 0.0
        %2188 = vmatpush1.xpose.msra.mxu0 0.0
        %2189 = vmatprep.subr.mxu0 0.0
        %2190 = vmatpush1.xpose.msra.mxu0 0.0
        %2191 = vmatprep.subr.mxu0 0.0
        %2192 = vmatpush1.xpose.msra.mxu0 0.0
        %2193 = vmatprep.subr.mxu0 0.0
        %2194 = vmatpush1.xpose.msra.mxu0 0.0
        %2195 = vmatprep.subr.mxu0 0.0
        %2196 = vmatpush1.xpose.msra.mxu0 0.0
        %2197 = vmatprep.subr.mxu0 0.0
        %2198 = vmatpush1.xpose.msra.mxu0 0.0
        %2199 = vmatprep.subr.mxu0 0.0
        %2200 = vmatpush1.xpose.msra.mxu0 0.0
        %2201 = vmatprep.subr.mxu0 0.0
        %2202 = vmatpush1.xpose.msra.mxu0 0.0
        %2203 = vmatprep.subr.mxu0 0.0
        %2204 = vmatpush1.xpose.msra.mxu0 0.0
        %2205 = vmatprep.subr.mxu0 0.0
        %2206 = vmatpush1.xpose.msra.mxu0 0.0
        %2207 = vmatprep.subr.mxu0 0.0
        %2208 = vmatpush1.xpose.msra.mxu0 0.0
        %2209 = vmatprep.subr.mxu0 0.0
        %2210 = vmatpush1.xpose.msra.mxu0 0.0
        %2211 = vmatprep.subr.mxu0 0.0
        %2212 = vmatpush1.xpose.msra.mxu0 0.0
        %2213 = vmatprep.subr.mxu0 0.0
        %2214 = vmatpush1.xpose.msra.mxu0 0.0
        %2215 = vmatprep.subr.mxu0 0.0
        %2216 = vmatpush1.xpose.msra.mxu0 0.0
        %2217 = vmatprep.subr.mxu0 0.0
        %2218 = vmatpush1.xpose.msra.mxu0 %v2185
        %2219 = vmatprep.subr.mxu0 0.0
        %2220 = vmatpush2.xpose.msra.mxu0 0.0
        %2221 = vmatprep.subr.mxu0 0.0
        %2222 = vmatpush2.xpose.msra.mxu0 0.0
        %2223 = vmatprep.subr.mxu0 0.0
        %2224 = vmatpush2.xpose.msra.mxu0 0.0
        %2225 = vmatprep.subr.mxu0 0.0
        %2226 = vmatpush2.xpose.msra.mxu0 0.0
        %2227 = vmatprep.subr.mxu0 0.0
        %2228 = vmatpush2.xpose.msra.mxu0 0.0
        %2229 = vmatprep.subr.mxu0 0.0
        %2230 = vmatpush2.xpose.msra.mxu0 0.0
        %2231 = vmatprep.subr.mxu0 0.0
        %2232 = vmatpush2.xpose.msra.mxu0 0.0
        %2233 = vmatprep.subr.mxu0 0.0
        %2234 = vmatpush2.xpose.msra.mxu0 0.0
        %2235 = vmatprep.subr.mxu0 0.0
        %2236 = vmatpush2.xpose.msra.mxu0 0.0
        %2237 = vmatprep.subr.mxu0 0.0
        %2238 = vmatpush2.xpose.msra.mxu0 0.0
        %2239 = vmatprep.subr.mxu0 0.0
        %2240 = vmatpush2.xpose.msra.mxu0 0.0
        %2241 = vmatprep.subr.mxu0 0.0
        %2242 = vmatpush2.xpose.msra.mxu0 0.0
        %2243 = vmatprep.subr.mxu0 0.0
        %2244 = vmatpush2.xpose.msra.mxu0 0.0
        %2245 = vmatprep.subr.mxu0 0.0
        %2246 = vmatpush2.xpose.msra.mxu0 0.0
        %2247 = vmatprep.subr.mxu0 0.0
        %2248 = vmatpush2.xpose.msra.mxu0 0.0
        %2249 = vmatprep.subr.mxu0 0.0
        %2250 = vmatpush2.xpose.msra.mxu0 0.0
        %2251 = vmatprep.mubr.f32.mxu0 0.0
        %2252 = vmatmul.mubr.f32.gmra.mxu0 %v2182
        %v2253 = vpop.f32.mrf.mxu0
        %v2254 = vadd.f32 0.0, %v2253
        %v2255 = vpop.f32.mrf.mxu0
        %2256 = vdwg.mxu0
        %v2258 = vsel %vm1560, %v2013, 0
        %v2261 = vsel %vm1560, %v1900, 0
        %2263 = vmatprep.subr.mxu0 0.0
        %2264 = vmatpush1.xpose.msra.mxu0 0.0
        %2265 = vmatprep.subr.mxu0 0.0
        %2266 = vmatpush1.xpose.msra.mxu0 0.0
        %2267 = vmatprep.subr.mxu0 0.0
        %2268 = vmatpush1.xpose.msra.mxu0 0.0
        %2269 = vmatprep.subr.mxu0 0.0
        %2270 = vmatpush1.xpose.msra.mxu0 0.0
        %2271 = vmatprep.subr.mxu0 0.0
        %2272 = vmatpush1.xpose.msra.mxu0 0.0
        %2273 = vmatprep.subr.mxu0 0.0
        %2274 = vmatpush1.xpose.msra.mxu0 0.0
        %2275 = vmatprep.subr.mxu0 0.0
        %2276 = vmatpush1.xpose.msra.mxu0 0.0
        %2277 = vmatprep.subr.mxu0 0.0
        %2278 = vmatpush1.xpose.msra.mxu0 0.0
        %2279 = vmatprep.subr.mxu0 0.0
        %2280 = vmatpush1.xpose.msra.mxu0 0.0
        %2281 = vmatprep.subr.mxu0 0.0
        %2282 = vmatpush1.xpose.msra.mxu0 0.0
        %2283 = vmatprep.subr.mxu0 0.0
        %2284 = vmatpush1.xpose.msra.mxu0 0.0
        %2285 = vmatprep.subr.mxu0 0.0
        %2286 = vmatpush1.xpose.msra.mxu0 0.0
        %2287 = vmatprep.subr.mxu0 0.0
        %2288 = vmatpush1.xpose.msra.mxu0 0.0
        %2289 = vmatprep.subr.mxu0 0.0
        %2290 = vmatpush1.xpose.msra.mxu0 0.0
        %2291 = vmatprep.subr.mxu0 0.0
        %2292 = vmatpush1.xpose.msra.mxu0 0.0
        %2293 = vmatprep.subr.mxu0 0.0
        %2294 = vmatpush1.xpose.msra.mxu0 %v2261
        %2295 = vmatprep.subr.mxu0 0.0
        %2296 = vmatpush2.xpose.msra.mxu0 0.0
        %2297 = vmatprep.subr.mxu0 0.0
        %2298 = vmatpush2.xpose.msra.mxu0 0.0
        %2299 = vmatprep.subr.mxu0 0.0
        %2300 = vmatpush2.xpose.msra.mxu0 0.0
        %2301 = vmatprep.subr.mxu0 0.0
        %2302 = vmatpush2.xpose.msra.mxu0 0.0
        %2303 = vmatprep.subr.mxu0 0.0
        %2304 = vmatpush2.xpose.msra.mxu0 0.0
        %2305 = vmatprep.subr.mxu0 0.0
        %2306 = vmatpush2.xpose.msra.mxu0 0.0
        %2307 = vmatprep.subr.mxu0 0.0
        %2308 = vmatpush2.xpose.msra.mxu0 0.0
        %2309 = vmatprep.subr.mxu0 0.0
        %2310 = vmatpush2.xpose.msra.mxu0 0.0
        %2311 = vmatprep.subr.mxu0 0.0
        %2312 = vmatpush2.xpose.msra.mxu0 0.0
        %2313 = vmatprep.subr.mxu0 0.0
        %2314 = vmatpush2.xpose.msra.mxu0 0.0
        %2315 = vmatprep.subr.mxu0 0.0
        %2316 = vmatpush2.xpose.msra.mxu0 0.0
        %2317 = vmatprep.subr.mxu0 0.0
        %2318 = vmatpush2.xpose.msra.mxu0 0.0
        %2319 = vmatprep.subr.mxu0 0.0
        %2320 = vmatpush2.xpose.msra.mxu0 0.0
        %2321 = vmatprep.subr.mxu0 0.0
        %2322 = vmatpush2.xpose.msra.mxu0 0.0
        %2323 = vmatprep.subr.mxu0 0.0
        %2324 = vmatpush2.xpose.msra.mxu0 0.0
        %2325 = vmatprep.subr.mxu0 0.0
        %2326 = vmatpush2.xpose.msra.mxu0 0.0
        %2327 = vmatprep.mubr.f32.mxu0 0.0
        %2328 = vmatmul.mubr.f32.gmra.mxu0 %v2258
        %v2329 = vpop.f32.mrf.mxu0
        %v2330 = vadd.f32 0.0, %v2329
        %v2331 = vpop.f32.mrf.mxu0
        %2332 = vdwg.mxu0
        %2333 = vxpose.xlu0.b32.start [1/16] %v2102, 128
        %2334 = vxpose.xlu0.b32.cont [2/16] 0.0, 128
        %2335 = vxpose.xlu0.b32.cont [3/16] 0.0, 128
        %2336 = vxpose.xlu0.b32.cont [4/16] 0.0, 128
        %2337 = vxpose.xlu0.b32.cont [5/16] 0.0, 128
        %2338 = vxpose.xlu0.b32.cont [6/16] 0.0, 128
        %2339 = vxpose.xlu0.b32.cont [7/16] 0.0, 128
        %2340 = vxpose.xlu0.b32.cont [8/16] 0.0, 128
        %2341 = vxpose.xlu0.b32.cont [9/16] 0.0, 128
        %2342 = vxpose.xlu0.b32.cont [10/16] 0.0, 128
        %2343 = vxpose.xlu0.b32.cont [11/16] 0.0, 128
        %2344 = vxpose.xlu0.b32.cont [12/16] 0.0, 128
        %2345 = vxpose.xlu0.b32.cont [13/16] 0.0, 128
        %2346 = vxpose.xlu0.b32.cont [14/16] 0.0, 128
        %2347 = vxpose.xlu0.b32.cont [15/16] 0.0, 128
        %2348 = vxpose.xlu0.b32.end [16/16] 0.0, 128
        %v2349 = vpop.trf.xlu0
        %v2350 = vpop.trf.xlu0
        %v2351 = vpop.trf.xlu0
        %v2352 = vpop.trf.xlu0
        %v2353 = vpop.trf.xlu0
        %v2354 = vpop.trf.xlu0
        %v2355 = vpop.trf.xlu0
        %v2356 = vpop.trf.xlu0
        %v2357 = vpop.trf.xlu0
        %v2358 = vpop.trf.xlu0
        %v2359 = vpop.trf.xlu0
        %v2360 = vpop.trf.xlu0
        %v2361 = vpop.trf.xlu0
        %v2362 = vpop.trf.xlu0
        %v2363 = vpop.trf.xlu0
        %v2364 = vpop.trf.xlu0
        %2365 = vxpose.xlu0.b32.start [1/16] %v2178, 128
        %2366 = vxpose.xlu0.b32.cont [2/16] 0.0, 128
        %2367 = vxpose.xlu0.b32.cont [3/16] 0.0, 128
        %2368 = vxpose.xlu0.b32.cont [4/16] 0.0, 128
        %2369 = vxpose.xlu0.b32.cont [5/16] 0.0, 128
        %2370 = vxpose.xlu0.b32.cont [6/16] 0.0, 128
        %2371 = vxpose.xlu0.b32.cont [7/16] 0.0, 128
        %2372 = vxpose.xlu0.b32.cont [8/16] 0.0, 128
        %2373 = vxpose.xlu0.b32.cont [9/16] 0.0, 128
        %2374 = vxpose.xlu0.b32.cont [10/16] 0.0, 128
        %2375 = vxpose.xlu0.b32.cont [11/16] 0.0, 128
        %2376 = vxpose.xlu0.b32.cont [12/16] 0.0, 128
        %2377 = vxpose.xlu0.b32.cont [13/16] 0.0, 128
        %2378 = vxpose.xlu0.b32.cont [14/16] 0.0, 128
        %2379 = vxpose.xlu0.b32.cont [15/16] 0.0, 128
        %2380 = vxpose.xlu0.b32.end [16/16] 0.0, 128
        %v2381 = vpop.trf.xlu0
        %v2382 = vpop.trf.xlu0
        %v2383 = vpop.trf.xlu0
        %v2384 = vpop.trf.xlu0
        %v2385 = vpop.trf.xlu0
        %v2386 = vpop.trf.xlu0
        %v2387 = vpop.trf.xlu0
        %v2388 = vpop.trf.xlu0
        %v2389 = vpop.trf.xlu0
        %v2390 = vpop.trf.xlu0
        %v2391 = vpop.trf.xlu0
        %v2392 = vpop.trf.xlu0
        %v2393 = vpop.trf.xlu0
        %v2394 = vpop.trf.xlu0
        %v2395 = vpop.trf.xlu0
        %v2396 = vpop.trf.xlu0
        %2397 = vxpose.xlu0.b32.start [1/16] %v2254, 128
        %2398 = vxpose.xlu0.b32.cont [2/16] 0.0, 128
        %2399 = vxpose.xlu0.b32.cont [3/16] 0.0, 128
        %2400 = vxpose.xlu0.b32.cont [4/16] 0.0, 128
        %2401 = vxpose.xlu0.b32.cont [5/16] 0.0, 128
        %2402 = vxpose.xlu0.b32.cont [6/16] 0.0, 128
        %2403 = vxpose.xlu0.b32.cont [7/16] 0.0, 128
        %2404 = vxpose.xlu0.b32.cont [8/16] 0.0, 128
        %2405 = vxpose.xlu0.b32.cont [9/16] 0.0, 128
        %2406 = vxpose.xlu0.b32.cont [10/16] 0.0, 128
        %2407 = vxpose.xlu0.b32.cont [11/16] 0.0, 128
        %2408 = vxpose.xlu0.b32.cont [12/16] 0.0, 128
        %2409 = vxpose.xlu0.b32.cont [13/16] 0.0, 128
        %2410 = vxpose.xlu0.b32.cont [14/16] 0.0, 128
        %2411 = vxpose.xlu0.b32.cont [15/16] 0.0, 128
        %2412 = vxpose.xlu0.b32.end [16/16] 0.0, 128
        %v2413 = vpop.trf.xlu0
        %v2414 = vpop.trf.xlu0
        %v2415 = vpop.trf.xlu0
        %v2416 = vpop.trf.xlu0
        %v2417 = vpop.trf.xlu0
        %v2418 = vpop.trf.xlu0
        %v2419 = vpop.trf.xlu0
        %v2420 = vpop.trf.xlu0
        %v2421 = vpop.trf.xlu0
        %v2422 = vpop.trf.xlu0
        %v2423 = vpop.trf.xlu0
        %v2424 = vpop.trf.xlu0
        %v2425 = vpop.trf.xlu0
        %v2426 = vpop.trf.xlu0
        %v2427 = vpop.trf.xlu0
        %v2428 = vpop.trf.xlu0
        %2429 = vxpose.xlu0.b32.start [1/16] %v2330, 128
        %2430 = vxpose.xlu0.b32.cont [2/16] 0.0, 128
        %2431 = vxpose.xlu0.b32.cont [3/16] 0.0, 128
        %2432 = vxpose.xlu0.b32.cont [4/16] 0.0, 128
        %2433 = vxpose.xlu0.b32.cont [5/16] 0.0, 128
        %2434 = vxpose.xlu0.b32.cont [6/16] 0.0, 128
        %2435 = vxpose.xlu0.b32.cont [7/16] 0.0, 128
        %2436 = vxpose.xlu0.b32.cont [8/16] 0.0, 128
        %2437 = vxpose.xlu0.b32.cont [9/16] 0.0, 128
        %2438 = vxpose.xlu0.b32.cont [10/16] 0.0, 128
        %2439 = vxpose.xlu0.b32.cont [11/16] 0.0, 128
        %2440 = vxpose.xlu0.b32.cont [12/16] 0.0, 128
        %2441 = vxpose.xlu0.b32.cont [13/16] 0.0, 128
        %2442 = vxpose.xlu0.b32.cont [14/16] 0.0, 128
        %2443 = vxpose.xlu0.b32.cont [15/16] 0.0, 128
        %2444 = vxpose.xlu0.b32.end [16/16] 0.0, 128
        %v2445 = vpop.trf.xlu0
        %v2446 = vpop.trf.xlu0
        %v2447 = vpop.trf.xlu0
        %v2448 = vpop.trf.xlu0
        %v2449 = vpop.trf.xlu0
        %v2450 = vpop.trf.xlu0
        %v2451 = vpop.trf.xlu0
        %v2452 = vpop.trf.xlu0
        %v2453 = vpop.trf.xlu0
        %v2454 = vpop.trf.xlu0
        %v2455 = vpop.trf.xlu0
        %v2456 = vpop.trf.xlu0
        %v2457 = vpop.trf.xlu0
        %v2458 = vpop.trf.xlu0
        %v2459 = vpop.trf.xlu0
        %v2460 = vpop.trf.xlu0
        %v2461 = vcombine.low %v2349, %v2413
        %v2462 = vcombine.high %v2349, %v2413
        %v2464 = vunpack.c.l.s4 1983009808
        %v2465 = vunpack.c.0.s8 %v2464
        %v2466 = vlaneseq
        %v2467 = vshrl.u32 %v2466, 7
        %v2468 = vsub.s32 %v2465, %v2467
        %v2469 = vrot.slane %v2461, %v2468
        %v2471 = vunpack.c.l.s4 1983009808
        %v2472 = vunpack.c.0.s8 %v2471
        %v2473 = vlaneseq
        %v2474 = vshrl.u32 %v2473, 7
        %v2475 = vsub.s32 %v2472, %v2474
        %v2476 = vrot.slane %v2462, %v2475
        %v2477 = vcombine.low %v2381, %v2445
        %v2478 = vcombine.high %v2381, %v2445
        %v2480 = vunpack.c.l.s4 1983009808
        %v2481 = vunpack.c.0.s8 %v2480
        %v2482 = vlaneseq
        %v2483 = vshrl.u32 %v2482, 7
        %v2484 = vsub.s32 %v2481, %v2483
        %v2485 = vrot.slane %v2477, %v2484
        %v2487 = vunpack.c.l.s4 1983009808
        %v2488 = vunpack.c.0.s8 %v2487
        %v2489 = vlaneseq
        %v2490 = vshrl.u32 %v2489, 7
        %v2491 = vsub.s32 %v2488, %v2490
        %v2492 = vrot.slane %v2478, %v2491
        %v2493 = vcombine.low %v2469, %v2485
        %v2494 = vcombine.high %v2469, %v2485
        %v2496 = vunpack.c.l.s4 1934713408
        %v2497 = vunpack.c.0.s8 %v2496
        %v2498 = vlaneseq
        %v2499 = vshrl.u32 %v2498, 7
        %v2500 = vsub.s32 %v2497, %v2499
        %v2501 = vrot.slane %v2493, %v2500
        %v2503 = vunpack.c.l.s4 1934713408
        %v2504 = vunpack.c.0.s8 %v2503
        %v2505 = vlaneseq
        %v2506 = vshrl.u32 %v2505, 7
        %v2507 = vsub.s32 %v2504, %v2506
        %v2508 = vrot.slane %v2494, %v2507
        %v2509 = vcombine.low %v2476, %v2492
        %v2510 = vcombine.high %v2476, %v2492
        %v2512 = vunpack.c.l.s4 1934713408
        %v2513 = vunpack.c.0.s8 %v2512
        %v2514 = vlaneseq
        %v2515 = vshrl.u32 %v2514, 7
        %v2516 = vsub.s32 %v2513, %v2515
        %v2517 = vrot.slane %v2509, %v2516
        %v2519 = vunpack.c.l.s4 1934713408
        %v2520 = vunpack.c.0.s8 %v2519
        %v2521 = vlaneseq
        %v2522 = vshrl.u32 %v2521, 7
        %v2523 = vsub.s32 %v2520, %v2522
        %v2524 = vrot.slane %v2510, %v2523
        %v2525 = vcombine.high %v2501, 0.0
        %v2526 = vcombine.high %v2508, 0.0
        %v2527 = vcombine.high %v2517, 0.0
        %v2528 = vcombine.high %v2524, 0.0
        %v2529 = vcombine.low %v2501, %v2508
        %v2531 = vunpack.c.l.s4 1983009808
        %v2532 = vunpack.c.0.s8 %v2531
        %v2533 = vlaneseq
        %v2534 = vshrl.u32 %v2533, 7
        %v2535 = vsub.s32 %v2532, %v2534
        %v2536 = vrot.slane %v2529, %v2535
        %v2537 = vcombine.low %v2525, %v2526
        %v2539 = vunpack.c.l.s4 1983009808
        %v2540 = vunpack.c.0.s8 %v2539
        %v2541 = vlaneseq
        %v2542 = vshrl.u32 %v2541, 7
        %v2543 = vsub.s32 %v2540, %v2542
        %v2544 = vrot.slane %v2537, %v2543
        %v2545 = vcombine.low %v2517, %v2524
        %v2547 = vunpack.c.l.s4 1983009808
        %v2548 = vunpack.c.0.s8 %v2547
        %v2549 = vlaneseq
        %v2550 = vshrl.u32 %v2549, 7
        %v2551 = vsub.s32 %v2548, %v2550
        %v2552 = vrot.slane %v2545, %v2551
        %v2553 = vcombine.low %v2527, %v2528
        %v2555 = vunpack.c.l.s4 1983009808
        %v2556 = vunpack.c.0.s8 %v2555
        %v2557 = vlaneseq
        %v2558 = vshrl.u32 %v2557, 7
        %v2559 = vsub.s32 %v2556, %v2558
        %v2560 = vrot.slane %v2553, %v2559
        %v2561 = vcombine.low %v2536, %v2544
        %v2562 = vcombine.high %v2536, %v2544
        %v2564 = vunpack.c.l.s4 1934713408
        %v2565 = vunpack.c.0.s8 %v2564
        %v2566 = vlaneseq
        %v2567 = vshrl.u32 %v2566, 7
        %v2568 = vsub.s32 %v2565, %v2567
        %v2569 = vrot.slane %v2561, %v2568
        %v2571 = vunpack.c.l.s4 1934713408
        %v2572 = vunpack.c.0.s8 %v2571
        %v2573 = vlaneseq
        %v2574 = vshrl.u32 %v2573, 7
        %v2575 = vsub.s32 %v2572, %v2574
        %v2576 = vrot.slane %v2562, %v2575
        %v2577 = vcombine.low %v2552, %v2560
        %v2578 = vcombine.high %v2552, %v2560
        %v2580 = vunpack.c.l.s4 1934713408
        %v2581 = vunpack.c.0.s8 %v2580
        %v2582 = vlaneseq
        %v2583 = vshrl.u32 %v2582, 7
        %v2584 = vsub.s32 %v2581, %v2583
        %v2585 = vrot.slane %v2577, %v2584
        %v2587 = vunpack.c.l.s4 1934713408
        %v2588 = vunpack.c.0.s8 %v2587
        %v2589 = vlaneseq
        %v2590 = vshrl.u32 %v2589, 7
        %v2591 = vsub.s32 %v2588, %v2590
        %v2592 = vrot.slane %v2578, %v2591
        %v2593 = vcombine.low %v2569, %v2585
        %v2594 = vcombine.high %v2569, %v2585
        %v2595 = vcombine.low %v2576, %v2592
        %v2596 = vcombine.high %v2576, %v2592
        %2598 = vrot.lane.b32.xlu0 %v2594, 8
        %v2599 = vpop.permute.xlu0 %2598
        %2602 = vrot.lane.b32.xlu0 %v2595, 16
        %v2603 = vpop.permute.xlu0 %2602
        %2606 = vrot.lane.b32.xlu0 %v2596, 24
        %v2607 = vpop.permute.xlu0 %2606
        %v2609 = vsel %vm1560, %v2593, %v2599
        %vm2610 = vcmask 130048
        %v2611 = vsel %vm2610, %v2609, %v2603
        %vm2612 = vcmask 195584
        %v2613 = vsel %vm2612, %v2611, %v2607
        %v2614 = vld [vmem:[%s21] sm:$0xff]
        %v2615 = vld [vmem:[%s21 + $0x8] sm:$0xff]
        %v2616 = vld [vmem:[%s21 + $0x10] sm:$0xff]
        %v2617 = vld [vmem:[%s21 + $0x18] sm:$0xff]
        %v2618 = vld [vmem:[#allocation13] sm:$0x1]
        %v2620 = vlaneseq
        %v2621 = vshrl.u32 %v2620, 7
        %v2622 = vsub.s32 0, %v2621
        %v2623 = vrot.slane %v2618, %v2622
        %v2626 = vsel %vm1169, %v2613, 0
        %2628 = vmatprep.subr.mxu0 0.0
        %2629 = vmatpush1.msra.mxu0 0.0
        %2630 = vmatprep.subr.mxu0 0.0
        %2631 = vmatpush1.msra.mxu0 0.0
        %2632 = vmatprep.subr.mxu0 0.0
        %2633 = vmatpush1.msra.mxu0 0.0
        %2634 = vmatprep.subr.mxu0 0.0
        %2635 = vmatpush1.msra.mxu0 0.0
        %2636 = vmatprep.subr.mxu0 0.0
        %2637 = vmatpush1.msra.mxu0 0.0
        %2638 = vmatprep.subr.mxu0 0.0
        %2639 = vmatpush1.msra.mxu0 0.0
        %2640 = vmatprep.subr.mxu0 0.0
        %2641 = vmatpush1.msra.mxu0 0.0
        %2642 = vmatprep.subr.mxu0 0.0
        %2643 = vmatpush1.msra.mxu0 0.0
        %2644 = vmatprep.subr.mxu0 0.0
        %2645 = vmatpush1.msra.mxu0 0.0
        %2646 = vmatprep.subr.mxu0 0.0
        %2647 = vmatpush1.msra.mxu0 0.0
        %2648 = vmatprep.subr.mxu0 0.0
        %2649 = vmatpush1.msra.mxu0 0.0
        %2650 = vmatprep.subr.mxu0 0.0
        %2651 = vmatpush1.msra.mxu0 0.0
        %2652 = vmatprep.subr.mxu0 0.0
        %2653 = vmatpush1.msra.mxu0 %v2617
        %2654 = vmatprep.subr.mxu0 0.0
        %2655 = vmatpush1.msra.mxu0 %v2616
        %2656 = vmatprep.subr.mxu0 0.0
        %2657 = vmatpush1.msra.mxu0 %v2615
        %2658 = vmatprep.subr.mxu0 0.0
        %2659 = vmatpush1.msra.mxu0 %v2614
        %2660 = vmatprep.subr.mxu0 0.0
        %2661 = vmatpush2.msra.mxu0 0.0
        %2662 = vmatprep.subr.mxu0 0.0
        %2663 = vmatpush2.msra.mxu0 0.0
        %2664 = vmatprep.subr.mxu0 0.0
        %2665 = vmatpush2.msra.mxu0 0.0
        %2666 = vmatprep.subr.mxu0 0.0
        %2667 = vmatpush2.msra.mxu0 0.0
        %2668 = vmatprep.subr.mxu0 0.0
        %2669 = vmatpush2.msra.mxu0 0.0
        %2670 = vmatprep.subr.mxu0 0.0
        %2671 = vmatpush2.msra.mxu0 0.0
        %2672 = vmatprep.subr.mxu0 0.0
        %2673 = vmatpush2.msra.mxu0 0.0
        %2674 = vmatprep.subr.mxu0 0.0
        %2675 = vmatpush2.msra.mxu0 0.0
        %2676 = vmatprep.subr.mxu0 0.0
        %2677 = vmatpush2.msra.mxu0 0.0
        %2678 = vmatprep.subr.mxu0 0.0
        %2679 = vmatpush2.msra.mxu0 0.0
        %2680 = vmatprep.subr.mxu0 0.0
        %2681 = vmatpush2.msra.mxu0 0.0
        %2682 = vmatprep.subr.mxu0 0.0
        %2683 = vmatpush2.msra.mxu0 0.0
        %2684 = vmatprep.subr.mxu0 0.0
        %2685 = vmatpush2.msra.mxu0 0.0
        %2686 = vmatprep.subr.mxu0 0.0
        %2687 = vmatpush2.msra.mxu0 0.0
        %2688 = vmatprep.subr.mxu0 0.0
        %2689 = vmatpush2.msra.mxu0 0.0
        %2690 = vmatprep.subr.mxu0 0.0
        %2691 = vmatpush2.msra.mxu0 0.0
        %2692 = vmatprep.mubr.f32.mxu0 0.0
        %2693 = vmatmul.mubr.f32.gmra.mxu0 %v2626
        %v2694 = vpop.f32.mrf.mxu0
        %v2695 = vadd.f32 %v2623, %v2694
        %v2696 = vpop.f32.mrf.mxu0
        %2697 = vdwg.mxu0
        %v2698 = vadd.f32 %v1149, %v2695
        %v2699 = vsel %vm1169, %v2698, 0.0
        %2700 = vadd.xlane.f32.xlu0 %v2699
        %v2701 = vpop.xlane.xlu0 %2700
        %v2702 = vrcp.pop 32.0
        %v2703 = vmul.f32 %v2701, %v2702
        %v2704 = vsub.f32 %v2698, %v2703
        %v2705 = vmul.f32 %v2704, %v2704
        %v2706 = vsel %vm1169, %v2705, 0.0
        %2707 = vadd.xlane.f32.xlu0 %v2706
        %v2708 = vpop.xlane.xlu0 %2707
        %v2709 = vmul.f32 %v2708, %v2702
        %v2710 = vadd.f32 %v2709, 1e-05
        %v2711 = vrsqrt.pop %v2710
        %v2712 = vmul.f32 %v2704, %v2711
        %v2713 = vld [vmem:[%s41] sm:$0x1]
        %v2715 = vlaneseq
        %v2716 = vshrl.u32 %v2715, 7
        %v2717 = vsub.s32 0, %v2716
        %v2718 = vrot.slane %v2713, %v2717
        %v2720 = vmul.f32 %v2712, %v2718
        %v2721 = vld [vmem:[%s43] sm:$0x1]
        %v2723 = vlaneseq
        %v2724 = vshrl.u32 %v2723, 7
        %v2725 = vsub.s32 0, %v2724
        %v2726 = vrot.slane %v2721, %v2725
        %v2728 = vadd.f32 %v2720, %v2726
        %v2729 = vld [vmem:[#allocation14] sm:$0xff]
        %v2730 = vld [vmem:[#allocation14 + $0x8] sm:$0xff]
        %v2731 = vld [vmem:[#allocation14 + $0x10] sm:$0xff]
        %v2732 = vld [vmem:[#allocation14 + $0x18] sm:$0xff]
        %v2733 = vld [vmem:[#allocation16] sm:$0x1]
        %v2735 = vlaneseq
        %v2736 = vshrl.u32 %v2735, 7
        %v2737 = vsub.s32 0, %v2736
        %v2738 = vrot.slane %v2733, %v2737
        %v2741 = vsel %vm1169, %v2728, 0
        %2743 = vmatprep.subr.mxu0 0.0
        %2744 = vmatpush1.msra.mxu0 0.0
        %2745 = vmatprep.subr.mxu0 0.0
        %2746 = vmatpush1.msra.mxu0 0.0
        %2747 = vmatprep.subr.mxu0 0.0
        %2748 = vmatpush1.msra.mxu0 0.0
        %2749 = vmatprep.subr.mxu0 0.0
        %2750 = vmatpush1.msra.mxu0 0.0
        %2751 = vmatprep.subr.mxu0 0.0
        %2752 = vmatpush1.msra.mxu0 0.0
        %2753 = vmatprep.subr.mxu0 0.0
        %2754 = vmatpush1.msra.mxu0 0.0
        %2755 = vmatprep.subr.mxu0 0.0
        %2756 = vmatpush1.msra.mxu0 0.0
        %2757 = vmatprep.subr.mxu0 0.0
        %2758 = vmatpush1.msra.mxu0 0.0
        %2759 = vmatprep.subr.mxu0 0.0
        %2760 = vmatpush1.msra.mxu0 0.0
        %2761 = vmatprep.subr.mxu0 0.0
        %2762 = vmatpush1.msra.mxu0 0.0
        %2763 = vmatprep.subr.mxu0 0.0
        %2764 = vmatpush1.msra.mxu0 0.0
        %2765 = vmatprep.subr.mxu0 0.0
        %2766 = vmatpush1.msra.mxu0 0.0
        %2767 = vmatprep.subr.mxu0 0.0
        %2768 = vmatpush1.msra.mxu0 %v2732
        %2769 = vmatprep.subr.mxu0 0.0
        %2770 = vmatpush1.msra.mxu0 %v2731
        %2771 = vmatprep.subr.mxu0 0.0
        %2772 = vmatpush1.msra.mxu0 %v2730
        %2773 = vmatprep.subr.mxu0 0.0
        %2774 = vmatpush1.msra.mxu0 %v2729
        %2775 = vmatprep.subr.mxu0 0.0
        %2776 = vmatpush2.msra.mxu0 0.0
        %2777 = vmatprep.subr.mxu0 0.0
        %2778 = vmatpush2.msra.mxu0 0.0
        %2779 = vmatprep.subr.mxu0 0.0
        %2780 = vmatpush2.msra.mxu0 0.0
        %2781 = vmatprep.subr.mxu0 0.0
        %2782 = vmatpush2.msra.mxu0 0.0
        %2783 = vmatprep.subr.mxu0 0.0
        %2784 = vmatpush2.msra.mxu0 0.0
        %2785 = vmatprep.subr.mxu0 0.0
        %2786 = vmatpush2.msra.mxu0 0.0
        %2787 = vmatprep.subr.mxu0 0.0
        %2788 = vmatpush2.msra.mxu0 0.0
        %2789 = vmatprep.subr.mxu0 0.0
        %2790 = vmatpush2.msra.mxu0 0.0
        %2791 = vmatprep.subr.mxu0 0.0
        %2792 = vmatpush2.msra.mxu0 0.0
        %2793 = vmatprep.subr.mxu0 0.0
        %2794 = vmatpush2.msra.mxu0 0.0
        %2795 = vmatprep.subr.mxu0 0.0
        %2796 = vmatpush2.msra.mxu0 0.0
        %2797 = vmatprep.subr.mxu0 0.0
        %2798 = vmatpush2.msra.mxu0 0.0
        %2799 = vmatprep.subr.mxu0 0.0
        %2800 = vmatpush2.msra.mxu0 0.0
        %2801 = vmatprep.subr.mxu0 0.0
        %2802 = vmatpush2.msra.mxu0 0.0
        %2803 = vmatprep.subr.mxu0 0.0
        %2804 = vmatpush2.msra.mxu0 0.0
        %2805 = vmatprep.subr.mxu0 0.0
        %2806 = vmatpush2.msra.mxu0 0.0
        %2807 = vmatprep.mubr.f32.mxu0 0.0
        %2808 = vmatmul.mubr.f32.gmra.mxu0 %v2741
        %v2809 = vpop.f32.mrf.mxu0
        %v2810 = vadd.f32 %v2738, %v2809
        %v2811 = vpop.f32.mrf.mxu0
        %2812 = vdwg.mxu0
        %2814 = vrot.lane.b32.xlu0 %v2810, 120
        %v2815 = vpop.permute.xlu0 %2814
        %2816 = vrot.lane.b32.xlu0 %v2810, 112
        %v2817 = vpop.permute.xlu0 %2816
        %2818 = vrot.lane.b32.xlu0 %v2810, 104
        %v2819 = vpop.permute.xlu0 %2818
        %v2820 = vld [vmem:[#allocation17] sm:$0xff]
        %v2821 = vld [vmem:[#allocation17 + $0x8] sm:$0xff]
        %v2822 = vld [vmem:[#allocation17 + $0x10] sm:$0xff]
        %v2823 = vld [vmem:[#allocation17 + $0x18] sm:$0xff]
        %v2824 = vld [vmem:[#allocation19] sm:$0x1]
        %v2826 = vlaneseq
        %v2827 = vshrl.u32 %v2826, 7
        %v2828 = vsub.s32 0, %v2827
        %v2829 = vrot.slane %v2824, %v2828
        %v2832 = vsel %vm1169, %v1150, 0
        %v2835 = vsel %vm1169, %v1151, 0
        %2837 = vmatprep.subr.mxu0 0.0
        %2838 = vmatpush1.msra.mxu0 0.0
        %2839 = vmatprep.subr.mxu0 0.0
        %2840 = vmatpush1.msra.mxu0 0.0
        %2841 = vmatprep.subr.mxu0 0.0
        %2842 = vmatpush1.msra.mxu0 0.0
        %2843 = vmatprep.subr.mxu0 0.0
        %2844 = vmatpush1.msra.mxu0 0.0
        %2845 = vmatprep.subr.mxu0 0.0
        %2846 = vmatpush1.msra.mxu0 0.0
        %2847 = vmatprep.subr.mxu0 0.0
        %2848 = vmatpush1.msra.mxu0 0.0
        %2849 = vmatprep.subr.mxu0 0.0
        %2850 = vmatpush1.msra.mxu0 0.0
        %2851 = vmatprep.subr.mxu0 0.0
        %2852 = vmatpush1.msra.mxu0 0.0
        %2853 = vmatprep.subr.mxu0 0.0
        %2854 = vmatpush1.msra.mxu0 0.0
        %2855 = vmatprep.subr.mxu0 0.0
        %2856 = vmatpush1.msra.mxu0 0.0
        %2857 = vmatprep.subr.mxu0 0.0
        %2858 = vmatpush1.msra.mxu0 0.0
        %2859 = vmatprep.subr.mxu0 0.0
        %2860 = vmatpush1.msra.mxu0 0.0
        %2861 = vmatprep.subr.mxu0 0.0
        %2862 = vmatpush1.msra.mxu0 %v2823
        %2863 = vmatprep.subr.mxu0 0.0
        %2864 = vmatpush1.msra.mxu0 %v2822
        %2865 = vmatprep.subr.mxu0 0.0
        %2866 = vmatpush1.msra.mxu0 %v2821
        %2867 = vmatprep.subr.mxu0 0.0
        %2868 = vmatpush1.msra.mxu0 %v2820
        %2869 = vmatprep.subr.mxu0 0.0
        %2870 = vmatpush2.msra.mxu0 0.0
        %2871 = vmatprep.subr.mxu0 0.0
        %2872 = vmatpush2.msra.mxu0 0.0
        %2873 = vmatprep.subr.mxu0 0.0
        %2874 = vmatpush2.msra.mxu0 0.0
        %2875 = vmatprep.subr.mxu0 0.0
        %2876 = vmatpush2.msra.mxu0 0.0
        %2877 = vmatprep.subr.mxu0 0.0
        %2878 = vmatpush2.msra.mxu0 0.0
        %2879 = vmatprep.subr.mxu0 0.0
        %2880 = vmatpush2.msra.mxu0 0.0
        %2881 = vmatprep.subr.mxu0 0.0
        %2882 = vmatpush2.msra.mxu0 0.0
        %2883 = vmatprep.subr.mxu0 0.0
        %2884 = vmatpush2.msra.mxu0 0.0
        %2885 = vmatprep.subr.mxu0 0.0
        %2886 = vmatpush2.msra.mxu0 0.0
        %2887 = vmatprep.subr.mxu0 0.0
        %2888 = vmatpush2.msra.mxu0 0.0
        %2889 = vmatprep.subr.mxu0 0.0
        %2890 = vmatpush2.msra.mxu0 0.0
        %2891 = vmatprep.subr.mxu0 0.0
        %2892 = vmatpush2.msra.mxu0 0.0
        %2893 = vmatprep.subr.mxu0 0.0
        %2894 = vmatpush2.msra.mxu0 0.0
        %2895 = vmatprep.subr.mxu0 0.0
        %2896 = vmatpush2.msra.mxu0 0.0
        %2897 = vmatprep.subr.mxu0 0.0
        %2898 = vmatpush2.msra.mxu0 0.0
        %2899 = vmatprep.subr.mxu0 0.0
        %2900 = vmatpush2.msra.mxu0 0.0
        %2901 = vmatprep.mubr.f32.mxu0 0.0
        %2902 = vmatmul.mubr.f32.gmra.mxu0 %v2832
        %v2903 = vpop.f32.mrf.mxu0
        %v2904 = vadd.f32 %v2829, %v2903
        %v2905 = vpop.f32.mrf.mxu0
        %2906 = vmatprep.mubr.f32.mxu0 0.0
        %2907 = vmatmul.mubr.f32.gmra.mxu0 %v2835
        %v2908 = vpop.f32.mrf.mxu0
        %v2909 = vadd.f32 %v2829, %v2908
        %v2910 = vpop.f32.mrf.mxu0
        %2911 = vdwg.mxu0
        %2914 = vrot.lane.b32.xlu0 %v2904, 120
        %v2915 = vpop.permute.xlu0 %2914
        %2916 = vrot.lane.b32.xlu0 %v2909, 120
        %v2917 = vpop.permute.xlu0 %2916
        %2920 = vrot.lane.b32.xlu0 %v2904, 112
        %v2921 = vpop.permute.xlu0 %2920
        %2922 = vrot.lane.b32.xlu0 %v2909, 112
        %v2923 = vpop.permute.xlu0 %2922
        %2926 = vrot.lane.b32.xlu0 %v2904, 104
        %v2927 = vpop.permute.xlu0 %2926
        %2928 = vrot.lane.b32.xlu0 %v2909, 104
        %v2929 = vpop.permute.xlu0 %2928
        %v2932 = vld [vmem:[#allocation20] sm:$0xff]
        %v2933 = vld [vmem:[#allocation20 + $0x8] sm:$0xff]
        %v2934 = vld [vmem:[#allocation20 + $0x10] sm:$0xff]
        %v2935 = vld [vmem:[#allocation20 + $0x18] sm:$0xff]
        %v2936 = vld [vmem:[#allocation22] sm:$0x1]
        %v2938 = vlaneseq
        %v2939 = vshrl.u32 %v2938, 7
        %v2940 = vsub.s32 0, %v2939
        %v2941 = vrot.slane %v2936, %v2940
        %2943 = vmatprep.subr.mxu0 0.0
        %2944 = vmatpush1.msra.mxu0 0.0
        %2945 = vmatprep.subr.mxu0 0.0
        %2946 = vmatpush1.msra.mxu0 0.0
        %2947 = vmatprep.subr.mxu0 0.0
        %2948 = vmatpush1.msra.mxu0 0.0
        %2949 = vmatprep.subr.mxu0 0.0
        %2950 = vmatpush1.msra.mxu0 0.0
        %2951 = vmatprep.subr.mxu0 0.0
        %2952 = vmatpush1.msra.mxu0 0.0
        %2953 = vmatprep.subr.mxu0 0.0
        %2954 = vmatpush1.msra.mxu0 0.0
        %2955 = vmatprep.subr.mxu0 0.0
        %2956 = vmatpush1.msra.mxu0 0.0
        %2957 = vmatprep.subr.mxu0 0.0
        %2958 = vmatpush1.msra.mxu0 0.0
        %2959 = vmatprep.subr.mxu0 0.0
        %2960 = vmatpush1.msra.mxu0 0.0
        %2961 = vmatprep.subr.mxu0 0.0
        %2962 = vmatpush1.msra.mxu0 0.0
        %2963 = vmatprep.subr.mxu0 0.0
        %2964 = vmatpush1.msra.mxu0 0.0
        %2965 = vmatprep.subr.mxu0 0.0
        %2966 = vmatpush1.msra.mxu0 0.0
        %2967 = vmatprep.subr.mxu0 0.0
        %2968 = vmatpush1.msra.mxu0 %v2935
        %2969 = vmatprep.subr.mxu0 0.0
        %2970 = vmatpush1.msra.mxu0 %v2934
        %2971 = vmatprep.subr.mxu0 0.0
        %2972 = vmatpush1.msra.mxu0 %v2933
        %2973 = vmatprep.subr.mxu0 0.0
        %2974 = vmatpush1.msra.mxu0 %v2932
        %2975 = vmatprep.subr.mxu0 0.0
        %2976 = vmatpush2.msra.mxu0 0.0
        %2977 = vmatprep.subr.mxu0 0.0
        %2978 = vmatpush2.msra.mxu0 0.0
        %2979 = vmatprep.subr.mxu0 0.0
        %2980 = vmatpush2.msra.mxu0 0.0
        %2981 = vmatprep.subr.mxu0 0.0
        %2982 = vmatpush2.msra.mxu0 0.0
        %2983 = vmatprep.subr.mxu0 0.0
        %2984 = vmatpush2.msra.mxu0 0.0
        %2985 = vmatprep.subr.mxu0 0.0
        %2986 = vmatpush2.msra.mxu0 0.0
        %2987 = vmatprep.subr.mxu0 0.0
        %2988 = vmatpush2.msra.mxu0 0.0
        %2989 = vmatprep.subr.mxu0 0.0
        %2990 = vmatpush2.msra.mxu0 0.0
        %2991 = vmatprep.subr.mxu0 0.0
        %2992 = vmatpush2.msra.mxu0 0.0
        %2993 = vmatprep.subr.mxu0 0.0
        %2994 = vmatpush2.msra.mxu0 0.0
        %2995 = vmatprep.subr.mxu0 0.0
        %2996 = vmatpush2.msra.mxu0 0.0
        %2997 = vmatprep.subr.mxu0 0.0
        %2998 = vmatpush2.msra.mxu0 0.0
        %2999 = vmatprep.subr.mxu0 0.0
        %3000 = vmatpush2.msra.mxu0 0.0
        %3001 = vmatprep.subr.mxu0 0.0
        %3002 = vmatpush2.msra.mxu0 0.0
        %3003 = vmatprep.subr.mxu0 0.0
        %3004 = vmatpush2.msra.mxu0 0.0
        %3005 = vmatprep.subr.mxu0 0.0
        %3006 = vmatpush2.msra.mxu0 0.0
        %3007 = vmatprep.mubr.f32.mxu0 0.0
        %3008 = vmatmul.mubr.f32.gmra.mxu0 %v2832
        %v3009 = vpop.f32.mrf.mxu0
        %v3010 = vadd.f32 %v2941, %v3009
        %v3011 = vpop.f32.mrf.mxu0
        %3012 = vmatprep.mubr.f32.mxu0 0.0
        %3013 = vmatmul.mubr.f32.gmra.mxu0 %v2835
        %v3014 = vpop.f32.mrf.mxu0
        %v3015 = vadd.f32 %v2941, %v3014
        %v3016 = vpop.f32.mrf.mxu0
        %3017 = vdwg.mxu0
        %3020 = vrot.lane.b32.xlu0 %v3010, 120
        %v3021 = vpop.permute.xlu0 %3020
        %3022 = vrot.lane.b32.xlu0 %v3015, 120
        %v3023 = vpop.permute.xlu0 %3022
        %3026 = vrot.lane.b32.xlu0 %v3010, 112
        %v3027 = vpop.permute.xlu0 %3026
        %3028 = vrot.lane.b32.xlu0 %v3015, 112
        %v3029 = vpop.permute.xlu0 %3028
        %3032 = vrot.lane.b32.xlu0 %v3010, 104
        %v3033 = vpop.permute.xlu0 %3032
        %3034 = vrot.lane.b32.xlu0 %v3015, 104
        %v3035 = vpop.permute.xlu0 %3034
        %3038 = vxpose.xlu0.b32.start [1/16] %v2904, 128
        %3039 = vxpose.xlu0.b32.cont [2/16] %v2909, 128
        %3040 = vxpose.xlu0.b32.cont [3/16] 0.0, 128
        %3041 = vxpose.xlu0.b32.cont [4/16] 0.0, 128
        %3042 = vxpose.xlu0.b32.cont [5/16] 0.0, 128
        %3043 = vxpose.xlu0.b32.cont [6/16] 0.0, 128
        %3044 = vxpose.xlu0.b32.cont [7/16] 0.0, 128
        %3045 = vxpose.xlu0.b32.cont [8/16] 0.0, 128
        %3046 = vxpose.xlu0.b32.cont [9/16] 0.0, 128
        %3047 = vxpose.xlu0.b32.cont [10/16] 0.0, 128
        %3048 = vxpose.xlu0.b32.cont [11/16] 0.0, 128
        %3049 = vxpose.xlu0.b32.cont [12/16] 0.0, 128
        %3050 = vxpose.xlu0.b32.cont [13/16] 0.0, 128
        %3051 = vxpose.xlu0.b32.cont [14/16] 0.0, 128
        %3052 = vxpose.xlu0.b32.cont [15/16] 0.0, 128
        %3053 = vxpose.xlu0.b32.end [16/16] 0.0, 128
        %v3054 = vpop.trf.xlu0
        %v3055 = vpop.trf.xlu0
        %v3056 = vpop.trf.xlu0
        %v3057 = vpop.trf.xlu0
        %v3058 = vpop.trf.xlu0
        %v3059 = vpop.trf.xlu0
        %v3060 = vpop.trf.xlu0
        %v3061 = vpop.trf.xlu0
        %v3062 = vpop.trf.xlu0
        %v3063 = vpop.trf.xlu0
        %v3064 = vpop.trf.xlu0
        %v3065 = vpop.trf.xlu0
        %v3066 = vpop.trf.xlu0
        %v3067 = vpop.trf.xlu0
        %v3068 = vpop.trf.xlu0
        %v3069 = vpop.trf.xlu0
        %3070 = vxpose.xlu0.b32.start [1/16] %v2915, 128
        %3071 = vxpose.xlu0.b32.cont [2/16] %v2917, 128
        %3072 = vxpose.xlu0.b32.cont [3/16] 0.0, 128
        %3073 = vxpose.xlu0.b32.cont [4/16] 0.0, 128
        %3074 = vxpose.xlu0.b32.cont [5/16] 0.0, 128
        %3075 = vxpose.xlu0.b32.cont [6/16] 0.0, 128
        %3076 = vxpose.xlu0.b32.cont [7/16] 0.0, 128
        %3077 = vxpose.xlu0.b32.cont [8/16] 0.0, 128
        %3078 = vxpose.xlu0.b32.cont [9/16] 0.0, 128
        %3079 = vxpose.xlu0.b32.cont [10/16] 0.0, 128
        %3080 = vxpose.xlu0.b32.cont [11/16] 0.0, 128
        %3081 = vxpose.xlu0.b32.cont [12/16] 0.0, 128
        %3082 = vxpose.xlu0.b32.cont [13/16] 0.0, 128
        %3083 = vxpose.xlu0.b32.cont [14/16] 0.0, 128
        %3084 = vxpose.xlu0.b32.cont [15/16] 0.0, 128
        %3085 = vxpose.xlu0.b32.end [16/16] 0.0, 128
        %v3086 = vpop.trf.xlu0
        %v3087 = vpop.trf.xlu0
        %v3088 = vpop.trf.xlu0
        %v3089 = vpop.trf.xlu0
        %v3090 = vpop.trf.xlu0
        %v3091 = vpop.trf.xlu0
        %v3092 = vpop.trf.xlu0
        %v3093 = vpop.trf.xlu0
        %v3094 = vpop.trf.xlu0
        %v3095 = vpop.trf.xlu0
        %v3096 = vpop.trf.xlu0
        %v3097 = vpop.trf.xlu0
        %v3098 = vpop.trf.xlu0
        %v3099 = vpop.trf.xlu0
        %v3100 = vpop.trf.xlu0
        %v3101 = vpop.trf.xlu0
        %3102 = vxpose.xlu0.b32.start [1/16] %v2921, 128
        %3103 = vxpose.xlu0.b32.cont [2/16] %v2923, 128
        %3104 = vxpose.xlu0.b32.cont [3/16] 0.0, 128
        %3105 = vxpose.xlu0.b32.cont [4/16] 0.0, 128
        %3106 = vxpose.xlu0.b32.cont [5/16] 0.0, 128
        %3107 = vxpose.xlu0.b32.cont [6/16] 0.0, 128
        %3108 = vxpose.xlu0.b32.cont [7/16] 0.0, 128
        %3109 = vxpose.xlu0.b32.cont [8/16] 0.0, 128
        %3110 = vxpose.xlu0.b32.cont [9/16] 0.0, 128
        %3111 = vxpose.xlu0.b32.cont [10/16] 0.0, 128
        %3112 = vxpose.xlu0.b32.cont [11/16] 0.0, 128
        %3113 = vxpose.xlu0.b32.cont [12/16] 0.0, 128
        %3114 = vxpose.xlu0.b32.cont [13/16] 0.0, 128
        %3115 = vxpose.xlu0.b32.cont [14/16] 0.0, 128
        %3116 = vxpose.xlu0.b32.cont [15/16] 0.0, 128
        %3117 = vxpose.xlu0.b32.end [16/16] 0.0, 128
        %v3118 = vpop.trf.xlu0
        %v3119 = vpop.trf.xlu0
        %v3120 = vpop.trf.xlu0
        %v3121 = vpop.trf.xlu0
        %v3122 = vpop.trf.xlu0
        %v3123 = vpop.trf.xlu0
        %v3124 = vpop.trf.xlu0
        %v3125 = vpop.trf.xlu0
        %v3126 = vpop.trf.xlu0
        %v3127 = vpop.trf.xlu0
        %v3128 = vpop.trf.xlu0
        %v3129 = vpop.trf.xlu0
        %v3130 = vpop.trf.xlu0
        %v3131 = vpop.trf.xlu0
        %v3132 = vpop.trf.xlu0
        %v3133 = vpop.trf.xlu0
        %3134 = vxpose.xlu0.b32.start [1/16] %v2927, 128
        %3135 = vxpose.xlu0.b32.cont [2/16] %v2929, 128
        %3136 = vxpose.xlu0.b32.cont [3/16] 0.0, 128
        %3137 = vxpose.xlu0.b32.cont [4/16] 0.0, 128
        %3138 = vxpose.xlu0.b32.cont [5/16] 0.0, 128
        %3139 = vxpose.xlu0.b32.cont [6/16] 0.0, 128
        %3140 = vxpose.xlu0.b32.cont [7/16] 0.0, 128
        %3141 = vxpose.xlu0.b32.cont [8/16] 0.0, 128
        %3142 = vxpose.xlu0.b32.cont [9/16] 0.0, 128
        %3143 = vxpose.xlu0.b32.cont [10/16] 0.0, 128
        %3144 = vxpose.xlu0.b32.cont [11/16] 0.0, 128
        %3145 = vxpose.xlu0.b32.cont [12/16] 0.0, 128
        %3146 = vxpose.xlu0.b32.cont [13/16] 0.0, 128
        %3147 = vxpose.xlu0.b32.cont [14/16] 0.0, 128
        %3148 = vxpose.xlu0.b32.cont [15/16] 0.0, 128
        %3149 = vxpose.xlu0.b32.end [16/16] 0.0, 128
        %v3150 = vpop.trf.xlu0
        %v3151 = vpop.trf.xlu0
        %v3152 = vpop.trf.xlu0
        %v3153 = vpop.trf.xlu0
        %v3154 = vpop.trf.xlu0
        %v3155 = vpop.trf.xlu0
        %v3156 = vpop.trf.xlu0
        %v3157 = vpop.trf.xlu0
        %v3158 = vpop.trf.xlu0
        %v3159 = vpop.trf.xlu0
        %v3160 = vpop.trf.xlu0
        %v3161 = vpop.trf.xlu0
        %v3162 = vpop.trf.xlu0
        %v3163 = vpop.trf.xlu0
        %v3164 = vpop.trf.xlu0
        %v3165 = vpop.trf.xlu0
        %v3166 = vsel %vm1560, %v2810, 0
        %3168 = vmatprep.subr.mxu0 0.0
        %3169 = vmatpush1.msra.mxu0 0.0
        %3170 = vmatprep.subr.mxu0 0.0
        %3171 = vmatpush1.msra.mxu0 0.0
        %3172 = vmatprep.subr.mxu0 0.0
        %3173 = vmatpush1.msra.mxu0 0.0
        %3174 = vmatprep.subr.mxu0 0.0
        %3175 = vmatpush1.msra.mxu0 0.0
        %3176 = vmatprep.subr.mxu0 0.0
        %3177 = vmatpush1.msra.mxu0 0.0
        %3178 = vmatprep.subr.mxu0 0.0
        %3179 = vmatpush1.msra.mxu0 0.0
        %3180 = vmatprep.subr.mxu0 0.0
        %3181 = vmatpush1.msra.mxu0 0.0
        %3182 = vmatprep.subr.mxu0 0.0
        %3183 = vmatpush1.msra.mxu0 0.0
        %3184 = vmatprep.subr.mxu0 0.0
        %3185 = vmatpush1.msra.mxu0 0.0
        %3186 = vmatprep.subr.mxu0 0.0
        %3187 = vmatpush1.msra.mxu0 0.0
        %3188 = vmatprep.subr.mxu0 0.0
        %3189 = vmatpush1.msra.mxu0 0.0
        %3190 = vmatprep.subr.mxu0 0.0
        %3191 = vmatpush1.msra.mxu0 0.0
        %3192 = vmatprep.subr.mxu0 0.0
        %3193 = vmatpush1.msra.mxu0 0.0
        %3194 = vmatprep.subr.mxu0 0.0
        %3195 = vmatpush1.msra.mxu0 0.0
        %3196 = vmatprep.subr.mxu0 0.0
        %3197 = vmatpush1.msra.mxu0 0.0
        %3198 = vmatprep.subr.mxu0 0.0
        %3199 = vmatpush1.msra.mxu0 %v3054
        %3200 = vmatprep.subr.mxu0 0.0
        %3201 = vmatpush2.msra.mxu0 0.0
        %3202 = vmatprep.subr.mxu0 0.0
        %3203 = vmatpush2.msra.mxu0 0.0
        %3204 = vmatprep.subr.mxu0 0.0
        %3205 = vmatpush2.msra.mxu0 0.0
        %3206 = vmatprep.subr.mxu0 0.0
        %3207 = vmatpush2.msra.mxu0 0.0
        %3208 = vmatprep.subr.mxu0 0.0
        %3209 = vmatpush2.msra.mxu0 0.0
        %3210 = vmatprep.subr.mxu0 0.0
        %3211 = vmatpush2.msra.mxu0 0.0
        %3212 = vmatprep.subr.mxu0 0.0
        %3213 = vmatpush2.msra.mxu0 0.0
        %3214 = vmatprep.subr.mxu0 0.0
        %3215 = vmatpush2.msra.mxu0 0.0
        %3216 = vmatprep.subr.mxu0 0.0
        %3217 = vmatpush2.msra.mxu0 0.0
        %3218 = vmatprep.subr.mxu0 0.0
        %3219 = vmatpush2.msra.mxu0 0.0
        %3220 = vmatprep.subr.mxu0 0.0
        %3221 = vmatpush2.msra.mxu0 0.0
        %3222 = vmatprep.subr.mxu0 0.0
        %3223 = vmatpush2.msra.mxu0 0.0
        %3224 = vmatprep.subr.mxu0 0.0
        %3225 = vmatpush2.msra.mxu0 0.0
        %3226 = vmatprep.subr.mxu0 0.0
        %3227 = vmatpush2.msra.mxu0 0.0
        %3228 = vmatprep.subr.mxu0 0.0
        %3229 = vmatpush2.msra.mxu0 0.0
        %3230 = vmatprep.subr.mxu0 0.0
        %3231 = vmatpush2.msra.mxu0 0.0
        %3232 = vmatprep.mubr.f32.mxu0 0.0
        %3233 = vmatmul.mubr.f32.gmra.mxu0 %v3166
        %v3234 = vpop.f32.mrf.mxu0
        %v3235 = vadd.f32 0.0, %v3234
        %v3236 = vpop.f32.mrf.mxu0
        %3237 = vdwg.mxu0
        %v3238 = vsel %vm1560, %v2815, 0
        %3240 = vmatprep.subr.mxu0 0.0
        %3241 = vmatpush1.msra.mxu0 0.0
        %3242 = vmatprep.subr.mxu0 0.0
        %3243 = vmatpush1.msra.mxu0 0.0
        %3244 = vmatprep.subr.mxu0 0.0
        %3245 = vmatpush1.msra.mxu0 0.0
        %3246 = vmatprep.subr.mxu0 0.0
        %3247 = vmatpush1.msra.mxu0 0.0
        %3248 = vmatprep.subr.mxu0 0.0
        %3249 = vmatpush1.msra.mxu0 0.0
        %3250 = vmatprep.subr.mxu0 0.0
        %3251 = vmatpush1.msra.mxu0 0.0
        %3252 = vmatprep.subr.mxu0 0.0
        %3253 = vmatpush1.msra.mxu0 0.0
        %3254 = vmatprep.subr.mxu0 0.0
        %3255 = vmatpush1.msra.mxu0 0.0
        %3256 = vmatprep.subr.mxu0 0.0
        %3257 = vmatpush1.msra.mxu0 0.0
        %3258 = vmatprep.subr.mxu0 0.0
        %3259 = vmatpush1.msra.mxu0 0.0
        %3260 = vmatprep.subr.mxu0 0.0
        %3261 = vmatpush1.msra.mxu0 0.0
        %3262 = vmatprep.subr.mxu0 0.0
        %3263 = vmatpush1.msra.mxu0 0.0
        %3264 = vmatprep.subr.mxu0 0.0
        %3265 = vmatpush1.msra.mxu0 0.0
        %3266 = vmatprep.subr.mxu0 0.0
        %3267 = vmatpush1.msra.mxu0 0.0
        %3268 = vmatprep.subr.mxu0 0.0
        %3269 = vmatpush1.msra.mxu0 0.0
        %3270 = vmatprep.subr.mxu0 0.0
        %3271 = vmatpush1.msra.mxu0 %v3086
        %3272 = vmatprep.subr.mxu0 0.0
        %3273 = vmatpush2.msra.mxu0 0.0
        %3274 = vmatprep.subr.mxu0 0.0
        %3275 = vmatpush2.msra.mxu0 0.0
        %3276 = vmatprep.subr.mxu0 0.0
        %3277 = vmatpush2.msra.mxu0 0.0
        %3278 = vmatprep.subr.mxu0 0.0
        %3279 = vmatpush2.msra.mxu0 0.0
        %3280 = vmatprep.subr.mxu0 0.0
        %3281 = vmatpush2.msra.mxu0 0.0
        %3282 = vmatprep.subr.mxu0 0.0
        %3283 = vmatpush2.msra.mxu0 0.0
        %3284 = vmatprep.subr.mxu0 0.0
        %3285 = vmatpush2.msra.mxu0 0.0
        %3286 = vmatprep.subr.mxu0 0.0
        %3287 = vmatpush2.msra.mxu0 0.0
        %3288 = vmatprep.subr.mxu0 0.0
        %3289 = vmatpush2.msra.mxu0 0.0
        %3290 = vmatprep.subr.mxu0 0.0
        %3291 = vmatpush2.msra.mxu0 0.0
        %3292 = vmatprep.subr.mxu0 0.0
        %3293 = vmatpush2.msra.mxu0 0.0
        %3294 = vmatprep.subr.mxu0 0.0
        %3295 = vmatpush2.msra.mxu0 0.0
        %3296 = vmatprep.subr.mxu0 0.0
        %3297 = vmatpush2.msra.mxu0 0.0
        %3298 = vmatprep.subr.mxu0 0.0
        %3299 = vmatpush2.msra.mxu0 0.0
        %3300 = vmatprep.subr.mxu0 0.0
        %3301 = vmatpush2.msra.mxu0 0.0
        %3302 = vmatprep.subr.mxu0 0.0
        %3303 = vmatpush2.msra.mxu0 0.0
        %3304 = vmatprep.mubr.f32.mxu0 0.0
        %3305 = vmatmul.mubr.f32.gmra.mxu0 %v3238
        %v3306 = vpop.f32.mrf.mxu0
        %v3307 = vadd.f32 0.0, %v3306
        %v3308 = vpop.f32.mrf.mxu0
        %3309 = vdwg.mxu0
        %v3310 = vsel %vm1560, %v2817, 0
        %3312 = vmatprep.subr.mxu0 0.0
        %3313 = vmatpush1.msra.mxu0 0.0
        %3314 = vmatprep.subr.mxu0 0.0
        %3315 = vmatpush1.msra.mxu0 0.0
        %3316 = vmatprep.subr.mxu0 0.0
        %3317 = vmatpush1.msra.mxu0 0.0
        %3318 = vmatprep.subr.mxu0 0.0
        %3319 = vmatpush1.msra.mxu0 0.0
        %3320 = vmatprep.subr.mxu0 0.0
        %3321 = vmatpush1.msra.mxu0 0.0
        %3322 = vmatprep.subr.mxu0 0.0
        %3323 = vmatpush1.msra.mxu0 0.0
        %3324 = vmatprep.subr.mxu0 0.0
        %3325 = vmatpush1.msra.mxu0 0.0
        %3326 = vmatprep.subr.mxu0 0.0
        %3327 = vmatpush1.msra.mxu0 0.0
        %3328 = vmatprep.subr.mxu0 0.0
        %3329 = vmatpush1.msra.mxu0 0.0
        %3330 = vmatprep.subr.mxu0 0.0
        %3331 = vmatpush1.msra.mxu0 0.0
        %3332 = vmatprep.subr.mxu0 0.0
        %3333 = vmatpush1.msra.mxu0 0.0
        %3334 = vmatprep.subr.mxu0 0.0
        %3335 = vmatpush1.msra.mxu0 0.0
        %3336 = vmatprep.subr.mxu0 0.0
        %3337 = vmatpush1.msra.mxu0 0.0
        %3338 = vmatprep.subr.mxu0 0.0
        %3339 = vmatpush1.msra.mxu0 0.0
        %3340 = vmatprep.subr.mxu0 0.0
        %3341 = vmatpush1.msra.mxu0 0.0
        %3342 = vmatprep.subr.mxu0 0.0
        %3343 = vmatpush1.msra.mxu0 %v3118
        %3344 = vmatprep.subr.mxu0 0.0
        %3345 = vmatpush2.msra.mxu0 0.0
        %3346 = vmatprep.subr.mxu0 0.0
        %3347 = vmatpush2.msra.mxu0 0.0
        %3348 = vmatprep.subr.mxu0 0.0
        %3349 = vmatpush2.msra.mxu0 0.0
        %3350 = vmatprep.subr.mxu0 0.0
        %3351 = vmatpush2.msra.mxu0 0.0
        %3352 = vmatprep.subr.mxu0 0.0
        %3353 = vmatpush2.msra.mxu0 0.0
        %3354 = vmatprep.subr.mxu0 0.0
        %3355 = vmatpush2.msra.mxu0 0.0
        %3356 = vmatprep.subr.mxu0 0.0
        %3357 = vmatpush2.msra.mxu0 0.0
        %3358 = vmatprep.subr.mxu0 0.0
        %3359 = vmatpush2.msra.mxu0 0.0
        %3360 = vmatprep.subr.mxu0 0.0
        %3361 = vmatpush2.msra.mxu0 0.0
        %3362 = vmatprep.subr.mxu0 0.0
        %3363 = vmatpush2.msra.mxu0 0.0
        %3364 = vmatprep.subr.mxu0 0.0
        %3365 = vmatpush2.msra.mxu0 0.0
        %3366 = vmatprep.subr.mxu0 0.0
        %3367 = vmatpush2.msra.mxu0 0.0
        %3368 = vmatprep.subr.mxu0 0.0
        %3369 = vmatpush2.msra.mxu0 0.0
        %3370 = vmatprep.subr.mxu0 0.0
        %3371 = vmatpush2.msra.mxu0 0.0
        %3372 = vmatprep.subr.mxu0 0.0
        %3373 = vmatpush2.msra.mxu0 0.0
        %3374 = vmatprep.subr.mxu0 0.0
        %3375 = vmatpush2.msra.mxu0 0.0
        %3376 = vmatprep.mubr.f32.mxu0 0.0
        %3377 = vmatmul.mubr.f32.gmra.mxu0 %v3310
        %v3378 = vpop.f32.mrf.mxu0
        %v3379 = vadd.f32 0.0, %v3378
        %v3380 = vpop.f32.mrf.mxu0
        %3381 = vdwg.mxu0
        %v3382 = vsel %vm1560, %v2819, 0
        %3384 = vmatprep.subr.mxu0 0.0
        %3385 = vmatpush1.msra.mxu0 0.0
        %3386 = vmatprep.subr.mxu0 0.0
        %3387 = vmatpush1.msra.mxu0 0.0
        %3388 = vmatprep.subr.mxu0 0.0
        %3389 = vmatpush1.msra.mxu0 0.0
        %3390 = vmatprep.subr.mxu0 0.0
        %3391 = vmatpush1.msra.mxu0 0.0
        %3392 = vmatprep.subr.mxu0 0.0
        %3393 = vmatpush1.msra.mxu0 0.0
        %3394 = vmatprep.subr.mxu0 0.0
        %3395 = vmatpush1.msra.mxu0 0.0
        %3396 = vmatprep.subr.mxu0 0.0
        %3397 = vmatpush1.msra.mxu0 0.0
        %3398 = vmatprep.subr.mxu0 0.0
        %3399 = vmatpush1.msra.mxu0 0.0
        %3400 = vmatprep.subr.mxu0 0.0
        %3401 = vmatpush1.msra.mxu0 0.0
        %3402 = vmatprep.subr.mxu0 0.0
        %3403 = vmatpush1.msra.mxu0 0.0
        %3404 = vmatprep.subr.mxu0 0.0
        %3405 = vmatpush1.msra.mxu0 0.0
        %3406 = vmatprep.subr.mxu0 0.0
        %3407 = vmatpush1.msra.mxu0 0.0
        %3408 = vmatprep.subr.mxu0 0.0
        %3409 = vmatpush1.msra.mxu0 0.0
        %3410 = vmatprep.subr.mxu0 0.0
        %3411 = vmatpush1.msra.mxu0 0.0
        %3412 = vmatprep.subr.mxu0 0.0
        %3413 = vmatpush1.msra.mxu0 0.0
        %3414 = vmatprep.subr.mxu0 0.0
        %3415 = vmatpush1.msra.mxu0 %v3150
        %3416 = vmatprep.subr.mxu0 0.0
        %3417 = vmatpush2.msra.mxu0 0.0
        %3418 = vmatprep.subr.mxu0 0.0
        %3419 = vmatpush2.msra.mxu0 0.0
        %3420 = vmatprep.subr.mxu0 0.0
        %3421 = vmatpush2.msra.mxu0 0.0
        %3422 = vmatprep.subr.mxu0 0.0
        %3423 = vmatpush2.msra.mxu0 0.0
        %3424 = vmatprep.subr.mxu0 0.0
        %3425 = vmatpush2.msra.mxu0 0.0
        %3426 = vmatprep.subr.mxu0 0.0
        %3427 = vmatpush2.msra.mxu0 0.0
        %3428 = vmatprep.subr.mxu0 0.0
        %3429 = vmatpush2.msra.mxu0 0.0
        %3430 = vmatprep.subr.mxu0 0.0
        %3431 = vmatpush2.msra.mxu0 0.0
        %3432 = vmatprep.subr.mxu0 0.0
        %3433 = vmatpush2.msra.mxu0 0.0
        %3434 = vmatprep.subr.mxu0 0.0
        %3435 = vmatpush2.msra.mxu0 0.0
        %3436 = vmatprep.subr.mxu0 0.0
        %3437 = vmatpush2.msra.mxu0 0.0
        %3438 = vmatprep.subr.mxu0 0.0
        %3439 = vmatpush2.msra.mxu0 0.0
        %3440 = vmatprep.subr.mxu0 0.0
        %3441 = vmatpush2.msra.mxu0 0.0
        %3442 = vmatprep.subr.mxu0 0.0
        %3443 = vmatpush2.msra.mxu0 0.0
        %3444 = vmatprep.subr.mxu0 0.0
        %3445 = vmatpush2.msra.mxu0 0.0
        %3446 = vmatprep.subr.mxu0 0.0
        %3447 = vmatpush2.msra.mxu0 0.0
        %3448 = vmatprep.mubr.f32.mxu0 0.0
        %3449 = vmatmul.mubr.f32.gmra.mxu0 %v3382
        %v3450 = vpop.f32.mrf.mxu0
        %v3451 = vadd.f32 0.0, %v3450
        %v3452 = vpop.f32.mrf.mxu0
        %3453 = vdwg.mxu0
        %v3454 = vmul.f32 %v3235, 0.35355338
        %v3455 = vmul.f32 %v3307, 0.35355338
        %v3456 = vmul.f32 %v3379, 0.35355338
        %v3457 = vmul.f32 %v3451, 0.35355338
        %v3458 = vadd.f32 %v3454, %v1157
        %v3459 = vadd.f32 %v3455, %v1157
        %v3460 = vadd.f32 %v3456, %v1157
        %v3461 = vadd.f32 %v3457, %v1157
        %v3462 = vsel %vm2610, %v3458, -inf
        %3463 = vmax.xlane.f32.xlu0 %v3462
        %v3464 = vpop.xlane.xlu0 %3463
        %v3465 = vsel %vm2610, %v3459, -inf
        %3466 = vmax.xlane.f32.xlu0 %v3465
        %v3467 = vpop.xlane.xlu0 %3466
        %v3468 = vsel %vm2610, %v3460, -inf
        %3469 = vmax.xlane.f32.xlu0 %v3468
        %v3470 = vpop.xlane.xlu0 %3469
        %v3471 = vsel %vm2610, %v3461, -inf
        %3472 = vmax.xlane.f32.xlu0 %v3471
        %v3473 = vpop.xlane.xlu0 %3472
        %v3474 = vsub.f32 %v3458, %v3464
        %v3475 = vsub.f32 %v3459, %v3467
        %v3476 = vsub.f32 %v3460, %v3470
        %v3477 = vsub.f32 %v3461, %v3473
        %v3478 = vmul.f32 %v3474, 1.442695
        %v3479 = vpow.pop %v3478
        %v3480 = vmul.f32 %v3475, 1.442695
        %v3481 = vpow.pop %v3480
        %v3482 = vmul.f32 %v3476, 1.442695
        %v3483 = vpow.pop %v3482
        %v3484 = vmul.f32 %v3477, 1.442695
        %v3485 = vpow.pop %v3484
        %v3486 = vsel %vm2610, %v3479, 0.0
        %3487 = vadd.xlane.f32.xlu0 %v3486
        %v3488 = vpop.xlane.xlu0 %3487
        %v3489 = vsel %vm2610, %v3481, 0.0
        %3490 = vadd.xlane.f32.xlu0 %v3489
        %v3491 = vpop.xlane.xlu0 %3490
        %v3492 = vsel %vm2610, %v3483, 0.0
        %3493 = vadd.xlane.f32.xlu0 %v3492
        %v3494 = vpop.xlane.xlu0 %3493
        %v3495 = vsel %vm2610, %v3485, 0.0
        %3496 = vadd.xlane.f32.xlu0 %v3495
        %v3497 = vpop.xlane.xlu0 %3496
        %v3498 = vrcp.pop %v3488
        %v3499 = vrcp.pop %v3491
        %v3500 = vrcp.pop %v3494
        %v3501 = vrcp.pop %v3497
        %v3502 = vmul.f32 %v3479, %v3498
        %v3503 = vmul.f32 %v3481, %v3499
        %v3504 = vmul.f32 %v3483, %v3500
        %v3505 = vmul.f32 %v3485, %v3501
        %3506 = vxpose.xlu0.b32.start [1/16] %v3010, 128
        %3507 = vxpose.xlu0.b32.cont [2/16] %v3015, 128
        %3508 = vxpose.xlu0.b32.cont [3/16] 0.0, 128
        %3509 = vxpose.xlu0.b32.cont [4/16] 0.0, 128
        %3510 = vxpose.xlu0.b32.cont [5/16] 0.0, 128
        %3511 = vxpose.xlu0.b32.cont [6/16] 0.0, 128
        %3512 = vxpose.xlu0.b32.cont [7/16] 0.0, 128
        %3513 = vxpose.xlu0.b32.cont [8/16] 0.0, 128
        %3514 = vxpose.xlu0.b32.cont [9/16] 0.0, 128
        %3515 = vxpose.xlu0.b32.cont [10/16] 0.0, 128
        %3516 = vxpose.xlu0.b32.cont [11/16] 0.0, 128
        %3517 = vxpose.xlu0.b32.cont [12/16] 0.0, 128
        %3518 = vxpose.xlu0.b32.cont [13/16] 0.0, 128
        %3519 = vxpose.xlu0.b32.cont [14/16] 0.0, 128
        %3520 = vxpose.xlu0.b32.cont [15/16] 0.0, 128
        %3521 = vxpose.xlu0.b32.end [16/16] 0.0, 128
        %v3522 = vpop.trf.xlu0
        %v3523 = vpop.trf.xlu0
        %v3524 = vpop.trf.xlu0
        %v3525 = vpop.trf.xlu0
        %v3526 = vpop.trf.xlu0
        %v3527 = vpop.trf.xlu0
        %v3528 = vpop.trf.xlu0
        %v3529 = vpop.trf.xlu0
        %v3530 = vpop.trf.xlu0
        %v3531 = vpop.trf.xlu0
        %v3532 = vpop.trf.xlu0
        %v3533 = vpop.trf.xlu0
        %v3534 = vpop.trf.xlu0
        %v3535 = vpop.trf.xlu0
        %v3536 = vpop.trf.xlu0
        %v3537 = vpop.trf.xlu0
        %3538 = vxpose.xlu0.b32.start [1/16] %v3021, 128
        %3539 = vxpose.xlu0.b32.cont [2/16] %v3023, 128
        %3540 = vxpose.xlu0.b32.cont [3/16] 0.0, 128
        %3541 = vxpose.xlu0.b32.cont [4/16] 0.0, 128
        %3542 = vxpose.xlu0.b32.cont [5/16] 0.0, 128
        %3543 = vxpose.xlu0.b32.cont [6/16] 0.0, 128
        %3544 = vxpose.xlu0.b32.cont [7/16] 0.0, 128
        %3545 = vxpose.xlu0.b32.cont [8/16] 0.0, 128
        %3546 = vxpose.xlu0.b32.cont [9/16] 0.0, 128
        %3547 = vxpose.xlu0.b32.cont [10/16] 0.0, 128
        %3548 = vxpose.xlu0.b32.cont [11/16] 0.0, 128
        %3549 = vxpose.xlu0.b32.cont [12/16] 0.0, 128
        %3550 = vxpose.xlu0.b32.cont [13/16] 0.0, 128
        %3551 = vxpose.xlu0.b32.cont [14/16] 0.0, 128
        %3552 = vxpose.xlu0.b32.cont [15/16] 0.0, 128
        %3553 = vxpose.xlu0.b32.end [16/16] 0.0, 128
        %v3554 = vpop.trf.xlu0
        %v3555 = vpop.trf.xlu0
        %v3556 = vpop.trf.xlu0
        %v3557 = vpop.trf.xlu0
        %v3558 = vpop.trf.xlu0
        %v3559 = vpop.trf.xlu0
        %v3560 = vpop.trf.xlu0
        %v3561 = vpop.trf.xlu0
        %v3562 = vpop.trf.xlu0
        %v3563 = vpop.trf.xlu0
        %v3564 = vpop.trf.xlu0
        %v3565 = vpop.trf.xlu0
        %v3566 = vpop.trf.xlu0
        %v3567 = vpop.trf.xlu0
        %v3568 = vpop.trf.xlu0
        %v3569 = vpop.trf.xlu0
        %3570 = vxpose.xlu0.b32.start [1/16] %v3027, 128
        %3571 = vxpose.xlu0.b32.cont [2/16] %v3029, 128
        %3572 = vxpose.xlu0.b32.cont [3/16] 0.0, 128
        %3573 = vxpose.xlu0.b32.cont [4/16] 0.0, 128
        %3574 = vxpose.xlu0.b32.cont [5/16] 0.0, 128
        %3575 = vxpose.xlu0.b32.cont [6/16] 0.0, 128
        %3576 = vxpose.xlu0.b32.cont [7/16] 0.0, 128
        %3577 = vxpose.xlu0.b32.cont [8/16] 0.0, 128
        %3578 = vxpose.xlu0.b32.cont [9/16] 0.0, 128
        %3579 = vxpose.xlu0.b32.cont [10/16] 0.0, 128
        %3580 = vxpose.xlu0.b32.cont [11/16] 0.0, 128
        %3581 = vxpose.xlu0.b32.cont [12/16] 0.0, 128
        %3582 = vxpose.xlu0.b32.cont [13/16] 0.0, 128
        %3583 = vxpose.xlu0.b32.cont [14/16] 0.0, 128
        %3584 = vxpose.xlu0.b32.cont [15/16] 0.0, 128
        %3585 = vxpose.xlu0.b32.end [16/16] 0.0, 128
        %v3586 = vpop.trf.xlu0
        %v3587 = vpop.trf.xlu0
        %v3588 = vpop.trf.xlu0
        %v3589 = vpop.trf.xlu0
        %v3590 = vpop.trf.xlu0
        %v3591 = vpop.trf.xlu0
        %v3592 = vpop.trf.xlu0
        %v3593 = vpop.trf.xlu0
        %v3594 = vpop.trf.xlu0
        %v3595 = vpop.trf.xlu0
        %v3596 = vpop.trf.xlu0
        %v3597 = vpop.trf.xlu0
        %v3598 = vpop.trf.xlu0
        %v3599 = vpop.trf.xlu0
        %v3600 = vpop.trf.xlu0
        %v3601 = vpop.trf.xlu0
        %3602 = vxpose.xlu0.b32.start [1/16] %v3033, 128
        %3603 = vxpose.xlu0.b32.cont [2/16] %v3035, 128
        %3604 = vxpose.xlu0.b32.cont [3/16] 0.0, 128
        %3605 = vxpose.xlu0.b32.cont [4/16] 0.0, 128
        %3606 = vxpose.xlu0.b32.cont [5/16] 0.0, 128
        %3607 = vxpose.xlu0.b32.cont [6/16] 0.0, 128
        %3608 = vxpose.xlu0.b32.cont [7/16] 0.0, 128
        %3609 = vxpose.xlu0.b32.cont [8/16] 0.0, 128
        %3610 = vxpose.xlu0.b32.cont [9/16] 0.0, 128
        %3611 = vxpose.xlu0.b32.cont [10/16] 0.0, 128
        %3612 = vxpose.xlu0.b32.cont [11/16] 0.0, 128
        %3613 = vxpose.xlu0.b32.cont [12/16] 0.0, 128
        %3614 = vxpose.xlu0.b32.cont [13/16] 0.0, 128
        %3615 = vxpose.xlu0.b32.cont [14/16] 0.0, 128
        %3616 = vxpose.xlu0.b32.cont [15/16] 0.0, 128
        %3617 = vxpose.xlu0.b32.end [16/16] 0.0, 128
        %v3618 = vpop.trf.xlu0
        %v3619 = vpop.trf.xlu0
        %v3620 = vpop.trf.xlu0
        %v3621 = vpop.trf.xlu0
        %v3622 = vpop.trf.xlu0
        %v3623 = vpop.trf.xlu0
        %v3624 = vpop.trf.xlu0
        %v3625 = vpop.trf.xlu0
        %v3626 = vpop.trf.xlu0
        %v3627 = vpop.trf.xlu0
        %v3628 = vpop.trf.xlu0
        %v3629 = vpop.trf.xlu0
        %v3630 = vpop.trf.xlu0
        %v3631 = vpop.trf.xlu0
        %v3632 = vpop.trf.xlu0
        %v3633 = vpop.trf.xlu0
        %v3635 = vsel %vm2610, %v3522, 0
        %v3638 = vsel %vm2610, %v3502, 0
        %3640 = vmatprep.subr.mxu0 0.0
        %3641 = vmatpush1.xpose.msra.mxu0 0.0
        %3642 = vmatprep.subr.mxu0 0.0
        %3643 = vmatpush1.xpose.msra.mxu0 0.0
        %3644 = vmatprep.subr.mxu0 0.0
        %3645 = vmatpush1.xpose.msra.mxu0 0.0
        %3646 = vmatprep.subr.mxu0 0.0
        %3647 = vmatpush1.xpose.msra.mxu0 0.0
        %3648 = vmatprep.subr.mxu0 0.0
        %3649 = vmatpush1.xpose.msra.mxu0 0.0
        %3650 = vmatprep.subr.mxu0 0.0
        %3651 = vmatpush1.xpose.msra.mxu0 0.0
        %3652 = vmatprep.subr.mxu0 0.0
        %3653 = vmatpush1.xpose.msra.mxu0 0.0
        %3654 = vmatprep.subr.mxu0 0.0
        %3655 = vmatpush1.xpose.msra.mxu0 0.0
        %3656 = vmatprep.subr.mxu0 0.0
        %3657 = vmatpush1.xpose.msra.mxu0 0.0
        %3658 = vmatprep.subr.mxu0 0.0
        %3659 = vmatpush1.xpose.msra.mxu0 0.0
        %3660 = vmatprep.subr.mxu0 0.0
        %3661 = vmatpush1.xpose.msra.mxu0 0.0
        %3662 = vmatprep.subr.mxu0 0.0
        %3663 = vmatpush1.xpose.msra.mxu0 0.0
        %3664 = vmatprep.subr.mxu0 0.0
        %3665 = vmatpush1.xpose.msra.mxu0 0.0
        %3666 = vmatprep.subr.mxu0 0.0
        %3667 = vmatpush1.xpose.msra.mxu0 0.0
        %3668 = vmatprep.subr.mxu0 0.0
        %3669 = vmatpush1.xpose.msra.mxu0 0.0
        %3670 = vmatprep.subr.mxu0 0.0
        %3671 = vmatpush1.xpose.msra.mxu0 %v3638
        %3672 = vmatprep.subr.mxu0 0.0
        %3673 = vmatpush2.xpose.msra.mxu0 0.0
        %3674 = vmatprep.subr.mxu0 0.0
        %3675 = vmatpush2.xpose.msra.mxu0 0.0
        %3676 = vmatprep.subr.mxu0 0.0
        %3677 = vmatpush2.xpose.msra.mxu0 0.0
        %3678 = vmatprep.subr.mxu0 0.0
        %3679 = vmatpush2.xpose.msra.mxu0 0.0
        %3680 = vmatprep.subr.mxu0 0.0
        %3681 = vmatpush2.xpose.msra.mxu0 0.0
        %3682 = vmatprep.subr.mxu0 0.0
        %3683 = vmatpush2.xpose.msra.mxu0 0.0
        %3684 = vmatprep.subr.mxu0 0.0
        %3685 = vmatpush2.xpose.msra.mxu0 0.0
        %3686 = vmatprep.subr.mxu0 0.0
        %3687 = vmatpush2.xpose.msra.mxu0 0.0
        %3688 = vmatprep.subr.mxu0 0.0
        %3689 = vmatpush2.xpose.msra.mxu0 0.0
        %3690 = vmatprep.subr.mxu0 0.0
        %3691 = vmatpush2.xpose.msra.mxu0 0.0
        %3692 = vmatprep.subr.mxu0 0.0
        %3693 = vmatpush2.xpose.msra.mxu0 0.0
        %3694 = vmatprep.subr.mxu0 0.0
        %3695 = vmatpush2.xpose.msra.mxu0 0.0
        %3696 = vmatprep.subr.mxu0 0.0
        %3697 = vmatpush2.xpose.msra.mxu0 0.0
        %3698 = vmatprep.subr.mxu0 0.0
        %3699 = vmatpush2.xpose.msra.mxu0 0.0
        %3700 = vmatprep.subr.mxu0 0.0
        %3701 = vmatpush2.xpose.msra.mxu0 0.0
        %3702 = vmatprep.subr.mxu0 0.0
        %3703 = vmatpush2.xpose.msra.mxu0 0.0
        %3704 = vmatprep.mubr.f32.mxu0 0.0
        %3705 = vmatmul.mubr.f32.gmra.mxu0 %v3635
        %v3706 = vpop.f32.mrf.mxu0
        %v3707 = vadd.f32 0.0, %v3706
        %v3708 = vpop.f32.mrf.mxu0
        %3709 = vdwg.mxu0
        %v3711 = vsel %vm2610, %v3554, 0
        %v3714 = vsel %vm2610, %v3503, 0
        %3716 = vmatprep.subr.mxu0 0.0
        %3717 = vmatpush1.xpose.msra.mxu0 0.0
        %3718 = vmatprep.subr.mxu0 0.0
        %3719 = vmatpush1.xpose.msra.mxu0 0.0
        %3720 = vmatprep.subr.mxu0 0.0
        %3721 = vmatpush1.xpose.msra.mxu0 0.0
        %3722 = vmatprep.subr.mxu0 0.0
        %3723 = vmatpush1.xpose.msra.mxu0 0.0
        %3724 = vmatprep.subr.mxu0 0.0
        %3725 = vmatpush1.xpose.msra.mxu0 0.0
        %3726 = vmatprep.subr.mxu0 0.0
        %3727 = vmatpush1.xpose.msra.mxu0 0.0
        %3728 = vmatprep.subr.mxu0 0.0
        %3729 = vmatpush1.xpose.msra.mxu0 0.0
        %3730 = vmatprep.subr.mxu0 0.0
        %3731 = vmatpush1.xpose.msra.mxu0 0.0
        %3732 = vmatprep.subr.mxu0 0.0
        %3733 = vmatpush1.xpose.msra.mxu0 0.0
        %3734 = vmatprep.subr.mxu0 0.0
        %3735 = vmatpush1.xpose.msra.mxu0 0.0
        %3736 = vmatprep.subr.mxu0 0.0
        %3737 = vmatpush1.xpose.msra.mxu0 0.0
        %3738 = vmatprep.subr.mxu0 0.0
        %3739 = vmatpush1.xpose.msra.mxu0 0.0
        %3740 = vmatprep.subr.mxu0 0.0
        %3741 = vmatpush1.xpose.msra.mxu0 0.0
        %3742 = vmatprep.subr.mxu0 0.0
        %3743 = vmatpush1.xpose.msra.mxu0 0.0
        %3744 = vmatprep.subr.mxu0 0.0
        %3745 = vmatpush1.xpose.msra.mxu0 0.0
        %3746 = vmatprep.subr.mxu0 0.0
        %3747 = vmatpush1.xpose.msra.mxu0 %v3714
        %3748 = vmatprep.subr.mxu0 0.0
        %3749 = vmatpush2.xpose.msra.mxu0 0.0
        %3750 = vmatprep.subr.mxu0 0.0
        %3751 = vmatpush2.xpose.msra.mxu0 0.0
        %3752 = vmatprep.subr.mxu0 0.0
        %3753 = vmatpush2.xpose.msra.mxu0 0.0
        %3754 = vmatprep.subr.mxu0 0.0
        %3755 = vmatpush2.xpose.msra.mxu0 0.0
        %3756 = vmatprep.subr.mxu0 0.0
        %3757 = vmatpush2.xpose.msra.mxu0 0.0
        %3758 = vmatprep.subr.mxu0 0.0
        %3759 = vmatpush2.xpose.msra.mxu0 0.0
        %3760 = vmatprep.subr.mxu0 0.0
        %3761 = vmatpush2.xpose.msra.mxu0 0.0
        %3762 = vmatprep.subr.mxu0 0.0
        %3763 = vmatpush2.xpose.msra.mxu0 0.0
        %3764 = vmatprep.subr.mxu0 0.0
        %3765 = vmatpush2.xpose.msra.mxu0 0.0
        %3766 = vmatprep.subr.mxu0 0.0
        %3767 = vmatpush2.xpose.msra.mxu0 0.0
        %3768 = vmatprep.subr.mxu0 0.0
        %3769 = vmatpush2.xpose.msra.mxu0 0.0
        %3770 = vmatprep.subr.mxu0 0.0
        %3771 = vmatpush2.xpose.msra.mxu0 0.0
        %3772 = vmatprep.subr.mxu0 0.0
        %3773 = vmatpush2.xpose.msra.mxu0 0.0
        %3774 = vmatprep.subr.mxu0 0.0
        %3775 = vmatpush2.xpose.msra.mxu0 0.0
        %3776 = vmatprep.subr.mxu0 0.0
        %3777 = vmatpush2.xpose.msra.mxu0 0.0
        %3778 = vmatprep.subr.mxu0 0.0
        %3779 = vmatpush2.xpose.msra.mxu0 0.0
        %3780 = vmatprep.mubr.f32.mxu0 0.0
        %3781 = vmatmul.mubr.f32.gmra.mxu0 %v3711
        %v3782 = vpop.f32.mrf.mxu0
        %v3783 = vadd.f32 0.0, %v3782
        %v3784 = vpop.f32.mrf.mxu0
        %3785 = vdwg.mxu0
        %v3787 = vsel %vm2610, %v3586, 0
        %v3790 = vsel %vm2610, %v3504, 0
        %3792 = vmatprep.subr.mxu0 0.0
        %3793 = vmatpush1.xpose.msra.mxu0 0.0
        %3794 = vmatprep.subr.mxu0 0.0
        %3795 = vmatpush1.xpose.msra.mxu0 0.0
        %3796 = vmatprep.subr.mxu0 0.0
        %3797 = vmatpush1.xpose.msra.mxu0 0.0
        %3798 = vmatprep.subr.mxu0 0.0
        %3799 = vmatpush1.xpose.msra.mxu0 0.0
        %3800 = vmatprep.subr.mxu0 0.0
        %3801 = vmatpush1.xpose.msra.mxu0 0.0
        %3802 = vmatprep.subr.mxu0 0.0
        %3803 = vmatpush1.xpose.msra.mxu0 0.0
        %3804 = vmatprep.subr.mxu0 0.0
        %3805 = vmatpush1.xpose.msra.mxu0 0.0
        %3806 = vmatprep.subr.mxu0 0.0
        %3807 = vmatpush1.xpose.msra.mxu0 0.0
        %3808 = vmatprep.subr.mxu0 0.0
        %3809 = vmatpush1.xpose.msra.mxu0 0.0
        %3810 = vmatprep.subr.mxu0 0.0
        %3811 = vmatpush1.xpose.msra.mxu0 0.0
        %3812 = vmatprep.subr.mxu0 0.0
        %3813 = vmatpush1.xpose.msra.mxu0 0.0
        %3814 = vmatprep.subr.mxu0 0.0
        %3815 = vmatpush1.xpose.msra.mxu0 0.0
        %3816 = vmatprep.subr.mxu0 0.0
        %3817 = vmatpush1.xpose.msra.mxu0 0.0
        %3818 = vmatprep.subr.mxu0 0.0
        %3819 = vmatpush1.xpose.msra.mxu0 0.0
        %3820 = vmatprep.subr.mxu0 0.0
        %3821 = vmatpush1.xpose.msra.mxu0 0.0
        %3822 = vmatprep.subr.mxu0 0.0
        %3823 = vmatpush1.xpose.msra.mxu0 %v3790
        %3824 = vmatprep.subr.mxu0 0.0
        %3825 = vmatpush2.xpose.msra.mxu0 0.0
        %3826 = vmatprep.subr.mxu0 0.0
        %3827 = vmatpush2.xpose.msra.mxu0 0.0
        %3828 = vmatprep.subr.mxu0 0.0
        %3829 = vmatpush2.xpose.msra.mxu0 0.0
        %3830 = vmatprep.subr.mxu0 0.0
        %3831 = vmatpush2.xpose.msra.mxu0 0.0
        %3832 = vmatprep.subr.mxu0 0.0
        %3833 = vmatpush2.xpose.msra.mxu0 0.0
        %3834 = vmatprep.subr.mxu0 0.0
        %3835 = vmatpush2.xpose.msra.mxu0 0.0
        %3836 = vmatprep.subr.mxu0 0.0
        %3837 = vmatpush2.xpose.msra.mxu0 0.0
        %3838 = vmatprep.subr.mxu0 0.0
        %3839 = vmatpush2.xpose.msra.mxu0 0.0
        %3840 = vmatprep.subr.mxu0 0.0
        %3841 = vmatpush2.xpose.msra.mxu0 0.0
        %3842 = vmatprep.subr.mxu0 0.0
        %3843 = vmatpush2.xpose.msra.mxu0 0.0
        %3844 = vmatprep.subr.mxu0 0.0
        %3845 = vmatpush2.xpose.msra.mxu0 0.0
        %3846 = vmatprep.subr.mxu0 0.0
        %3847 = vmatpush2.xpose.msra.mxu0 0.0
        %3848 = vmatprep.subr.mxu0 0.0
        %3849 = vmatpush2.xpose.msra.mxu0 0.0
        %3850 = vmatprep.subr.mxu0 0.0
        %3851 = vmatpush2.xpose.msra.mxu0 0.0
        %3852 = vmatprep.subr.mxu0 0.0
        %3853 = vmatpush2.xpose.msra.mxu0 0.0
        %3854 = vmatprep.subr.mxu0 0.0
        %3855 = vmatpush2.xpose.msra.mxu0 0.0
        %3856 = vmatprep.mubr.f32.mxu0 0.0
        %3857 = vmatmul.mubr.f32.gmra.mxu0 %v3787
        %v3858 = vpop.f32.mrf.mxu0
        %v3859 = vadd.f32 0.0, %v3858
        %v3860 = vpop.f32.mrf.mxu0
        %3861 = vdwg.mxu0
        %v3863 = vsel %vm2610, %v3618, 0
        %v3866 = vsel %vm2610, %v3505, 0
        %3868 = vmatprep.subr.mxu0 0.0
        %3869 = vmatpush1.xpose.msra.mxu0 0.0
        %3870 = vmatprep.subr.mxu0 0.0
        %3871 = vmatpush1.xpose.msra.mxu0 0.0
        %3872 = vmatprep.subr.mxu0 0.0
        %3873 = vmatpush1.xpose.msra.mxu0 0.0
        %3874 = vmatprep.subr.mxu0 0.0
        %3875 = vmatpush1.xpose.msra.mxu0 0.0
        %3876 = vmatprep.subr.mxu0 0.0
        %3877 = vmatpush1.xpose.msra.mxu0 0.0
        %3878 = vmatprep.subr.mxu0 0.0
        %3879 = vmatpush1.xpose.msra.mxu0 0.0
        %3880 = vmatprep.subr.mxu0 0.0
        %3881 = vmatpush1.xpose.msra.mxu0 0.0
        %3882 = vmatprep.subr.mxu0 0.0
        %3883 = vmatpush1.xpose.msra.mxu0 0.0
        %3884 = vmatprep.subr.mxu0 0.0
        %3885 = vmatpush1.xpose.msra.mxu0 0.0
        %3886 = vmatprep.subr.mxu0 0.0
        %3887 = vmatpush1.xpose.msra.mxu0 0.0
        %3888 = vmatprep.subr.mxu0 0.0
        %3889 = vmatpush1.xpose.msra.mxu0 0.0
        %3890 = vmatprep.subr.mxu0 0.0
        %3891 = vmatpush1.xpose.msra.mxu0 0.0
        %3892 = vmatprep.subr.mxu0 0.0
        %3893 = vmatpush1.xpose.msra.mxu0 0.0
        %3894 = vmatprep.subr.mxu0 0.0
        %3895 = vmatpush1.xpose.msra.mxu0 0.0
        %3896 = vmatprep.subr.mxu0 0.0
        %3897 = vmatpush1.xpose.msra.mxu0 0.0
        %3898 = vmatprep.subr.mxu0 0.0
        %3899 = vmatpush1.xpose.msra.mxu0 %v3866
        %3900 = vmatprep.subr.mxu0 0.0
        %3901 = vmatpush2.xpose.msra.mxu0 0.0
        %3902 = vmatprep.subr.mxu0 0.0
        %3903 = vmatpush2.xpose.msra.mxu0 0.0
        %3904 = vmatprep.subr.mxu0 0.0
        %3905 = vmatpush2.xpose.msra.mxu0 0.0
        %3906 = vmatprep.subr.mxu0 0.0
        %3907 = vmatpush2.xpose.msra.mxu0 0.0
        %3908 = vmatprep.subr.mxu0 0.0
        %3909 = vmatpush2.xpose.msra.mxu0 0.0
        %3910 = vmatprep.subr.mxu0 0.0
        %3911 = vmatpush2.xpose.msra.mxu0 0.0
        %3912 = vmatprep.subr.mxu0 0.0
        %3913 = vmatpush2.xpose.msra.mxu0 0.0
        %3914 = vmatprep.subr.mxu0 0.0
        %3915 = vmatpush2.xpose.msra.mxu0 0.0
        %3916 = vmatprep.subr.mxu0 0.0
        %3917 = vmatpush2.xpose.msra.mxu0 0.0
        %3918 = vmatprep.subr.mxu0 0.0
        %3919 = vmatpush2.xpose.msra.mxu0 0.0
        %3920 = vmatprep.subr.mxu0 0.0
        %3921 = vmatpush2.xpose.msra.mxu0 0.0
        %3922 = vmatprep.subr.mxu0 0.0
        %3923 = vmatpush2.xpose.msra.mxu0 0.0
        %3924 = vmatprep.subr.mxu0 0.0
        %3925 = vmatpush2.xpose.msra.mxu0 0.0
        %3926 = vmatprep.subr.mxu0 0.0
        %3927 = vmatpush2.xpose.msra.mxu0 0.0
        %3928 = vmatprep.subr.mxu0 0.0
        %3929 = vmatpush2.xpose.msra.mxu0 0.0
        %3930 = vmatprep.subr.mxu0 0.0
        %3931 = vmatpush2.xpose.msra.mxu0 0.0
        %3932 = vmatprep.mubr.f32.mxu0 0.0
        %3933 = vmatmul.mubr.f32.gmra.mxu0 %v3863
        %v3934 = vpop.f32.mrf.mxu0
        %v3935 = vadd.f32 0.0, %v3934
        %v3936 = vpop.f32.mrf.mxu0
        %3937 = vdwg.mxu0
        %3938 = vxpose.xlu0.b32.start [1/16] %v3707, 128
        %3939 = vxpose.xlu0.b32.cont [2/16] 0.0, 128
        %3940 = vxpose.xlu0.b32.cont [3/16] 0.0, 128
        %3941 = vxpose.xlu0.b32.cont [4/16] 0.0, 128
        %3942 = vxpose.xlu0.b32.cont [5/16] 0.0, 128
        %3943 = vxpose.xlu0.b32.cont [6/16] 0.0, 128
        %3944 = vxpose.xlu0.b32.cont [7/16] 0.0, 128
        %3945 = vxpose.xlu0.b32.cont [8/16] 0.0, 128
        %3946 = vxpose.xlu0.b32.cont [9/16] 0.0, 128
        %3947 = vxpose.xlu0.b32.cont [10/16] 0.0, 128
        %3948 = vxpose.xlu0.b32.cont [11/16] 0.0, 128
        %3949 = vxpose.xlu0.b32.cont [12/16] 0.0, 128
        %3950 = vxpose.xlu0.b32.cont [13/16] 0.0, 128
        %3951 = vxpose.xlu0.b32.cont [14/16] 0.0, 128
        %3952 = vxpose.xlu0.b32.cont [15/16] 0.0, 128
        %3953 = vxpose.xlu0.b32.end [16/16] 0.0, 128
        %v3954 = vpop.trf.xlu0
        %v3955 = vpop.trf.xlu0
        %v3956 = vpop.trf.xlu0
        %v3957 = vpop.trf.xlu0
        %v3958 = vpop.trf.xlu0
        %v3959 = vpop.trf.xlu0
        %v3960 = vpop.trf.xlu0
        %v3961 = vpop.trf.xlu0
        %v3962 = vpop.trf.xlu0
        %v3963 = vpop.trf.xlu0
        %v3964 = vpop.trf.xlu0
        %v3965 = vpop.trf.xlu0
        %v3966 = vpop.trf.xlu0
        %v3967 = vpop.trf.xlu0
        %v3968 = vpop.trf.xlu0
        %v3969 = vpop.trf.xlu0
        %3970 = vxpose.xlu0.b32.start [1/16] %v3783, 128
        %3971 = vxpose.xlu0.b32.cont [2/16] 0.0, 128
        %3972 = vxpose.xlu0.b32.cont [3/16] 0.0, 128
        %3973 = vxpose.xlu0.b32.cont [4/16] 0.0, 128
        %3974 = vxpose.xlu0.b32.cont [5/16] 0.0, 128
        %3975 = vxpose.xlu0.b32.cont [6/16] 0.0, 128
        %3976 = vxpose.xlu0.b32.cont [7/16] 0.0, 128
        %3977 = vxpose.xlu0.b32.cont [8/16] 0.0, 128
        %3978 = vxpose.xlu0.b32.cont [9/16] 0.0, 128
        %3979 = vxpose.xlu0.b32.cont [10/16] 0.0, 128
        %3980 = vxpose.xlu0.b32.cont [11/16] 0.0, 128
        %3981 = vxpose.xlu0.b32.cont [12/16] 0.0, 128
        %3982 = vxpose.xlu0.b32.cont [13/16] 0.0, 128
        %3983 = vxpose.xlu0.b32.cont [14/16] 0.0, 128
        %3984 = vxpose.xlu0.b32.cont [15/16] 0.0, 128
        %3985 = vxpose.xlu0.b32.end [16/16] 0.0, 128
        %v3986 = vpop.trf.xlu0
        %v3987 = vpop.trf.xlu0
        %v3988 = vpop.trf.xlu0
        %v3989 = vpop.trf.xlu0
        %v3990 = vpop.trf.xlu0
        %v3991 = vpop.trf.xlu0
        %v3992 = vpop.trf.xlu0
        %v3993 = vpop.trf.xlu0
        %v3994 = vpop.trf.xlu0
        %v3995 = vpop.trf.xlu0
        %v3996 = vpop.trf.xlu0
        %v3997 = vpop.trf.xlu0
        %v3998 = vpop.trf.xlu0
        %v3999 = vpop.trf.xlu0
        %v4000 = vpop.trf.xlu0
        %v4001 = vpop.trf.xlu0
        %4002 = vxpose.xlu0.b32.start [1/16] %v3859, 128
        %4003 = vxpose.xlu0.b32.cont [2/16] 0.0, 128
        %4004 = vxpose.xlu0.b32.cont [3/16] 0.0, 128
        %4005 = vxpose.xlu0.b32.cont [4/16] 0.0, 128
        %4006 = vxpose.xlu0.b32.cont [5/16] 0.0, 128
        %4007 = vxpose.xlu0.b32.cont [6/16] 0.0, 128
        %4008 = vxpose.xlu0.b32.cont [7/16] 0.0, 128
        %4009 = vxpose.xlu0.b32.cont [8/16] 0.0, 128
        %4010 = vxpose.xlu0.b32.cont [9/16] 0.0, 128
        %4011 = vxpose.xlu0.b32.cont [10/16] 0.0, 128
        %4012 = vxpose.xlu0.b32.cont [11/16] 0.0, 128
        %4013 = vxpose.xlu0.b32.cont [12/16] 0.0, 128
        %4014 = vxpose.xlu0.b32.cont [13/16] 0.0, 128
        %4015 = vxpose.xlu0.b32.cont [14/16] 0.0, 128
        %4016 = vxpose.xlu0.b32.cont [15/16] 0.0, 128
        %4017 = vxpose.xlu0.b32.end [16/16] 0.0, 128
        %v4018 = vpop.trf.xlu0
        %v4019 = vpop.trf.xlu0
        %v4020 = vpop.trf.xlu0
        %v4021 = vpop.trf.xlu0
        %v4022 = vpop.trf.xlu0
        %v4023 = vpop.trf.xlu0
        %v4024 = vpop.trf.xlu0
        %v4025 = vpop.trf.xlu0
        %v4026 = vpop.trf.xlu0
        %v4027 = vpop.trf.xlu0
        %v4028 = vpop.trf.xlu0
        %v4029 = vpop.trf.xlu0
        %v4030 = vpop.trf.xlu0
        %v4031 = vpop.trf.xlu0
        %v4032 = vpop.trf.xlu0
        %v4033 = vpop.trf.xlu0
        %4034 = vxpose.xlu0.b32.start [1/16] %v3935, 128
        %4035 = vxpose.xlu0.b32.cont [2/16] 0.0, 128
        %4036 = vxpose.xlu0.b32.cont [3/16] 0.0, 128
        %4037 = vxpose.xlu0.b32.cont [4/16] 0.0, 128
        %4038 = vxpose.xlu0.b32.cont [5/16] 0.0, 128
        %4039 = vxpose.xlu0.b32.cont [6/16] 0.0, 128
        %4040 = vxpose.xlu0.b32.cont [7/16] 0.0, 128
        %4041 = vxpose.xlu0.b32.cont [8/16] 0.0, 128
        %4042 = vxpose.xlu0.b32.cont [9/16] 0.0, 128
        %4043 = vxpose.xlu0.b32.cont [10/16] 0.0, 128
        %4044 = vxpose.xlu0.b32.cont [11/16] 0.0, 128
        %4045 = vxpose.xlu0.b32.cont [12/16] 0.0, 128
        %4046 = vxpose.xlu0.b32.cont [13/16] 0.0, 128
        %4047 = vxpose.xlu0.b32.cont [14/16] 0.0, 128
        %4048 = vxpose.xlu0.b32.cont [15/16] 0.0, 128
        %4049 = vxpose.xlu0.b32.end [16/16] 0.0, 128
        %v4050 = vpop.trf.xlu0
        %v4051 = vpop.trf.xlu0
        %v4052 = vpop.trf.xlu0
        %v4053 = vpop.trf.xlu0
        %v4054 = vpop.trf.xlu0
        %v4055 = vpop.trf.xlu0
        %v4056 = vpop.trf.xlu0
        %v4057 = vpop.trf.xlu0
        %v4058 = vpop.trf.xlu0
        %v4059 = vpop.trf.xlu0
        %v4060 = vpop.trf.xlu0
        %v4061 = vpop.trf.xlu0
        %v4062 = vpop.trf.xlu0
        %v4063 = vpop.trf.xlu0
        %v4064 = vpop.trf.xlu0
        %v4065 = vpop.trf.xlu0
        %v4066 = vcombine.low %v3954, %v4018
        %v4067 = vcombine.high %v3954, %v4018
        %v4069 = vunpack.c.l.s4 1983009808
        %v4070 = vunpack.c.0.s8 %v4069
        %v4071 = vlaneseq
        %v4072 = vshrl.u32 %v4071, 7
        %v4073 = vsub.s32 %v4070, %v4072
        %v4074 = vrot.slane %v4066, %v4073
        %v4076 = vunpack.c.l.s4 1983009808
        %v4077 = vunpack.c.0.s8 %v4076
        %v4078 = vlaneseq
        %v4079 = vshrl.u32 %v4078, 7
        %v4080 = vsub.s32 %v4077, %v4079
        %v4081 = vrot.slane %v4067, %v4080
        %v4082 = vcombine.low %v3986, %v4050
        %v4083 = vcombine.high %v3986, %v4050
        %v4085 = vunpack.c.l.s4 1983009808
        %v4086 = vunpack.c.0.s8 %v4085
        %v4087 = vlaneseq
        %v4088 = vshrl.u32 %v4087, 7
        %v4089 = vsub.s32 %v4086, %v4088
        %v4090 = vrot.slane %v4082, %v4089
        %v4092 = vunpack.c.l.s4 1983009808
        %v4093 = vunpack.c.0.s8 %v4092
        %v4094 = vlaneseq
        %v4095 = vshrl.u32 %v4094, 7
        %v4096 = vsub.s32 %v4093, %v4095
        %v4097 = vrot.slane %v4083, %v4096
        %v4098 = vcombine.low %v4074, %v4090
        %v4099 = vcombine.high %v4074, %v4090
        %v4101 = vunpack.c.l.s4 1934713408
        %v4102 = vunpack.c.0.s8 %v4101
        %v4103 = vlaneseq
        %v4104 = vshrl.u32 %v4103, 7
        %v4105 = vsub.s32 %v4102, %v4104
        %v4106 = vrot.slane %v4098, %v4105
        %v4108 = vunpack.c.l.s4 1934713408
        %v4109 = vunpack.c.0.s8 %v4108
        %v4110 = vlaneseq
        %v4111 = vshrl.u32 %v4110, 7
        %v4112 = vsub.s32 %v4109, %v4111
        %v4113 = vrot.slane %v4099, %v4112
        %v4114 = vcombine.low %v4081, %v4097
        %v4115 = vcombine.high %v4081, %v4097
        %v4117 = vunpack.c.l.s4 1934713408
        %v4118 = vunpack.c.0.s8 %v4117
        %v4119 = vlaneseq
        %v4120 = vshrl.u32 %v4119, 7
        %v4121 = vsub.s32 %v4118, %v4120
        %v4122 = vrot.slane %v4114, %v4121
        %v4124 = vunpack.c.l.s4 1934713408
        %v4125 = vunpack.c.0.s8 %v4124
        %v4126 = vlaneseq
        %v4127 = vshrl.u32 %v4126, 7
        %v4128 = vsub.s32 %v4125, %v4127
        %v4129 = vrot.slane %v4115, %v4128
        %v4130 = vcombine.high %v4106, 0.0
        %v4131 = vcombine.high %v4113, 0.0
        %v4132 = vcombine.high %v4122, 0.0
        %v4133 = vcombine.high %v4129, 0.0
        %v4134 = vcombine.low %v4106, %v4113
        %v4136 = vunpack.c.l.s4 1983009808
        %v4137 = vunpack.c.0.s8 %v4136
        %v4138 = vlaneseq
        %v4139 = vshrl.u32 %v4138, 7
        %v4140 = vsub.s32 %v4137, %v4139
        %v4141 = vrot.slane %v4134, %v4140
        %v4142 = vcombine.low %v4130, %v4131
        %v4144 = vunpack.c.l.s4 1983009808
        %v4145 = vunpack.c.0.s8 %v4144
        %v4146 = vlaneseq
        %v4147 = vshrl.u32 %v4146, 7
        %v4148 = vsub.s32 %v4145, %v4147
        %v4149 = vrot.slane %v4142, %v4148
        %v4150 = vcombine.low %v4122, %v4129
        %v4152 = vunpack.c.l.s4 1983009808
        %v4153 = vunpack.c.0.s8 %v4152
        %v4154 = vlaneseq
        %v4155 = vshrl.u32 %v4154, 7
        %v4156 = vsub.s32 %v4153, %v4155
        %v4157 = vrot.slane %v4150, %v4156
        %v4158 = vcombine.low %v4132, %v4133
        %v4160 = vunpack.c.l.s4 1983009808
        %v4161 = vunpack.c.0.s8 %v4160
        %v4162 = vlaneseq
        %v4163 = vshrl.u32 %v4162, 7
        %v4164 = vsub.s32 %v4161, %v4163
        %v4165 = vrot.slane %v4158, %v4164
        %v4166 = vcombine.low %v4141, %v4149
        %v4167 = vcombine.high %v4141, %v4149
        %v4169 = vunpack.c.l.s4 1934713408
        %v4170 = vunpack.c.0.s8 %v4169
        %v4171 = vlaneseq
        %v4172 = vshrl.u32 %v4171, 7
        %v4173 = vsub.s32 %v4170, %v4172
        %v4174 = vrot.slane %v4166, %v4173
        %v4176 = vunpack.c.l.s4 1934713408
        %v4177 = vunpack.c.0.s8 %v4176
        %v4178 = vlaneseq
        %v4179 = vshrl.u32 %v4178, 7
        %v4180 = vsub.s32 %v4177, %v4179
        %v4181 = vrot.slane %v4167, %v4180
        %v4182 = vcombine.low %v4157, %v4165
        %v4183 = vcombine.high %v4157, %v4165
        %v4185 = vunpack.c.l.s4 1934713408
        %v4186 = vunpack.c.0.s8 %v4185
        %v4187 = vlaneseq
        %v4188 = vshrl.u32 %v4187, 7
        %v4189 = vsub.s32 %v4186, %v4188
        %v4190 = vrot.slane %v4182, %v4189
        %v4192 = vunpack.c.l.s4 1934713408
        %v4193 = vunpack.c.0.s8 %v4192
        %v4194 = vlaneseq
        %v4195 = vshrl.u32 %v4194, 7
        %v4196 = vsub.s32 %v4193, %v4195
        %v4197 = vrot.slane %v4183, %v4196
        %v4198 = vcombine.low %v4174, %v4190
        %v4199 = vcombine.high %v4174, %v4190
        %v4200 = vcombine.low %v4181, %v4197
        %v4201 = vcombine.high %v4181, %v4197
        %4203 = vrot.lane.b32.xlu0 %v4199, 8
        %v4204 = vpop.permute.xlu0 %4203
        %4207 = vrot.lane.b32.xlu0 %v4200, 16
        %v4208 = vpop.permute.xlu0 %4207
        %4211 = vrot.lane.b32.xlu0 %v4201, 24
        %v4212 = vpop.permute.xlu0 %4211
        %v4214 = vsel %vm1560, %v4198, %v4204
        %v4215 = vsel %vm2610, %v4214, %v4208
        %v4216 = vsel %vm2612, %v4215, %v4212
        %v4217 = vld [vmem:[%s37] sm:$0xff]
        %v4218 = vld [vmem:[%s37 + $0x8] sm:$0xff]
        %v4219 = vld [vmem:[%s37 + $0x10] sm:$0xff]
        %v4220 = vld [vmem:[%s37 + $0x18] sm:$0xff]
        %v4221 = vld [vmem:[#allocation23] sm:$0x1]
        %v4223 = vlaneseq
        %v4224 = vshrl.u32 %v4223, 7
        %v4225 = vsub.s32 0, %v4224
        %v4226 = vrot.slane %v4221, %v4225
        %v4229 = vsel %vm1169, %v4216, 0
        %4231 = vmatprep.subr.mxu0 0.0
        %4232 = vmatpush1.msra.mxu0 0.0
        %4233 = vmatprep.subr.mxu0 0.0
        %4234 = vmatpush1.msra.mxu0 0.0
        %4235 = vmatprep.subr.mxu0 0.0
        %4236 = vmatpush1.msra.mxu0 0.0
        %4237 = vmatprep.subr.mxu0 0.0
        %4238 = vmatpush1.msra.mxu0 0.0
        %4239 = vmatprep.subr.mxu0 0.0
        %4240 = vmatpush1.msra.mxu0 0.0
        %4241 = vmatprep.subr.mxu0 0.0
        %4242 = vmatpush1.msra.mxu0 0.0
        %4243 = vmatprep.subr.mxu0 0.0
        %4244 = vmatpush1.msra.mxu0 0.0
        %4245 = vmatprep.subr.mxu0 0.0
        %4246 = vmatpush1.msra.mxu0 0.0
        %4247 = vmatprep.subr.mxu0 0.0
        %4248 = vmatpush1.msra.mxu0 0.0
        %4249 = vmatprep.subr.mxu0 0.0
        %4250 = vmatpush1.msra.mxu0 0.0
        %4251 = vmatprep.subr.mxu0 0.0
        %4252 = vmatpush1.msra.mxu0 0.0
        %4253 = vmatprep.subr.mxu0 0.0
        %4254 = vmatpush1.msra.mxu0 0.0
        %4255 = vmatprep.subr.mxu0 0.0
        %4256 = vmatpush1.msra.mxu0 %v4220
        %4257 = vmatprep.subr.mxu0 0.0
        %4258 = vmatpush1.msra.mxu0 %v4219
        %4259 = vmatprep.subr.mxu0 0.0
        %4260 = vmatpush1.msra.mxu0 %v4218
        %4261 = vmatprep.subr.mxu0 0.0
        %4262 = vmatpush1.msra.mxu0 %v4217
        %4263 = vmatprep.subr.mxu0 0.0
        %4264 = vmatpush2.msra.mxu0 0.0
        %4265 = vmatprep.subr.mxu0 0.0
        %4266 = vmatpush2.msra.mxu0 0.0
        %4267 = vmatprep.subr.mxu0 0.0
        %4268 = vmatpush2.msra.mxu0 0.0
        %4269 = vmatprep.subr.mxu0 0.0
        %4270 = vmatpush2.msra.mxu0 0.0
        %4271 = vmatprep.subr.mxu0 0.0
        %4272 = vmatpush2.msra.mxu0 0.0
        %4273 = vmatprep.subr.mxu0 0.0
        %4274 = vmatpush2.msra.mxu0 0.0
        %4275 = vmatprep.subr.mxu0 0.0
        %4276 = vmatpush2.msra.mxu0 0.0
        %4277 = vmatprep.subr.mxu0 0.0
        %4278 = vmatpush2.msra.mxu0 0.0
        %4279 = vmatprep.subr.mxu0 0.0
        %4280 = vmatpush2.msra.mxu0 0.0
        %4281 = vmatprep.subr.mxu0 0.0
        %4282 = vmatpush2.msra.mxu0 0.0
        %4283 = vmatprep.subr.mxu0 0.0
        %4284 = vmatpush2.msra.mxu0 0.0
        %4285 = vmatprep.subr.mxu0 0.0
        %4286 = vmatpush2.msra.mxu0 0.0
        %4287 = vmatprep.subr.mxu0 0.0
        %4288 = vmatpush2.msra.mxu0 0.0
        %4289 = vmatprep.subr.mxu0 0.0
        %4290 = vmatpush2.msra.mxu0 0.0
        %4291 = vmatprep.subr.mxu0 0.0
        %4292 = vmatpush2.msra.mxu0 0.0
        %4293 = vmatprep.subr.mxu0 0.0
        %4294 = vmatpush2.msra.mxu0 0.0
        %4295 = vmatprep.mubr.f32.mxu0 0.0
        %4296 = vmatmul.mubr.f32.gmra.mxu0 %v4229
        %v4297 = vpop.f32.mrf.mxu0
        %v4298 = vadd.f32 %v4226, %v4297
        %v4299 = vpop.f32.mrf.mxu0
        %4300 = vdwg.mxu0
        %v4301 = vadd.f32 %v2728, %v4298
        %v4302 = vsel %vm1169, %v4301, 0.0
        %4303 = vadd.xlane.f32.xlu0 %v4302
        %v4304 = vpop.xlane.xlu0 %4303
        %v4305 = vmul.f32 %v4304, %v2702
        %v4306 = vsub.f32 %v4301, %v4305
        %v4307 = vmul.f32 %v4306, %v4306
        %v4308 = vsel %vm1169, %v4307, 0.0
        %4309 = vadd.xlane.f32.xlu0 %v4308
        %v4310 = vpop.xlane.xlu0 %4309
        %v4311 = vmul.f32 %v4310, %v2702
        %v4312 = vadd.f32 %v4311, 1e-05
        %v4313 = vrsqrt.pop %v4312
        %v4314 = vmul.f32 %v4306, %v4313
        %v4315 = vld [vmem:[%s45] sm:$0x1]
        %v4317 = vlaneseq
        %v4318 = vshrl.u32 %v4317, 7
        %v4319 = vsub.s32 0, %v4318
        %v4320 = vrot.slane %v4315, %v4319
        %v4322 = vmul.f32 %v4314, %v4320
        %v4323 = vld [vmem:[%s47] sm:$0x1]
        %v4325 = vlaneseq
        %v4326 = vshrl.u32 %v4325, 7
        %v4327 = vsub.s32 0, %v4326
        %v4328 = vrot.slane %v4323, %v4327
        %v4330 = vadd.f32 %v4322, %v4328
        %v4331 = vld [vmem:[#allocation25] sm:$0xff]
        %v4332 = vld [vmem:[#allocation25 + $0x8] sm:$0xff]
        %v4333 = vld [vmem:[#allocation25 + $0x10] sm:$0xff]
        %v4334 = vld [vmem:[#allocation25 + $0x18] sm:$0xff]
        %v4335 = vld [vmem:[%s55] sm:$0x1]
        %v4337 = vlaneseq
        %v4338 = vshrl.u32 %v4337, 7
        %v4339 = vsub.s32 0, %v4338
        %v4340 = vrot.slane %v4335, %v4339
        %v4343 = vsel %vm1169, %v4330, 0
        %4345 = vmatprep.subr.mxu0 0.0
        %4346 = vmatpush1.msra.mxu0 0.0
        %4347 = vmatprep.subr.mxu0 0.0
        %4348 = vmatpush1.msra.mxu0 0.0
        %4349 = vmatprep.subr.mxu0 0.0
        %4350 = vmatpush1.msra.mxu0 0.0
        %4351 = vmatprep.subr.mxu0 0.0
        %4352 = vmatpush1.msra.mxu0 0.0
        %4353 = vmatprep.subr.mxu0 0.0
        %4354 = vmatpush1.msra.mxu0 0.0
        %4355 = vmatprep.subr.mxu0 0.0
        %4356 = vmatpush1.msra.mxu0 0.0
        %4357 = vmatprep.subr.mxu0 0.0
        %4358 = vmatpush1.msra.mxu0 0.0
        %4359 = vmatprep.subr.mxu0 0.0
        %4360 = vmatpush1.msra.mxu0 0.0
        %4361 = vmatprep.subr.mxu0 0.0
        %4362 = vmatpush1.msra.mxu0 0.0
        %4363 = vmatprep.subr.mxu0 0.0
        %4364 = vmatpush1.msra.mxu0 0.0
        %4365 = vmatprep.subr.mxu0 0.0
        %4366 = vmatpush1.msra.mxu0 0.0
        %4367 = vmatprep.subr.mxu0 0.0
        %4368 = vmatpush1.msra.mxu0 0.0
        %4369 = vmatprep.subr.mxu0 0.0
        %4370 = vmatpush1.msra.mxu0 %v4334
        %4371 = vmatprep.subr.mxu0 0.0
        %4372 = vmatpush1.msra.mxu0 %v4333
        %4373 = vmatprep.subr.mxu0 0.0
        %4374 = vmatpush1.msra.mxu0 %v4332
        %4375 = vmatprep.subr.mxu0 0.0
        %4376 = vmatpush1.msra.mxu0 %v4331
        %4377 = vmatprep.subr.mxu0 0.0
        %4378 = vmatpush2.msra.mxu0 0.0
        %4379 = vmatprep.subr.mxu0 0.0
        %4380 = vmatpush2.msra.mxu0 0.0
        %4381 = vmatprep.subr.mxu0 0.0
        %4382 = vmatpush2.msra.mxu0 0.0
        %4383 = vmatprep.subr.mxu0 0.0
        %4384 = vmatpush2.msra.mxu0 0.0
        %4385 = vmatprep.subr.mxu0 0.0
        %4386 = vmatpush2.msra.mxu0 0.0
        %4387 = vmatprep.subr.mxu0 0.0
        %4388 = vmatpush2.msra.mxu0 0.0
        %4389 = vmatprep.subr.mxu0 0.0
        %4390 = vmatpush2.msra.mxu0 0.0
        %4391 = vmatprep.subr.mxu0 0.0
        %4392 = vmatpush2.msra.mxu0 0.0
        %4393 = vmatprep.subr.mxu0 0.0
        %4394 = vmatpush2.msra.mxu0 0.0
        %4395 = vmatprep.subr.mxu0 0.0
        %4396 = vmatpush2.msra.mxu0 0.0
        %4397 = vmatprep.subr.mxu0 0.0
        %4398 = vmatpush2.msra.mxu0 0.0
        %4399 = vmatprep.subr.mxu0 0.0
        %4400 = vmatpush2.msra.mxu0 0.0
        %4401 = vmatprep.subr.mxu0 0.0
        %4402 = vmatpush2.msra.mxu0 0.0
        %4403 = vmatprep.subr.mxu0 0.0
        %4404 = vmatpush2.msra.mxu0 0.0
        %4405 = vmatprep.subr.mxu0 0.0
        %4406 = vmatpush2.msra.mxu0 0.0
        %4407 = vmatprep.subr.mxu0 0.0
        %4408 = vmatpush2.msra.mxu0 0.0
        %4409 = vmatprep.mubr.f32.mxu0 0.0
        %4410 = vmatmul.mubr.f32.gmra.mxu0 %v4343
        %v4411 = vpop.f32.mrf.mxu0
        %v4412 = vadd.f32 %v4340, %v4411
        %v4413 = vpop.f32.mrf.mxu0
        %4414 = vdwg.mxu0
        %v4415 = vmax.f32 %v4412, 0.0
        %v4416 = vld [vmem:[%s57] sm:$0xff]
        %v4417 = vld [vmem:[%s57 + $0x8] sm:$0xff]
        %v4418 = vld [vmem:[%s57 + $0x10] sm:$0xff]
        %v4419 = vld [vmem:[%s57 + $0x18] sm:$0xff]
        %v4420 = vld [vmem:[%s57 + $0x20] sm:$0xff]
        %v4421 = vld [vmem:[%s57 + $0x28] sm:$0xff]
        %v4422 = vld [vmem:[%s57 + $0x30] sm:$0xff]
        %v4423 = vld [vmem:[%s57 + $0x38] sm:$0xff]
        %v4424 = vld [vmem:[%s57 + $0x40] sm:$0xff]
        %v4425 = vld [vmem:[%s57 + $0x48] sm:$0xff]
        %v4426 = vld [vmem:[%s57 + $0x50] sm:$0xff]
        %v4427 = vld [vmem:[%s57 + $0x58] sm:$0xff]
        %v4428 = vld [vmem:[%s57 + $0x60] sm:$0xff]
        %v4429 = vld [vmem:[%s57 + $0x68] sm:$0xff]
        %v4430 = vld [vmem:[%s57 + $0x70] sm:$0xff]
        %v4431 = vld [vmem:[%s57 + $0x78] sm:$0xff]
        %v4432 = vld [vmem:[%s59] sm:$0x1]
        %v4434 = vlaneseq
        %v4435 = vshrl.u32 %v4434, 7
        %v4436 = vsub.s32 0, %v4435
        %v4437 = vrot.slane %v4432, %v4436
        %4439 = vmatprep.subr.mxu0 0.0
        %4440 = vmatpush1.msra.mxu0 %v4431
        %4441 = vmatprep.subr.mxu0 0.0
        %4442 = vmatpush1.msra.mxu0 %v4430
        %4443 = vmatprep.subr.mxu0 0.0
        %4444 = vmatpush1.msra.mxu0 %v4429
        %4445 = vmatprep.subr.mxu0 0.0
        %4446 = vmatpush1.msra.mxu0 %v4428
        %4447 = vmatprep.subr.mxu0 0.0
        %4448 = vmatpush1.msra.mxu0 %v4427
        %4449 = vmatprep.subr.mxu0 0.0
        %4450 = vmatpush1.msra.mxu0 %v4426
        %4451 = vmatprep.subr.mxu0 0.0
        %4452 = vmatpush1.msra.mxu0 %v4425
        %4453 = vmatprep.subr.mxu0 0.0
        %4454 = vmatpush1.msra.mxu0 %v4424
        %4455 = vmatprep.subr.mxu0 0.0
        %4456 = vmatpush1.msra.mxu0 %v4423
        %4457 = vmatprep.subr.mxu0 0.0
        %4458 = vmatpush1.msra.mxu0 %v4422
        %4459 = vmatprep.subr.mxu0 0.0
        %4460 = vmatpush1.msra.mxu0 %v4421
        %4461 = vmatprep.subr.mxu0 0.0
        %4462 = vmatpush1.msra.mxu0 %v4420
        %4463 = vmatprep.subr.mxu0 0.0
        %4464 = vmatpush1.msra.mxu0 %v4419
        %4465 = vmatprep.subr.mxu0 0.0
        %4466 = vmatpush1.msra.mxu0 %v4418
        %4467 = vmatprep.subr.mxu0 0.0
        %4468 = vmatpush1.msra.mxu0 %v4417
        %4469 = vmatprep.subr.mxu0 0.0
        %4470 = vmatpush1.msra.mxu0 %v4416
        %4471 = vmatprep.subr.mxu0 0.0
        %4472 = vmatpush2.msra.mxu0 0.0
        %4473 = vmatprep.subr.mxu0 0.0
        %4474 = vmatpush2.msra.mxu0 0.0
        %4475 = vmatprep.subr.mxu0 0.0
        %4476 = vmatpush2.msra.mxu0 0.0
        %4477 = vmatprep.subr.mxu0 0.0
        %4478 = vmatpush2.msra.mxu0 0.0
        %4479 = vmatprep.subr.mxu0 0.0
        %4480 = vmatpush2.msra.mxu0 0.0
        %4481 = vmatprep.subr.mxu0 0.0
        %4482 = vmatpush2.msra.mxu0 0.0
        %4483 = vmatprep.subr.mxu0 0.0
        %4484 = vmatpush2.msra.mxu0 0.0
        %4485 = vmatprep.subr.mxu0 0.0
        %4486 = vmatpush2.msra.mxu0 0.0
        %4487 = vmatprep.subr.mxu0 0.0
        %4488 = vmatpush2.msra.mxu0 0.0
        %4489 = vmatprep.subr.mxu0 0.0
        %4490 = vmatpush2.msra.mxu0 0.0
        %4491 = vmatprep.subr.mxu0 0.0
        %4492 = vmatpush2.msra.mxu0 0.0
        %4493 = vmatprep.subr.mxu0 0.0
        %4494 = vmatpush2.msra.mxu0 0.0
        %4495 = vmatprep.subr.mxu0 0.0
        %4496 = vmatpush2.msra.mxu0 0.0
        %4497 = vmatprep.subr.mxu0 0.0
        %4498 = vmatpush2.msra.mxu0 0.0
        %4499 = vmatprep.subr.mxu0 0.0
        %4500 = vmatpush2.msra.mxu0 0.0
        %4501 = vmatprep.subr.mxu0 0.0
        %4502 = vmatpush2.msra.mxu0 0.0
        %4503 = vmatprep.mubr.f32.mxu0 0.0
        %4504 = vmatmul.mubr.f32.gmra.mxu0 %v4415
        %v4505 = vpop.f32.mrf.mxu0
        %v4506 = vadd.f32 %v4437, %v4505
        %v4507 = vpop.f32.mrf.mxu0
        %4508 = vdwg.mxu0
        %v4509 = vadd.f32 %v4330, %v4506
        %v4510 = vsel %vm1169, %v4509, 0.0
        %4511 = vadd.xlane.f32.xlu0 %v4510
        %v4512 = vpop.xlane.xlu0 %4511
        %v4513 = vmul.f32 %v4512, %v2702
        %v4514 = vsub.f32 %v4509, %v4513
        %v4515 = vmul.f32 %v4514, %v4514
        %v4516 = vsel %vm1169, %v4515, 0.0
        %4517 = vadd.xlane.f32.xlu0 %v4516
        %v4518 = vpop.xlane.xlu0 %4517
        %v4519 = vmul.f32 %v4518, %v2702
        %v4520 = vadd.f32 %v4519, 1e-05
        %v4521 = vrsqrt.pop %v4520
        %v4522 = vmul.f32 %v4514, %v4521
        %v4523 = vld [vmem:[%s49] sm:$0x1]
        %v4525 = vlaneseq
        %v4526 = vshrl.u32 %v4525, 7
        %v4527 = vsub.s32 0, %v4526
        %v4528 = vrot.slane %v4523, %v4527
        %v4530 = vmul.f32 %v4522, %v4528
        %v4531 = vld [vmem:[%s51] sm:$0x1]
        %v4533 = vlaneseq
        %v4534 = vshrl.u32 %v4533, 7
        %v4535 = vsub.s32 0, %v4534
        %v4536 = vrot.slane %v4531, %v4535
        %v4538 = vadd.f32 %v4530, %v4536
        %4539 = vst.msk [vmem:[%s1143] sm:$0xff] %vm1169, %v4538
        %s4540 = sand.u32 %s733, 1
        %s4541 = scalar_lea.sflag [#allocation4], %s4540
        %s4542 = sand.u32 %s733, 1
        %s4543 = smul.addr %s4542, 8
        %s4544 = scalar_lea.vmem [#allocation26], %s4543
        // Predicated region
        $region201: #{tpu_custom_call.1} parent=139 // pred_check
          %p4545 = pneg %p743
        $region202: #{tpu_custom_call.1} parent=139 // pred_check_branch
          %4547 = sbr.rel (%p4545) target = $region204
        $region203: #{tpu_custom_call.1} parent=139 // pred_region
          %s4549 = ssub.s32 128, 128
          %4550 = vsyncadd %s4541, %s4549
          %s4551 = smul.addr %s85, 128
          %s4552 = scalar_lea.hbm %s61, %s4551
          %s4554 = sshll.u32 %s4544, 4
          %s4555 = int_to_ptr.vmem [resolvable:$true] %s4554
          %4557 = dma.vmem_to_hbm [thread:$0]  %s4555, 128, %s4552, %s4541
        $region204: #{tpu_custom_call.1} parent=139 // pred_fallthru
          _
      $region140: #{tpu_custom_call.1} parent=5 // pred_fallthru
        _
      %p4558 = scmp.le.s32.totalorder 2, %s80
      // Predicated region
      $region205: #{tpu_custom_call.1} parent=5 // pred_check
        %p4559 = pneg %p4558
      $region206: #{tpu_custom_call.1} parent=5 // pred_check_branch
        %4561 = sbr.rel (%p4559) target = $region208
      $region207: #{tpu_custom_call.1} parent=5 // pred_region
        %s4562 = ssub.s32 %s80, 2
        // Predicated region
        $region209: #{tpu_custom_call.1} parent=207 // pred_check
          %p4563 = pneg %p749
        $region210: #{tpu_custom_call.1} parent=207 // pred_check_branch
          %4565 = sbr.rel (%p4563) target = $region212
        $region211: #{tpu_custom_call.1} parent=207 // pred_region
          %s4566 = sand.u32 %s734, 1
          %s4567 = scalar_lea.sflag [#allocation4], %s4566
          %s4568 = sand.u32 %s734, 1
          %s4569 = smul.addr %s4568, 8
          %s4570 = scalar_lea.vmem [#allocation26], %s4569
          %4571 = dma.done %s4567, 128
        $region212: #{tpu_custom_call.1} parent=207 // pred_fallthru
          _
      $region208: #{tpu_custom_call.1} parent=5 // pred_fallthru
        _
    $region6: #{tpu_custom_call.1} parent=1 // loop_footer
      %s84 = sadd.s32 1, %s80
    $region7: #{tpu_custom_call.1} parent=1 // loop_footer_branch
      %79 = sbr.rel target = $region3
    $region8: #{tpu_custom_call.1} parent=1 // loop_exit
      _
    %4572 = vsyncpa [#allocation3], 1
    %s4573 = scalar_lea.sflag [#allocation3], 1
    %4574 = vsyncpa %s4573, 1
    %4575 = vsyncpa [#allocation6], 1
    %4576 = vsyncpa [#allocation9], 1
    %4577 = vsyncpa [#allocation12], 1
    %4578 = vsyncpa [#allocation15], 1
    %4579 = vsyncpa [#allocation18], 1
    %4580 = vsyncpa [#allocation21], 1
    %4581 = vsyncpa [#allocation24], 1
    %4582 = vsyncpa [#allocation4], 1
    %s4583 = scalar_lea.sflag [#allocation4], 1
    %4584 = vsyncpa %s4583, 1

</llo_original>
